<compile_context>
chip_gen: v5e
topology: v5e:2x2
jax: 0.10.0
libtpu: 0.0.40
codegen_flags: <defaults>
</compile_context>

<pallas_src>
import functools

import numpy as np
import jax
import jax.numpy as jnp
from jax import lax
from jax.experimental import pallas as pl
from jax.experimental.pallas import tpu as pltpu

POOL_SIZES = (5, 9, 13)
BN_EPS = 1e-5


def _silu(x):
    return x * jax.nn.sigmoid(x)


def spp_kernel(x_ref, w1_ref, b1_ref, w2p5_ref, w2p9_ref, w2p13_ref, w2id_ref,
               b2_ref, o_ref, pad_ref, tmp_ref, *, H, W, col0):
    c_half = w1_ref.shape[1]
    HW = H * W
    pool_dtype = pad_ref.dtype
    bf = jnp.bfloat16
    Wp = pad_ref.shape[1]                       # col0 + W + 2

    # ---- conv_in: 1x1 conv (BN folded) + SiLU --------------------------------
    # x arrives channel-major (C_in, HW); contract C_in directly (x^T @ w1) via
    # dot_general -- no XLU transpose.  bf16 MXU operands, f32 accumulation.
    y = lax.dot_general(
        x_ref[...].astype(bf), w1_ref[...],
        dimension_numbers=(((0,), (0,)), ((), ())),
        preferred_element_type=jnp.float32)                     # (HW, c_half) f32
    y = _silu(y + b1_ref[...])

    # ---- -inf border strips of the padded pooling scratch --------------------
    # Centre [2:2+H, col0:col0+W] is fully overwritten on every pool call, so
    # only the four border strips are (re)initialized.
    pad_ref[0:2, :, :] = jnp.full((2, Wp, c_half), -jnp.inf, pool_dtype)
    pad_ref[2 + H:4 + H, :, :] = jnp.full((2, Wp, c_half), -jnp.inf, pool_dtype)
    pad_ref[2:2 + H, 0:col0, :] = jnp.full((H, col0, c_half), -jnp.inf, pool_dtype)
    pad_ref[2:2 + H, col0 + W:col0 + W + 2, :] = jnp.full(
        (H, 2, c_half), -jnp.inf, pool_dtype)

    def max_pool_5x5(cur):
        """MaxPool2d(k=5, stride=1, pad=2) via -inf-padded scratch + ref-slice taps."""
        pad_ref[2:2 + H, col0:col0 + W, :] = cur                 # sublane-aligned
        # separable 5-tap max along H (outer-dim offsets: pure address shifts)
        m = pad_ref[0:H, :, :]
        for dh in range(1, 5):
            m = jnp.maximum(m, pad_ref[dh:dh + H, :, :])
        tmp_ref[...] = m                                         # (H, Wp, c_half)
        # separable 5-tap max along W (sublane offsets col0-2 .. col0+2)
        out = tmp_ref[:, col0 - 2:col0 - 2 + W, :]
        for dw in range(1, 5):
            out = jnp.maximum(out, tmp_ref[:, col0 - 2 + dw:col0 - 2 + dw + W, :])
        return out                                               # (H, W, c_half)

    def cdot(w_ref, a):
        # (c_out_blk, c_half) x (HW, c_half) contracted over c_half -> (c_out_blk, HW)
        # Channel-major result matches o_ref layout directly (no output transpose).
        return lax.dot_general(
            w_ref[...], a.reshape(HW, c_half).astype(bf),
            dimension_numbers=(((1,), (1,)), ((), ())),
            preferred_element_type=jnp.float32)

    # ---- SPPF cascade interleaved with conv_out matmuls ----------------------
    # 5∘5 == 9, 5∘5∘5 == 13 for stride-1 / -inf-padded max pooling, and max
    # commutes with the monotone f32->bf16 cast, so bf16 pooling is exact.
    y_p = y.astype(pool_dtype).reshape(H, W, c_half)
    z = cdot(w2id_ref, y_p)                                      # identity branch
    p5 = max_pool_5x5(y_p)
    z = z + cdot(w2p5_ref, p5)
    p9 = max_pool_5x5(p5)
    z = z + cdot(w2p9_ref, p9)
    p13 = max_pool_5x5(p9)
    z = z + cdot(w2p13_ref, p13)

    # conv_out bias + SiLU in f32; lane-dense (HW-wide) channel-major store.
    o_ref[...] = _silu(z + b2_ref[...]).astype(o_ref.dtype)


def spatial_pyramid_pooling(x_nchw, params, *, pool_dtype=None, cout_splits=None):
    """x_nchw: (N, C_in, H, W).  params in natural conv layout:
       w1: (c_half, C_in), b1: (c_half,), w2: (C_out, 4*c_half), b2: (C_out,)."""
    w1, b1, w2, b2 = params
    N, C, H, W = x_nchw.shape
    c_half = w1.shape[0]
    c_out = w2.shape[0]
    HW = H * W

    kind = jax.devices()[0].device_kind.lower()
    if pool_dtype is None:
        # v6e/v7x have bf16 VALUs -> bf16 pooling is exact and ~2x cheaper;
        # v5e/older have no bf16 VALUs -> keep pooling maxima in f32.
        pool_dtype = jnp.bfloat16 if ("v6" in kind or "v7" in kind) else jnp.float32
    if cout_splits is None:
        # v7x has 2 TensorCores/chip: at batch-1 split c_out over a second
        # parallel grid axis so both TCs work (pooling duplicated per core, but
        # far cheaper than an idle TC).  Single-TC chips keep a size-1 axis.
        cout_splits = 2 if ("v7" in kind and N < 2 and c_out % 16 == 0) else 1
    c_out_blk = c_out // cout_splits

    try:
        vmem_cap = pltpu.get_tpu_info().vmem_capacity_bytes
    except Exception:
        vmem_cap = 128 * 1024 * 1024
    vmem_limit = min(64 * 1024 * 1024, int(0.75 * vmem_cap))

    # NCHW stays NCHW in HBM; flattening (H, W) -> H*W is a free reshape.
    x = x_nchw.reshape(N, C, HW)
    w1_rhs = jnp.transpose(w1).astype(jnp.bfloat16)               # (C_in, c_half)
    # conv_out weight kept (c_out, c_half) per concat member [p5, p9, p13, y]
    # (contraction over c_half happens on the MXU; no wrapper transpose needed).
    w2_blocks = [w2[:, i * c_half:(i + 1) * c_half].astype(jnp.bfloat16)
                 for i in range(4)]

    col0 = 8   # sublane-aligned centre offset inside the padded pooling scratch
    kernel = functools.partial(spp_kernel, H=H, W=W, col0=col0)

    out = pl.pallas_call(
        kernel,
        out_shape=jax.ShapeDtypeStruct((N, c_out, HW), x.dtype),
        grid_spec=pltpu.PrefetchScalarGridSpec(
            num_scalar_prefetch=0,
            grid=(N, cout_splits),
            in_specs=[
                pl.BlockSpec((pl.Squeezed(), C, HW), lambda n, s: (n, 0, 0)),
                pl.BlockSpec((C, c_half), lambda n, s: (0, 0)),
                pl.BlockSpec((1, c_half), lambda n, s: (0, 0)),
            ]
            + [pl.BlockSpec((c_out_blk, c_half), lambda n, s: (s, 0))] * 4
            + [pl.BlockSpec((c_out_blk, 1), lambda n, s: (s, 0))],
            out_specs=pl.BlockSpec((pl.Squeezed(), c_out_blk, HW),
                                   lambda n, s: (n, s, 0)),
            scratch_shapes=[
                pltpu.VMEM((H + 4, col0 + W + 2, c_half), pool_dtype),  # padded buf
                pltpu.VMEM((H, col0 + W + 2, c_half), pool_dtype),      # H-pass buf
            ],
        ),
        compiler_params=pltpu.CompilerParams(
            dimension_semantics=("parallel", "parallel"),
            vmem_limit_bytes=vmem_limit),
    )(x, w1_rhs, b1.reshape(1, c_half).astype(jnp.float32),
      *w2_blocks, b2.reshape(c_out, 1).astype(jnp.float32))

    return out.reshape(N, c_out, H, W)                            # free reshape


# ----------------------- parameter setup (deterministic) -----------------------

def _fold_bn(w_oc_ic, gamma, beta, mean, var, eps=BN_EPS):
    """Fold eval-mode BatchNorm into a bias-free 1x1 conv: y = Wf x + bf."""
    s = gamma / jnp.sqrt(var + eps)
    return w_oc_ic * s[:, None], beta - mean * s


def init_params(key, c_in, c_out):
    c_half = c_in // 2
    c_cat = c_half * (len(POOL_SIZES) + 1)
    ks = jax.random.split(key, 10)

    def conv_bn(keys, ci, co):
        kw, kg, kb, km, kv = keys
        w = jax.random.normal(kw, (co, ci), jnp.float32) / jnp.sqrt(ci)
        gamma = jax.random.uniform(kg, (co,), jnp.float32, 0.5, 1.5)
        beta = 0.1 * jax.random.normal(kb, (co,), jnp.float32)
        mean = 0.1 * jax.random.normal(km, (co,), jnp.float32)
        var = jax.random.uniform(kv, (co,), jnp.float32, 0.5, 1.5)
        return _fold_bn(w, gamma, beta, mean, var)

    wf1, bf1 = conv_bn(ks[0:5], c_in, c_half)     # (c_half, c_in), (c_half,)
    wf2, bf2 = conv_bn(ks[5:10], c_cat, c_out)    # (c_out, c_cat), (c_out,)
    return wf1, bf1, wf2, bf2


# ------------------------------ pure-JAX reference ------------------------------

def reference_nchw(x, params):
    w1, b1, w2, b2 = params

    def conv1x1_silu(x, w_oc_ic, b):
        y = jnp.einsum('nchw,oc->nohw', x, w_oc_ic,
                       precision=lax.Precision.HIGHEST) + b.reshape(1, -1, 1, 1)
        return y * jax.nn.sigmoid(y)

    y = conv1x1_silu(x, w1, b1)
    pools = []
    for p in POOL_SIZES:
        r = p // 2
        pools.append(lax.reduce_window(
            y, -jnp.inf, lax.max,
            window_dimensions=(1, 1, p, p),
            window_strides=(1, 1, 1, 1),
            padding=((0, 0), (0, 0), (r, r), (r, r))))
    cat = jnp.concatenate(pools + [y], axis=1)
    return conv1x1_silu(cat, w2, b2)


if __name__ == "__main__":
    N, C_IN, C_OUT, H, W = 2, 8, 8, 16, 16

    key = jax.random.PRNGKey(0)
    kx, kp = jax.random.split(key)
    x = jax.random.normal(kx, (N, C_IN, H, W), jnp.float32)
    params = init_params(kp, C_IN, C_OUT)

    out = jax.block_until_ready(spatial_pyramid_pooling(x, params))
    ref = jax.block_until_ready(reference_nchw(x, params))

    assert out.shape == (N, C_OUT, H, W), out.shape
    # Both convs run with bf16 MXU operands (f32 accumulation) while the reference
    # uses HIGHEST-precision f32 -> loose tolerance.  Pooling itself is exact.
    np.testing.assert_allclose(np.asarray(out), np.asarray(ref),
                               rtol=2e-2, atol=5e-2)
    print("KERNEL_OK")
</pallas_src>

<mosaic_0001>
module attributes {stable_mosaic.version = 11 : i64} {
  func.func @spp_kernel(%arg0: i32, %arg1: i32, %arg2: memref<1x8x256xf32, #tpu.memory_space<vmem>>, %arg3: memref<8x4xbf16, #tpu.memory_space<vmem>>, %arg4: memref<1x4xf32, #tpu.memory_space<vmem>>, %arg5: memref<8x4xbf16, #tpu.memory_space<vmem>>, %arg6: memref<8x4xbf16, #tpu.memory_space<vmem>>, %arg7: memref<8x4xbf16, #tpu.memory_space<vmem>>, %arg8: memref<8x4xbf16, #tpu.memory_space<vmem>>, %arg9: memref<8x1xf32, #tpu.memory_space<vmem>>, %arg10: memref<1x8x256xf32, #tpu.memory_space<vmem>>, %arg11: memref<20x26x4xf32, #tpu.memory_space<vmem>>, %arg12: memref<16x26x4xf32, #tpu.memory_space<vmem>>) attributes {dimension_semantics = [#tpu.dimension_semantics<parallel>, #tpu.dimension_semantics<parallel>], iteration_bounds = array<i64: 2, 1>, scalar_prefetch = 0 : i64, scratch_operands = 2 : i64, tpu.core_type = #tpu.core_type<tc>, window_params = [{transform_indices = @transform_0, window_bounds = array<i64: 1, 8, 256>}, {pipeline_mode = #tpu.pipeline_mode<synchronous>, transform_indices = @transform_1, window_bounds = array<i64: 8, 4>}, {pipeline_mode = #tpu.pipeline_mode<synchronous>, transform_indices = @transform_2, window_bounds = array<i64: 1, 4>}, {transform_indices = @transform_3, window_bounds = array<i64: 8, 4>}, {transform_indices = @transform_4, window_bounds = array<i64: 8, 4>}, {transform_indices = @transform_5, window_bounds = array<i64: 8, 4>}, {transform_indices = @transform_6, window_bounds = array<i64: 8, 4>}, {transform_indices = @transform_7, window_bounds = array<i64: 8, 1>}, {transform_indices = @transform_8, window_bounds = array<i64: 1, 8, 256>}]} {
    %c0 = arith.constant 0 : index
    %c0_0 = arith.constant 0 : index
    %c0_1 = arith.constant 0 : index
    %0 = vector.load %arg2[%c0, %c0_0, %c0_1] : memref<1x8x256xf32, #tpu.memory_space<vmem>>, vector<1x8x256xf32>
    %1 = vector.shape_cast %0 : vector<1x8x256xf32> to vector<8x256xf32>
    %2 = arith.truncf %1 : vector<8x256xf32> to vector<8x256xbf16>
    %c0_2 = arith.constant 0 : index
    %c0_3 = arith.constant 0 : index
    %3 = vector.load %arg3[%c0_2, %c0_3] : memref<8x4xbf16, #tpu.memory_space<vmem>>, vector<8x4xbf16>
    %cst = arith.constant dense<0.000000e+00> : vector<256x4xf32>
    %4 = tpu.matmul %2, %3, %cst {dimension_numbers = #tpu.dot_dimension_numbers<[0], [0], [1], [1], [0, 1, 1, 1], [], []>} : vector<8x256xbf16>, vector<8x4xbf16>, vector<256x4xf32> -> vector<256x4xf32>
    %c0_4 = arith.constant 0 : index
    %c0_5 = arith.constant 0 : index
    %5 = vector.load %arg4[%c0_4, %c0_5] : memref<1x4xf32, #tpu.memory_space<vmem>>, vector<1x4xf32>
    %6 = vector.broadcast %5 : vector<1x4xf32> to vector<256x4xf32>
    %7 = arith.addf %4, %6 : vector<256x4xf32>
    %8 = arith.negf %7 : vector<256x4xf32>
    %9 = math.exp %8 : vector<256x4xf32>
    %cst_6 = arith.constant 1.000000e+00 : f32
    %10 = vector.broadcast %cst_6 : f32 to vector<256x4xf32>
    %11 = arith.addf %10, %9 : vector<256x4xf32>
    %12 = arith.divf %10, %11 : vector<256x4xf32>
    %13 = arith.mulf %7, %12 : vector<256x4xf32>
    %cst_7 = arith.constant 0xFF800000 : f32
    %14 = vector.broadcast %cst_7 : f32 to vector<2x26x4xf32>
    %c0_8 = arith.constant 0 : index
    %c0_9 = arith.constant 0 : index
    %c0_10 = arith.constant 0 : index
    %15 = vector.load %arg11[%c0_8, %c0_9, %c0_10] : memref<20x26x4xf32, #tpu.memory_space<vmem>>, vector<2x26x4xf32>
    tpu.vector_store %arg11[%c0_8, %c0_9, %c0_10], %14 {strides = array<i32>} : memref<20x26x4xf32, #tpu.memory_space<vmem>>, vector<2x26x4xf32>,
    %cst_11 = arith.constant 0xFF800000 : f32
    %16 = vector.broadcast %cst_11 : f32 to vector<2x26x4xf32>
    %c18 = arith.constant 18 : index
    %c0_12 = arith.constant 0 : index
    %c0_13 = arith.constant 0 : index
    %17 = vector.load %arg11[%c18, %c0_12, %c0_13] : memref<20x26x4xf32, #tpu.memory_space<vmem>>, vector<2x26x4xf32>
    tpu.vector_store %arg11[%c18, %c0_12, %c0_13], %16 {strides = array<i32>} : memref<20x26x4xf32, #tpu.memory_space<vmem>>, vector<2x26x4xf32>,
    %cst_14 = arith.constant 0xFF800000 : f32
    %18 = vector.broadcast %cst_14 : f32 to vector<16x8x4xf32>
    %c2 = arith.constant 2 : index
    %c0_15 = arith.constant 0 : index
    %c0_16 = arith.constant 0 : index
    %19 = vector.load %arg11[%c2, %c0_15, %c0_16] : memref<20x26x4xf32, #tpu.memory_space<vmem>>, vector<16x8x4xf32>
    tpu.vector_store %arg11[%c2, %c0_15, %c0_16], %18 {strides = array<i32>} : memref<20x26x4xf32, #tpu.memory_space<vmem>>, vector<16x8x4xf32>,
    %cst_17 = arith.constant 0xFF800000 : f32
    %20 = vector.broadcast %cst_17 : f32 to vector<16x2x4xf32>
    %c2_18 = arith.constant 2 : index
    %c24 = arith.constant 24 : index
    %c0_19 = arith.constant 0 : index
    %21 = vector.load %arg11[%c2_18, %c24, %c0_19] : memref<20x26x4xf32, #tpu.memory_space<vmem>>, vector<16x2x4xf32>
    tpu.vector_store %arg11[%c2_18, %c24, %c0_19], %20 {strides = array<i32>} : memref<20x26x4xf32, #tpu.memory_space<vmem>>, vector<16x2x4xf32>,
    %22 = vector.shape_cast %13 : vector<256x4xf32> to vector<16x16x4xf32>
    %c0_20 = arith.constant 0 : index
    %c0_21 = arith.constant 0 : index
    %23 = vector.load %arg8[%c0_20, %c0_21] : memref<8x4xbf16, #tpu.memory_space<vmem>>, vector<8x4xbf16>
    %24 = vector.shape_cast %22 : vector<16x16x4xf32> to vector<256x4xf32>
    %25 = arith.truncf %24 : vector<256x4xf32> to vector<256x4xbf16>
    %cst_22 = arith.constant dense<0.000000e+00> : vector<8x256xf32>
    %26 = tpu.matmul %23, %25, %cst_22 {dimension_numbers = #tpu.dot_dimension_numbers<[1], [1], [0], [0], [0, 0, 1, 0], [], []>} : vector<8x4xbf16>, vector<256x4xbf16>, vector<8x256xf32> -> vector<8x256xf32>
    %c2_23 = arith.constant 2 : index
    %c8 = arith.constant 8 : index
    %c0_24 = arith.constant 0 : index
    %27 = vector.load %arg11[%c2_23, %c8, %c0_24] : memref<20x26x4xf32, #tpu.memory_space<vmem>>, vector<16x16x4xf32>
    tpu.vector_store %arg11[%c2_23, %c8, %c0_24], %22 {strides = array<i32>} : memref<20x26x4xf32, #tpu.memory_space<vmem>>, vector<16x16x4xf32>,
    %c0_25 = arith.constant 0 : index
    %c0_26 = arith.constant 0 : index
    %c0_27 = arith.constant 0 : index
    %28 = vector.load %arg11[%c0_25, %c0_26, %c0_27] : memref<20x26x4xf32, #tpu.memory_space<vmem>>, vector<16x26x4xf32>
    %c1 = arith.constant 1 : index
    %c0_28 = arith.constant 0 : index
    %c0_29 = arith.constant 0 : index
    %29 = vector.load %arg11[%c1, %c0_28, %c0_29] : memref<20x26x4xf32, #tpu.memory_space<vmem>>, vector<16x26x4xf32>
    %30 = arith.maximumf %28, %29 : vector<16x26x4xf32>
    %c2_30 = arith.constant 2 : index
    %c0_31 = arith.constant 0 : index
    %c0_32 = arith.constant 0 : index
    %31 = vector.load %arg11[%c2_30, %c0_31, %c0_32] : memref<20x26x4xf32, #tpu.memory_space<vmem>>, vector<16x26x4xf32>
    %32 = arith.maximumf %30, %31 : vector<16x26x4xf32>
    %c3 = arith.constant 3 : index
    %c0_33 = arith.constant 0 : index
    %c0_34 = arith.constant 0 : index
    %33 = vector.load %arg11[%c3, %c0_33, %c0_34] : memref<20x26x4xf32, #tpu.memory_space<vmem>>, vector<16x26x4xf32>
    %34 = arith.maximumf %32, %33 : vector<16x26x4xf32>
    %c4 = arith.constant 4 : index
    %c0_35 = arith.constant 0 : index
    %c0_36 = arith.constant 0 : index
    %35 = vector.load %arg11[%c4, %c0_35, %c0_36] : memref<20x26x4xf32, #tpu.memory_space<vmem>>, vector<16x26x4xf32>
    %36 = arith.maximumf %34, %35 : vector<16x26x4xf32>
    %c0_37 = arith.constant 0 : index
    %c0_38 = arith.constant 0 : index
    %c0_39 = arith.constant 0 : index
    %37 = vector.load %arg12[%c0_37, %c0_38, %c0_39] : memref<16x26x4xf32, #tpu.memory_space<vmem>>, vector<16x26x4xf32>
    tpu.vector_store %arg12[%c0_37, %c0_38, %c0_39], %36 {strides = array<i32>} : memref<16x26x4xf32, #tpu.memory_space<vmem>>, vector<16x26x4xf32>,
    %c0_40 = arith.constant 0 : index
    %c6 = arith.constant 6 : index
    %c0_41 = arith.constant 0 : index
    %38 = vector.load %arg12[%c0_40, %c6, %c0_41] : memref<16x26x4xf32, #tpu.memory_space<vmem>>, vector<16x16x4xf32>
    %c0_42 = arith.constant 0 : index
    %c7 = arith.constant 7 : index
    %c0_43 = arith.constant 0 : index
    %39 = vector.load %arg12[%c0_42, %c7, %c0_43] : memref<16x26x4xf32, #tpu.memory_space<vmem>>, vector<16x16x4xf32>
    %40 = arith.maximumf %38, %39 : vector<16x16x4xf32>
    %c0_44 = arith.constant 0 : index
    %c8_45 = arith.constant 8 : index
    %c0_46 = arith.constant 0 : index
    %41 = vector.load %arg12[%c0_44, %c8_45, %c0_46] : memref<16x26x4xf32, #tpu.memory_space<vmem>>, vector<16x16x4xf32>
    %42 = arith.maximumf %40, %41 : vector<16x16x4xf32>
    %c0_47 = arith.constant 0 : index
    %c9 = arith.constant 9 : index
    %c0_48 = arith.constant 0 : index
    %43 = vector.load %arg12[%c0_47, %c9, %c0_48] : memref<16x26x4xf32, #tpu.memory_space<vmem>>, vector<16x16x4xf32>
    %44 = arith.maximumf %42, %43 : vector<16x16x4xf32>
    %c0_49 = arith.constant 0 : index
    %c10 = arith.constant 10 : index
    %c0_50 = arith.constant 0 : index
    %45 = vector.load %arg12[%c0_49, %c10, %c0_50] : memref<16x26x4xf32, #tpu.memory_space<vmem>>, vector<16x16x4xf32>
    %46 = arith.maximumf %44, %45 : vector<16x16x4xf32>
    %c0_51 = arith.constant 0 : index
    %c0_52 = arith.constant 0 : index
    %47 = vector.load %arg5[%c0_51, %c0_52] : memref<8x4xbf16, #tpu.memory_space<vmem>>, vector<8x4xbf16>
    %48 = vector.shape_cast %46 : vector<16x16x4xf32> to vector<256x4xf32>
    %49 = arith.truncf %48 : vector<256x4xf32> to vector<256x4xbf16>
    %cst_53 = arith.constant dense<0.000000e+00> : vector<8x256xf32>
    %50 = tpu.matmul %47, %49, %cst_53 {dimension_numbers = #tpu.dot_dimension_numbers<[1], [1], [0], [0], [0, 0, 1, 0], [], []>} : vector<8x4xbf16>, vector<256x4xbf16>, vector<8x256xf32> -> vector<8x256xf32>
    %51 = arith.addf %26, %50 : vector<8x256xf32>
    %c2_54 = arith.constant 2 : index
    %c8_55 = arith.constant 8 : index
    %c0_56 = arith.constant 0 : index
    %52 = vector.load %arg11[%c2_54, %c8_55, %c0_56] : memref<20x26x4xf32, #tpu.memory_space<vmem>>, vector<16x16x4xf32>
    tpu.vector_store %arg11[%c2_54, %c8_55, %c0_56], %46 {strides = array<i32>} : memref<20x26x4xf32, #tpu.memory_space<vmem>>, vector<16x16x4xf32>,
    %c0_57 = arith.constant 0 : index
    %c0_58 = arith.constant 0 : index
    %c0_59 = arith.constant 0 : index
    %53 = vector.load %arg11[%c0_57, %c0_58, %c0_59] : memref<20x26x4xf32, #tpu.memory_space<vmem>>, vector<16x26x4xf32>
    %c1_60 = arith.constant 1 : index
    %c0_61 = arith.constant 0 : index
    %c0_62 = arith.constant 0 : index
    %54 = vector.load %arg11[%c1_60, %c0_61, %c0_62] : memref<20x26x4xf32, #tpu.memory_space<vmem>>, vector<16x26x4xf32>
    %55 = arith.maximumf %53, %54 : vector<16x26x4xf32>
    %c2_63 = arith.constant 2 : index
    %c0_64 = arith.constant 0 : index
    %c0_65 = arith.constant 0 : index
    %56 = vector.load %arg11[%c2_63, %c0_64, %c0_65] : memref<20x26x4xf32, #tpu.memory_space<vmem>>, vector<16x26x4xf32>
    %57 = arith.maximumf %55, %56 : vector<16x26x4xf32>
    %c3_66 = arith.constant 3 : index
    %c0_67 = arith.constant 0 : index
    %c0_68 = arith.constant 0 : index
    %58 = vector.load %arg11[%c3_66, %c0_67, %c0_68] : memref<20x26x4xf32, #tpu.memory_space<vmem>>, vector<16x26x4xf32>
    %59 = arith.maximumf %57, %58 : vector<16x26x4xf32>
    %c4_69 = arith.constant 4 : index
    %c0_70 = arith.constant 0 : index
    %c0_71 = arith.constant 0 : index
    %60 = vector.load %arg11[%c4_69, %c0_70, %c0_71] : memref<20x26x4xf32, #tpu.memory_space<vmem>>, vector<16x26x4xf32>
    %61 = arith.maximumf %59, %60 : vector<16x26x4xf32>
    %c0_72 = arith.constant 0 : index
    %c0_73 = arith.constant 0 : index
    %c0_74 = arith.constant 0 : index
    %62 = vector.load %arg12[%c0_72, %c0_73, %c0_74] : memref<16x26x4xf32, #tpu.memory_space<vmem>>, vector<16x26x4xf32>
    tpu.vector_store %arg12[%c0_72, %c0_73, %c0_74], %61 {strides = array<i32>} : memref<16x26x4xf32, #tpu.memory_space<vmem>>, vector<16x26x4xf32>,
    %c0_75 = arith.constant 0 : index
    %c6_76 = arith.constant 6 : index
    %c0_77 = arith.constant 0 : index
    %63 = vector.load %arg12[%c0_75, %c6_76, %c0_77] : memref<16x26x4xf32, #tpu.memory_space<vmem>>, vector<16x16x4xf32>
    %c0_78 = arith.constant 0 : index
    %c7_79 = arith.constant 7 : index
    %c0_80 = arith.constant 0 : index
    %64 = vector.load %arg12[%c0_78, %c7_79, %c0_80] : memref<16x26x4xf32, #tpu.memory_space<vmem>>, vector<16x16x4xf32>
    %65 = arith.maximumf %63, %64 : vector<16x16x4xf32>
    %c0_81 = arith.constant 0 : index
    %c8_82 = arith.constant 8 : index
    %c0_83 = arith.constant 0 : index
    %66 = vector.load %arg12[%c0_81, %c8_82, %c0_83] : memref<16x26x4xf32, #tpu.memory_space<vmem>>, vector<16x16x4xf32>
    %67 = arith.maximumf %65, %66 : vector<16x16x4xf32>
    %c0_84 = arith.constant 0 : index
    %c9_85 = arith.constant 9 : index
    %c0_86 = arith.constant 0 : index
    %68 = vector.load %arg12[%c0_84, %c9_85, %c0_86] : memref<16x26x4xf32, #tpu.memory_space<vmem>>, vector<16x16x4xf32>
    %69 = arith.maximumf %67, %68 : vector<16x16x4xf32>
    %c0_87 = arith.constant 0 : index
    %c10_88 = arith.constant 10 : index
    %c0_89 = arith.constant 0 : index
    %70 = vector.load %arg12[%c0_87, %c10_88, %c0_89] : memref<16x26x4xf32, #tpu.memory_space<vmem>>, vector<16x16x4xf32>
    %71 = arith.maximumf %69, %70 : vector<16x16x4xf32>
    %c0_90 = arith.constant 0 : index
    %c0_91 = arith.constant 0 : index
    %72 = vector.load %arg6[%c0_90, %c0_91] : memref<8x4xbf16, #tpu.memory_space<vmem>>, vector<8x4xbf16>
    %73 = vector.shape_cast %71 : vector<16x16x4xf32> to vector<256x4xf32>
    %74 = arith.truncf %73 : vector<256x4xf32> to vector<256x4xbf16>
    %cst_92 = arith.constant dense<0.000000e+00> : vector<8x256xf32>
    %75 = tpu.matmul %72, %74, %cst_92 {dimension_numbers = #tpu.dot_dimension_numbers<[1], [1], [0], [0], [0, 0, 1, 0], [], []>} : vector<8x4xbf16>, vector<256x4xbf16>, vector<8x256xf32> -> vector<8x256xf32>
    %76 = arith.addf %51, %75 : vector<8x256xf32>
    %c2_93 = arith.constant 2 : index
    %c8_94 = arith.constant 8 : index
    %c0_95 = arith.constant 0 : index
    %77 = vector.load %arg11[%c2_93, %c8_94, %c0_95] : memref<20x26x4xf32, #tpu.memory_space<vmem>>, vector<16x16x4xf32>
    tpu.vector_store %arg11[%c2_93, %c8_94, %c0_95], %71 {strides = array<i32>} : memref<20x26x4xf32, #tpu.memory_space<vmem>>, vector<16x16x4xf32>,
    %c0_96 = arith.constant 0 : index
    %c0_97 = arith.constant 0 : index
    %c0_98 = arith.constant 0 : index
    %78 = vector.load %arg11[%c0_96, %c0_97, %c0_98] : memref<20x26x4xf32, #tpu.memory_space<vmem>>, vector<16x26x4xf32>
    %c1_99 = arith.constant 1 : index
    %c0_100 = arith.constant 0 : index
    %c0_101 = arith.constant 0 : index
    %79 = vector.load %arg11[%c1_99, %c0_100, %c0_101] : memref<20x26x4xf32, #tpu.memory_space<vmem>>, vector<16x26x4xf32>
    %80 = arith.maximumf %78, %79 : vector<16x26x4xf32>
    %c2_102 = arith.constant 2 : index
    %c0_103 = arith.constant 0 : index
    %c0_104 = arith.constant 0 : index
    %81 = vector.load %arg11[%c2_102, %c0_103, %c0_104] : memref<20x26x4xf32, #tpu.memory_space<vmem>>, vector<16x26x4xf32>
    %82 = arith.maximumf %80, %81 : vector<16x26x4xf32>
    %c3_105 = arith.constant 3 : index
    %c0_106 = arith.constant 0 : index
    %c0_107 = arith.constant 0 : index
    %83 = vector.load %arg11[%c3_105, %c0_106, %c0_107] : memref<20x26x4xf32, #tpu.memory_space<vmem>>, vector<16x26x4xf32>
    %84 = arith.maximumf %82, %83 : vector<16x26x4xf32>
    %c4_108 = arith.constant 4 : index
    %c0_109 = arith.constant 0 : index
    %c0_110 = arith.constant 0 : index
    %85 = vector.load %arg11[%c4_108, %c0_109, %c0_110] : memref<20x26x4xf32, #tpu.memory_space<vmem>>, vector<16x26x4xf32>
    %86 = arith.maximumf %84, %85 : vector<16x26x4xf32>
    %c0_111 = arith.constant 0 : index
    %c0_112 = arith.constant 0 : index
    %c0_113 = arith.constant 0 : index
    %87 = vector.load %arg12[%c0_111, %c0_112, %c0_113] : memref<16x26x4xf32, #tpu.memory_space<vmem>>, vector<16x26x4xf32>
    tpu.vector_store %arg12[%c0_111, %c0_112, %c0_113], %86 {strides = array<i32>} : memref<16x26x4xf32, #tpu.memory_space<vmem>>, vector<16x26x4xf32>,
    %c0_114 = arith.constant 0 : index
    %c6_115 = arith.constant 6 : index
    %c0_116 = arith.constant 0 : index
    %88 = vector.load %arg12[%c0_114, %c6_115, %c0_116] : memref<16x26x4xf32, #tpu.memory_space<vmem>>, vector<16x16x4xf32>
    %c0_117 = arith.constant 0 : index
    %c7_118 = arith.constant 7 : index
    %c0_119 = arith.constant 0 : index
    %89 = vector.load %arg12[%c0_117, %c7_118, %c0_119] : memref<16x26x4xf32, #tpu.memory_space<vmem>>, vector<16x16x4xf32>
    %90 = arith.maximumf %88, %89 : vector<16x16x4xf32>
    %c0_120 = arith.constant 0 : index
    %c8_121 = arith.constant 8 : index
    %c0_122 = arith.constant 0 : index
    %91 = vector.load %arg12[%c0_120, %c8_121, %c0_122] : memref<16x26x4xf32, #tpu.memory_space<vmem>>, vector<16x16x4xf32>
    %92 = arith.maximumf %90, %91 : vector<16x16x4xf32>
    %c0_123 = arith.constant 0 : index
    %c9_124 = arith.constant 9 : index
    %c0_125 = arith.constant 0 : index
    %93 = vector.load %arg12[%c0_123, %c9_124, %c0_125] : memref<16x26x4xf32, #tpu.memory_space<vmem>>, vector<16x16x4xf32>
    %94 = arith.maximumf %92, %93 : vector<16x16x4xf32>
    %c0_126 = arith.constant 0 : index
    %c10_127 = arith.constant 10 : index
    %c0_128 = arith.constant 0 : index
    %95 = vector.load %arg12[%c0_126, %c10_127, %c0_128] : memref<16x26x4xf32, #tpu.memory_space<vmem>>, vector<16x16x4xf32>
    %96 = arith.maximumf %94, %95 : vector<16x16x4xf32>
    %c0_129 = arith.constant 0 : index
    %c0_130 = arith.constant 0 : index
    %97 = vector.load %arg7[%c0_129, %c0_130] : memref<8x4xbf16, #tpu.memory_space<vmem>>, vector<8x4xbf16>
    %98 = vector.shape_cast %96 : vector<16x16x4xf32> to vector<256x4xf32>
    %99 = arith.truncf %98 : vector<256x4xf32> to vector<256x4xbf16>
    %cst_131 = arith.constant dense<0.000000e+00> : vector<8x256xf32>
    %100 = tpu.matmul %97, %99, %cst_131 {dimension_numbers = #tpu.dot_dimension_numbers<[1], [1], [0], [0], [0, 0, 1, 0], [], []>} : vector<8x4xbf16>, vector<256x4xbf16>, vector<8x256xf32> -> vector<8x256xf32>
    %101 = arith.addf %76, %100 : vector<8x256xf32>
    %c0_132 = arith.constant 0 : index
    %c0_133 = arith.constant 0 : index
    %102 = vector.load %arg9[%c0_132, %c0_133] : memref<8x1xf32, #tpu.memory_space<vmem>>, vector<8x1xf32>
    %103 = vector.broadcast %102 : vector<8x1xf32> to vector<8x256xf32>
    %104 = arith.addf %101, %103 : vector<8x256xf32>
    %105 = arith.negf %104 : vector<8x256xf32>
    %106 = math.exp %105 : vector<8x256xf32>
    %cst_134 = arith.constant 1.000000e+00 : f32
    %107 = vector.broadcast %cst_134 : f32 to vector<8x256xf32>
    %108 = arith.addf %107, %106 : vector<8x256xf32>
    %109 = arith.divf %107, %108 : vector<8x256xf32>
    %110 = arith.mulf %104, %109 : vector<8x256xf32>
    %c0_135 = arith.constant 0 : index
    %c0_136 = arith.constant 0 : index
    %c0_137 = arith.constant 0 : index
    %111 = vector.load %arg10[%c0_135, %c0_136, %c0_137] : memref<1x8x256xf32, #tpu.memory_space<vmem>>, vector<1x8x256xf32>
    %112 = vector.shape_cast %111 : vector<1x8x256xf32> to vector<8x256xf32>
    %113 = vector.shape_cast %110 : vector<8x256xf32> to vector<1x8x256xf32>
    tpu.vector_store %arg10[%c0_135, %c0_136, %c0_137], %113 {strides = array<i32>} : memref<1x8x256xf32, #tpu.memory_space<vmem>>, vector<1x8x256xf32>,
    return
  }
  func.func @transform_0(%arg0: i32, %arg1: i32) -> (i32, i32, i32) {
    %c0_i32 = arith.constant 0 : i32
    %c0_i32_0 = arith.constant 0 : i32
    %c0_i32_1 = arith.constant 0 : i32
    return %arg0, %c0_i32, %c0_i32_0 : i32, i32, i32
  }
  func.func @transform_1(%arg0: i32, %arg1: i32) -> (i32, i32) {
    %c0_i32 = arith.constant 0 : i32
    %c0_i32_0 = arith.constant 0 : i32
    %c0_i32_1 = arith.constant 0 : i32
    return %c0_i32, %c0_i32_0 : i32, i32
  }
  func.func @transform_2(%arg0: i32, %arg1: i32) -> (i32, i32) {
    %c0_i32 = arith.constant 0 : i32
    %c0_i32_0 = arith.constant 0 : i32
    %c0_i32_1 = arith.constant 0 : i32
    return %c0_i32, %c0_i32_0 : i32, i32
  }
  func.func @transform_3(%arg0: i32, %arg1: i32) -> (i32, i32) {
    %c0_i32 = arith.constant 0 : i32
    %c0_i32_0 = arith.constant 0 : i32
    return %arg1, %c0_i32 : i32, i32
  }
  func.func @transform_4(%arg0: i32, %arg1: i32) -> (i32, i32) {
    %c0_i32 = arith.constant 0 : i32
    %c0_i32_0 = arith.constant 0 : i32
    return %arg1, %c0_i32 : i32, i32
  }
  func.func @transform_5(%arg0: i32, %arg1: i32) -> (i32, i32) {
    %c0_i32 = arith.constant 0 : i32
    %c0_i32_0 = arith.constant 0 : i32
    return %arg1, %c0_i32 : i32, i32
  }
  func.func @transform_6(%arg0: i32, %arg1: i32) -> (i32, i32) {
    %c0_i32 = arith.constant 0 : i32
    %c0_i32_0 = arith.constant 0 : i32
    return %arg1, %c0_i32 : i32, i32
  }
  func.func @transform_7(%arg0: i32, %arg1: i32) -> (i32, i32) {
    %c0_i32 = arith.constant 0 : i32
    %c0_i32_0 = arith.constant 0 : i32
    return %arg1, %c0_i32 : i32, i32
  }
  func.func @transform_8(%arg0: i32, %arg1: i32) -> (i32, i32, i32) {
    %c0_i32 = arith.constant 0 : i32
    %c0_i32_0 = arith.constant 0 : i32
    return %arg0, %arg1, %c0_i32 : i32, i32, i32
  }
}

</mosaic_0001>

<llo_original>
// kernel: tpu_custom_call.1
$region0: #{tpu_custom_call.1}
  #allocation0 [shape = 'u32[]', space=smem, size = 0x4, offset = 0x4, fixed_abs, tag = 'smem constant byte address 0x4 - core index']
  #allocation1 [shape = 'u32[72,128]{1,0:T(1,128)}', space=vmem, size = 0x9000, scoped, tag = 'internal scratch']
  #allocation2 [shape = 'f32[20,26,4]{2,1,0:T(8,128)}', space=vmem, size = 0x50000, scoped, tag = 'scratch operand']
  #allocation3 [shape = 'f32[16,26,4]{2,1,0:T(8,128)}', space=vmem, size = 0x40000, scoped, tag = 'scratch operand']
  %s0 = inlined_call_operand.hbm [shape: f32[2,8,256], index: 0, kind: input, shape index: {}]
  %s1 = inlined_call_operand.vmem [shape: bf16[8,4], index: 1, kind: input, shape index: {}]
  %s2 = inlined_call_operand.vmem [shape: f32[1,4], index: 2, kind: input, shape index: {}]
  %s3 = inlined_call_operand.vmem [shape: bf16[8,4], index: 3, kind: input, shape index: {}]
  %s4 = inlined_call_operand.vmem [shape: bf16[8,4], index: 4, kind: input, shape index: {}]
  %s5 = inlined_call_operand.vmem [shape: bf16[8,4], index: 5, kind: input, shape index: {}]
  %s6 = inlined_call_operand.vmem [shape: bf16[8,4], index: 6, kind: input, shape index: {}]
  %s7 = inlined_call_operand.vmem [shape: f32[8,1], index: 7, kind: input, shape index: {}]
  %s8 = inlined_call_operand.hbm [shape: f32[2,8,256], index: 8, kind: output, shape index: {}]
  %s9 = sld [smem:[#allocation0]]
  $region69: #{tpu_custom_call.1} parent=0
    _
  %s11 = ssub.s32 1, %s9
  %s12 = scalar_select 0, %s11, %s9
  $region1: #{tpu_custom_call.1} parent=0
    #allocation4 [shape = 'u8[16384]{0}', space=vmem, size = 0x4000, scoped, tag = 'input window, operand 0']
    #allocation5 [shape = 's32[2]{0}', space=sflag, size = 0x8, scoped, tag = 'scoped memory for tpu_custom_call.1']
    #allocation6 [shape = 's32[2]{0}', space=sflag, size = 0x8, scoped, tag = 'scoped memory for tpu_custom_call.1']
    #allocation7 [shape = 'u8[16384]{0}', space=vmem, size = 0x4000, scoped, tag = 'output window, operand 0']
    %13 = vsyncpa [#allocation5], 0
    %s14 = scalar_lea.sflag [#allocation5], 1
    %15 = vsyncpa %s14, 0
    %16 = vsyncpa [#allocation6], 0
    %s17 = scalar_lea.sflag [#allocation6], 1
    %18 = vsyncpa %s17, 0
    loop: start=0, step=1, limit=4
    $region2: #{tpu_custom_call.1} parent=1 // loop_pre_header
      _
    $region3: #{tpu_custom_call.1} parent=1 // loop_header
      %s20 = sphi 0, %s24
      %p21 = scmp.ge.s32.totalorder %s20, 4
      %s27 = sphi 0, %s39
      %s28 = sphi 0, %s35
      %s29 = sphi 0, %s27
      %s30 = sphi 0, %s28
      %s31 = sphi 0, %s29
      %s32 = sphi 0, %s30
      %s42 = sphi 0, %s44
      %s45 = sphi 0, %s42
      %s46 = sphi 0, %s45
      %s62 = sphi 0, %s46
      %s66 = sphi 0, %s66
      %s68 = sphi 0, %s66
      %s69 = sphi 0, %s68
      %s83 = sphi 0, %s69
      %s87 = sphi 0, %s87
      %s89 = sphi 0, %s87
      %s90 = sphi 0, %s89
      %s104 = sphi 0, %s90
      %s110 = sphi 0, %s112
      %s113 = sphi 0, %s110
      %s114 = sphi 0, %s113
      %s130 = sphi 0, %s114
      %s136 = sphi 0, %s138
      %s139 = sphi 0, %s136
      %s140 = sphi 0, %s139
      %s156 = sphi 0, %s140
      %s162 = sphi 0, %s164
      %s165 = sphi 0, %s162
      %s166 = sphi 0, %s165
      %s182 = sphi 0, %s166
      %s188 = sphi 0, %s190
      %s191 = sphi 0, %s188
      %s192 = sphi 0, %s191
      %s208 = sphi 0, %s192
      %s214 = sphi 0, %s216
      %s217 = sphi 0, %s214
      %s218 = sphi 0, %s217
      %s234 = sphi 0, %s218
      %s242 = sphi 0, %s244
      %s245 = sphi 0, %s242
      %s246 = sphi 0, %s245
      %s262 = sphi 0, %s246
    $region4: #{tpu_custom_call.1} parent=1 // loop_header_branch
      %23 = sbr.rel (%p21) target = $region8
    $region5: #{tpu_custom_call.1} parent=1 // loop_body
      %s25 = ssub.s32 %s20, 1
      %s26 = ssub.s32 %s20, 2
      %s33 = sadd.s32 1, %s28
      %p34 = scmp.ge.s32.totalorder %s33, 1
      %s35 = scalar_select %p34, 0, %s33
      %s36 = sadd.s32 1, %s27
      %s37 = scalar_select %p34, %s36, %s27
      %p38 = scmp.ge.s32.totalorder %s37, 2
      %s39 = scalar_select %p38, 0, %s37
      %s40 = ssub.s32 %s27, %s39
      %p41 = scmp.eq.s32.totalorder %s40, 0
      %s43 = sadd.s32 %s42, 1
      %s44 = scalar_select %p41, %s42, %s43
      %p47 = pneg %p41
      %p48 = scmp.eq.s32.totalorder %s20, 1
      %p49 = por %p47, %p48
      %p50 = scmp.ne.s32.totalorder %s42, %s45
      %p51 = scmp.eq.s32.totalorder %s20, 0
      %p52 = por %p50, %p51
      %p53 = scmp.ne.s32.totalorder %s42, %s45
      %p54 = scmp.eq.s32.totalorder %s25, 1
      %p55 = por %p53, %p54
      %p56 = scmp.ne.s32.totalorder %s45, %s46
      %p57 = scmp.eq.s32.totalorder %s25, 0
      %p58 = por %p56, %p57
      %p59 = scmp.ne.s32.totalorder %s45, %s46
      %p60 = scmp.eq.s32.totalorder %s26, 1
      %p61 = por %p59, %p60
      %p63 = scmp.ne.s32.totalorder %s46, %s62
      %p64 = scmp.eq.s32.totalorder %s26, 0
      %p65 = por %p63, %p64
      %s67 = sadd.s32 %s66, 1
      %p70 = scmp.eq.s32.totalorder %s20, 1
      %p71 = scmp.ne.s32.totalorder %s66, %s68
      %p72 = scmp.eq.s32.totalorder %s20, 0
      %p73 = por %p71, %p72
      %p74 = scmp.ne.s32.totalorder %s66, %s68
      %p75 = scmp.eq.s32.totalorder %s25, 1
      %p76 = por %p74, %p75
      %p77 = scmp.ne.s32.totalorder %s68, %s69
      %p78 = scmp.eq.s32.totalorder %s25, 0
      %p79 = por %p77, %p78
      %p80 = scmp.ne.s32.totalorder %s68, %s69
      %p81 = scmp.eq.s32.totalorder %s26, 1
      %p82 = por %p80, %p81
      %p84 = scmp.ne.s32.totalorder %s69, %s83
      %p85 = scmp.eq.s32.totalorder %s26, 0
      %p86 = por %p84, %p85
      %s88 = sadd.s32 %s87, 1
      %p91 = scmp.eq.s32.totalorder %s20, 1
      %p92 = scmp.ne.s32.totalorder %s87, %s89
      %p93 = scmp.eq.s32.totalorder %s20, 0
      %p94 = por %p92, %p93
      %p95 = scmp.ne.s32.totalorder %s87, %s89
      %p96 = scmp.eq.s32.totalorder %s25, 1
      %p97 = por %p95, %p96
      %p98 = scmp.ne.s32.totalorder %s89, %s90
      %p99 = scmp.eq.s32.totalorder %s25, 0
      %p100 = por %p98, %p99
      %p101 = scmp.ne.s32.totalorder %s89, %s90
      %p102 = scmp.eq.s32.totalorder %s26, 1
      %p103 = por %p101, %p102
      %p105 = scmp.ne.s32.totalorder %s90, %s104
      %p106 = scmp.eq.s32.totalorder %s26, 0
      %p107 = por %p105, %p106
      %s108 = ssub.s32 %s28, %s35
      %p109 = scmp.eq.s32.totalorder %s108, 0
      %s111 = sadd.s32 %s110, 1
      %s112 = scalar_select %p109, %s110, %s111
      %p115 = pneg %p109
      %p116 = scmp.eq.s32.totalorder %s20, 1
      %p117 = por %p115, %p116
      %p118 = scmp.ne.s32.totalorder %s110, %s113
      %p119 = scmp.eq.s32.totalorder %s20, 0
      %p120 = por %p118, %p119
      %p121 = scmp.ne.s32.totalorder %s110, %s113
      %p122 = scmp.eq.s32.totalorder %s25, 1
      %p123 = por %p121, %p122
      %p124 = scmp.ne.s32.totalorder %s113, %s114
      %p125 = scmp.eq.s32.totalorder %s25, 0
      %p126 = por %p124, %p125
      %p127 = scmp.ne.s32.totalorder %s113, %s114
      %p128 = scmp.eq.s32.totalorder %s26, 1
      %p129 = por %p127, %p128
      %p131 = scmp.ne.s32.totalorder %s114, %s130
      %p132 = scmp.eq.s32.totalorder %s26, 0
      %p133 = por %p131, %p132
      %s134 = ssub.s32 %s28, %s35
      %p135 = scmp.eq.s32.totalorder %s134, 0
      %s137 = sadd.s32 %s136, 1
      %s138 = scalar_select %p135, %s136, %s137
      %p141 = pneg %p135
      %p142 = scmp.eq.s32.totalorder %s20, 1
      %p143 = por %p141, %p142
      %p144 = scmp.ne.s32.totalorder %s136, %s139
      %p145 = scmp.eq.s32.totalorder %s20, 0
      %p146 = por %p144, %p145
      %p147 = scmp.ne.s32.totalorder %s136, %s139
      %p148 = scmp.eq.s32.totalorder %s25, 1
      %p149 = por %p147, %p148
      %p150 = scmp.ne.s32.totalorder %s139, %s140
      %p151 = scmp.eq.s32.totalorder %s25, 0
      %p152 = por %p150, %p151
      %p153 = scmp.ne.s32.totalorder %s139, %s140
      %p154 = scmp.eq.s32.totalorder %s26, 1
      %p155 = por %p153, %p154
      %p157 = scmp.ne.s32.totalorder %s140, %s156
      %p158 = scmp.eq.s32.totalorder %s26, 0
      %p159 = por %p157, %p158
      %s160 = ssub.s32 %s28, %s35
      %p161 = scmp.eq.s32.totalorder %s160, 0
      %s163 = sadd.s32 %s162, 1
      %s164 = scalar_select %p161, %s162, %s163
      %p167 = pneg %p161
      %p168 = scmp.eq.s32.totalorder %s20, 1
      %p169 = por %p167, %p168
      %p170 = scmp.ne.s32.totalorder %s162, %s165
      %p171 = scmp.eq.s32.totalorder %s20, 0
      %p172 = por %p170, %p171
      %p173 = scmp.ne.s32.totalorder %s162, %s165
      %p174 = scmp.eq.s32.totalorder %s25, 1
      %p175 = por %p173, %p174
      %p176 = scmp.ne.s32.totalorder %s165, %s166
      %p177 = scmp.eq.s32.totalorder %s25, 0
      %p178 = por %p176, %p177
      %p179 = scmp.ne.s32.totalorder %s165, %s166
      %p180 = scmp.eq.s32.totalorder %s26, 1
      %p181 = por %p179, %p180
      %p183 = scmp.ne.s32.totalorder %s166, %s182
      %p184 = scmp.eq.s32.totalorder %s26, 0
      %p185 = por %p183, %p184
      %s186 = ssub.s32 %s28, %s35
      %p187 = scmp.eq.s32.totalorder %s186, 0
      %s189 = sadd.s32 %s188, 1
      %s190 = scalar_select %p187, %s188, %s189
      %p193 = pneg %p187
      %p194 = scmp.eq.s32.totalorder %s20, 1
      %p195 = por %p193, %p194
      %p196 = scmp.ne.s32.totalorder %s188, %s191
      %p197 = scmp.eq.s32.totalorder %s20, 0
      %p198 = por %p196, %p197
      %p199 = scmp.ne.s32.totalorder %s188, %s191
      %p200 = scmp.eq.s32.totalorder %s25, 1
      %p201 = por %p199, %p200
      %p202 = scmp.ne.s32.totalorder %s191, %s192
      %p203 = scmp.eq.s32.totalorder %s25, 0
      %p204 = por %p202, %p203
      %p205 = scmp.ne.s32.totalorder %s191, %s192
      %p206 = scmp.eq.s32.totalorder %s26, 1
      %p207 = por %p205, %p206
      %p209 = scmp.ne.s32.totalorder %s192, %s208
      %p210 = scmp.eq.s32.totalorder %s26, 0
      %p211 = por %p209, %p210
      %s212 = ssub.s32 %s28, %s35
      %p213 = scmp.eq.s32.totalorder %s212, 0
      %s215 = sadd.s32 %s214, 1
      %s216 = scalar_select %p213, %s214, %s215
      %p219 = pneg %p213
      %p220 = scmp.eq.s32.totalorder %s20, 1
      %p221 = por %p219, %p220
      %p222 = scmp.ne.s32.totalorder %s214, %s217
      %p223 = scmp.eq.s32.totalorder %s20, 0
      %p224 = por %p222, %p223
      %p225 = scmp.ne.s32.totalorder %s214, %s217
      %p226 = scmp.eq.s32.totalorder %s25, 1
      %p227 = por %p225, %p226
      %p228 = scmp.ne.s32.totalorder %s217, %s218
      %p229 = scmp.eq.s32.totalorder %s25, 0
      %p230 = por %p228, %p229
      %p231 = scmp.ne.s32.totalorder %s217, %s218
      %p232 = scmp.eq.s32.totalorder %s26, 1
      %p233 = por %p231, %p232
      %p235 = scmp.ne.s32.totalorder %s218, %s234
      %p236 = scmp.eq.s32.totalorder %s26, 0
      %p237 = por %p235, %p236
      %s238 = ssub.s32 %s27, %s39
      %s239 = ssub.s32 %s28, %s35
      %s240 = sor.u32 %s238, %s239
      %p241 = scmp.eq.s32.totalorder %s240, 0
      %s243 = sadd.s32 %s242, 1
      %s244 = scalar_select %p241, %s242, %s243
      %p247 = pneg %p241
      %p248 = scmp.eq.s32.totalorder %s20, 1
      %p249 = por %p247, %p248
      %p250 = scmp.ne.s32.totalorder %s242, %s245
      %p251 = scmp.eq.s32.totalorder %s20, 0
      %p252 = por %p250, %p251
      %p253 = scmp.ne.s32.totalorder %s242, %s245
      %p254 = scmp.eq.s32.totalorder %s25, 1
      %p255 = por %p253, %p254
      %p256 = scmp.ne.s32.totalorder %s245, %s246
      %p257 = scmp.eq.s32.totalorder %s25, 0
      %p258 = por %p256, %p257
      %p259 = scmp.ne.s32.totalorder %s245, %s246
      %p260 = scmp.eq.s32.totalorder %s26, 1
      %p261 = por %p259, %p260
      %p263 = scmp.ne.s32.totalorder %s246, %s262
      %p264 = scmp.eq.s32.totalorder %s26, 0
      %p265 = por %p263, %p264
      %p266 = scmp.le.s32.totalorder 1, %s20
      %p267 = scmp.lt.s32.totalorder %s20, 3
      %p268 = pnand %p266, %p267
      %p269 = pneg %p268
      // Predicated region
      $region9: #{tpu_custom_call.1} parent=5 // pred_check
        _
      $region10: #{tpu_custom_call.1} parent=5 // pred_check_branch
        %271 = sbr.rel (%p268) target = $region12
      $region11: #{tpu_custom_call.1} parent=5 // pred_region
        %s272 = ssub.s32 %s20, 1
        // Predicated region
        $region13: #{tpu_custom_call.1} parent=11 // pred_check
          %p273 = pneg %p79
        $region14: #{tpu_custom_call.1} parent=11 // pred_check_branch
          %275 = sbr.rel (%p273) target = $region16
        $region15: #{tpu_custom_call.1} parent=11 // pred_region
          _
        $region16: #{tpu_custom_call.1} parent=11 // pred_fallthru
          _
        // Predicated region
        $region17: #{tpu_custom_call.1} parent=11 // pred_check
          %p276 = pneg %p100
        $region18: #{tpu_custom_call.1} parent=11 // pred_check_branch
          %278 = sbr.rel (%p276) target = $region20
        $region19: #{tpu_custom_call.1} parent=11 // pred_region
          _
        $region20: #{tpu_custom_call.1} parent=11 // pred_fallthru
          _
        // Predicated region
        $region21: #{tpu_custom_call.1} parent=11 // pred_check
          %p279 = pneg %p126
        $region22: #{tpu_custom_call.1} parent=11 // pred_check_branch
          %281 = sbr.rel (%p279) target = $region24
        $region23: #{tpu_custom_call.1} parent=11 // pred_region
          %p282 = scmp.lt.s32.totalorder %s30, 0
          %s283 = scalar_select %p282, %s30, 0
          %s284 = smul.addr %s283, 4
          %s285 = scalar_lea.vmem %s3, %s284
        $region24: #{tpu_custom_call.1} parent=11 // pred_fallthru
          _
        // Predicated region
        $region25: #{tpu_custom_call.1} parent=11 // pred_check
          %p286 = pneg %p152
        $region26: #{tpu_custom_call.1} parent=11 // pred_check_branch
          %288 = sbr.rel (%p286) target = $region28
        $region27: #{tpu_custom_call.1} parent=11 // pred_region
          %p289 = scmp.lt.s32.totalorder %s30, 0
          %s290 = scalar_select %p289, %s30, 0
          %s291 = smul.addr %s290, 4
          %s292 = scalar_lea.vmem %s4, %s291
        $region28: #{tpu_custom_call.1} parent=11 // pred_fallthru
          _
        // Predicated region
        $region29: #{tpu_custom_call.1} parent=11 // pred_check
          %p293 = pneg %p178
        $region30: #{tpu_custom_call.1} parent=11 // pred_check_branch
          %295 = sbr.rel (%p293) target = $region32
        $region31: #{tpu_custom_call.1} parent=11 // pred_region
          %p296 = scmp.lt.s32.totalorder %s30, 0
          %s297 = scalar_select %p296, %s30, 0
          %s298 = smul.addr %s297, 4
          %s299 = scalar_lea.vmem %s5, %s298
        $region32: #{tpu_custom_call.1} parent=11 // pred_fallthru
          _
        // Predicated region
        $region33: #{tpu_custom_call.1} parent=11 // pred_check
          %p300 = pneg %p204
        $region34: #{tpu_custom_call.1} parent=11 // pred_check_branch
          %302 = sbr.rel (%p300) target = $region36
        $region35: #{tpu_custom_call.1} parent=11 // pred_region
          %p303 = scmp.lt.s32.totalorder %s30, 0
          %s304 = scalar_select %p303, %s30, 0
          %s305 = smul.addr %s304, 4
          %s306 = scalar_lea.vmem %s6, %s305
        $region36: #{tpu_custom_call.1} parent=11 // pred_fallthru
          _
        // Predicated region
        $region37: #{tpu_custom_call.1} parent=11 // pred_check
          %p307 = pneg %p230
        $region38: #{tpu_custom_call.1} parent=11 // pred_check_branch
          %309 = sbr.rel (%p307) target = $region40
        $region39: #{tpu_custom_call.1} parent=11 // pred_region
          %p310 = scmp.lt.s32.totalorder %s30, 0
          %s311 = scalar_select %p310, %s30, 0
          %s312 = smul.addr %s311, 8
          %s313 = scalar_lea.vmem %s7, %s312
        $region40: #{tpu_custom_call.1} parent=11 // pred_fallthru
          _
      $region12: #{tpu_custom_call.1} parent=5 // pred_fallthru
        _
      %p314 = scmp.lt.s32.totalorder %s20, 2
      // Predicated region
      $region41: #{tpu_custom_call.1} parent=5 // pred_check
        %p315 = pneg %p314
      $region42: #{tpu_custom_call.1} parent=5 // pred_check_branch
        %317 = sbr.rel (%p315) target = $region44
      $region43: #{tpu_custom_call.1} parent=5 // pred_region
        // Predicated region
        $region45: #{tpu_custom_call.1} parent=43 // pred_check
          %p318 = pneg %p52
        $region46: #{tpu_custom_call.1} parent=43 // pred_check_branch
          %320 = sbr.rel (%p318) target = $region48
        $region47: #{tpu_custom_call.1} parent=43 // pred_region
          %s321 = sand.u32 %s42, 1
          %s322 = scalar_lea.sflag [#allocation5], %s321
          %s323 = sand.u32 %s42, 1
          %s324 = smul.addr %s323, 16
          %s325 = scalar_lea.vmem [#allocation4], %s324
          %327 = vsyncadd %s322, 0
          %s328 = smul.addr %s27, 2
          %s329 = smul.addr %s328, 8
          %s330 = scalar_lea.hbm %s0, %s329
          %s332 = sshll.u32 %s330, 4
          %s333 = int_to_ptr.hbm [resolvable:$true] %s332
          %s334 = sshll.u32 %s325, 4
          %s335 = int_to_ptr.vmem [resolvable:$true] %s334
          %337 = dma.hbm_to_vmem [thread:$0]  %s333, 256, %s335, %s322
        $region48: #{tpu_custom_call.1} parent=43 // pred_fallthru
          _
      $region44: #{tpu_custom_call.1} parent=5 // pred_fallthru
        _
      %p338 = scmp.le.s32.totalorder 1, %s20
      %p339 = scmp.lt.s32.totalorder %s20, 3
      %p340 = pnand %p338, %p339
      %p341 = pneg %p340
      // Predicated region
      $region49: #{tpu_custom_call.1} parent=5 // pred_check
        _
      $region50: #{tpu_custom_call.1} parent=5 // pred_check_branch
        %343 = sbr.rel (%p340) target = $region52
      $region51: #{tpu_custom_call.1} parent=5 // pred_region
        %s344 = ssub.s32 %s20, 1
        %s345 = sand.u32 %s45, 1
        %s346 = scalar_lea.sflag [#allocation5], %s345
        %s347 = sand.u32 %s45, 1
        %s348 = smul.addr %s347, 16
        %s349 = scalar_lea.vmem [#allocation4], %s348
        // Predicated region
        $region53: #{tpu_custom_call.1} parent=51 // pred_check
          %p350 = pneg %p58
        $region54: #{tpu_custom_call.1} parent=51 // pred_check_branch
          %352 = sbr.rel (%p350) target = $region56
        $region55: #{tpu_custom_call.1} parent=51 // pred_region
          %354 = dma.done %s346, 256
        $region56: #{tpu_custom_call.1} parent=51 // pred_fallthru
          _
        %s355 = sand.u32 %s45, 1
        %s356 = scalar_lea.sflag [#allocation5], %s355
        %s357 = sand.u32 %s45, 1
        %s358 = smul.addr %s357, 16
        %s359 = scalar_lea.vmem [#allocation4], %s358
        %p360 = pneg %p58
        %p361 = pneg %p55
        %p362 = pneg %p79
        %p363 = pneg %p76
        %p364 = pneg %p100
        %p365 = pneg %p97
        %p366 = scmp.lt.s32.totalorder %s30, 0
        %s367 = scalar_select %p366, %s30, 0
        %s368 = smul.addr %s367, 4
        %s369 = scalar_lea.vmem %s3, %s368
        %p370 = pneg %p126
        %p371 = pneg %p123
        %p372 = scmp.lt.s32.totalorder %s30, 0
        %s373 = scalar_select %p372, %s30, 0
        %s374 = smul.addr %s373, 4
        %s375 = scalar_lea.vmem %s4, %s374
        %p376 = pneg %p152
        %p377 = pneg %p149
        %p378 = scmp.lt.s32.totalorder %s30, 0
        %s379 = scalar_select %p378, %s30, 0
        %s380 = smul.addr %s379, 4
        %s381 = scalar_lea.vmem %s5, %s380
        %p382 = pneg %p178
        %p383 = pneg %p175
        %p384 = scmp.lt.s32.totalorder %s30, 0
        %s385 = scalar_select %p384, %s30, 0
        %s386 = smul.addr %s385, 4
        %s387 = scalar_lea.vmem %s6, %s386
        %p388 = pneg %p204
        %p389 = pneg %p201
        %p390 = scmp.lt.s32.totalorder %s30, 0
        %s391 = scalar_select %p390, %s30, 0
        %s392 = smul.addr %s391, 8
        %s393 = scalar_lea.vmem %s7, %s392
        %p394 = pneg %p230
        %p395 = pneg %p227
        %p396 = pneg %p258
        %p397 = pneg %p255
        %s398 = sand.u32 %s245, 1
        %s399 = scalar_lea.sflag [#allocation6], %s398
        %s400 = sand.u32 %s245, 1
        %s401 = smul.addr %s400, 16
        %s402 = scalar_lea.vmem [#allocation7], %s401
        %p403 = scmp.lt.s32.totalorder %s30, 0
        %s404 = scalar_select %p403, %s30, 0
        %s405 = smul.addr %s404, 4
        %s406 = scalar_lea.vmem %s3, %s405
        %p407 = scmp.lt.s32.totalorder %s30, 0
        %s408 = scalar_select %p407, %s30, 0
        %s409 = smul.addr %s408, 4
        %s410 = scalar_lea.vmem %s4, %s409
        %p411 = scmp.lt.s32.totalorder %s30, 0
        %s412 = scalar_select %p411, %s30, 0
        %s413 = smul.addr %s412, 4
        %s414 = scalar_lea.vmem %s5, %s413
        %p415 = scmp.lt.s32.totalorder %s30, 0
        %s416 = scalar_select %p415, %s30, 0
        %s417 = smul.addr %s416, 4
        %s418 = scalar_lea.vmem %s6, %s417
        %p419 = scmp.lt.s32.totalorder %s30, 0
        %s420 = scalar_select %p419, %s30, 0
        %s421 = smul.addr %s420, 8
        %s422 = scalar_lea.vmem %s7, %s421
        %v424 = vld [vmem:[%s349] sm:$0xff]
        %v425 = vld [vmem:[%s349 + $0x8] sm:$0xff]
        %v426 = vpack.c.bf16 %v424, %v424
        %v427 = vpack.c.bf16 %v425, %v425
        %v428 = vld [vmem:[%s1] sm:$0xf]
        %v429 = vld [vmem:[%s2] sm:$0x1]
        %v431 = vperm.slane %v429, 0
        %433 = vxpose.binary.xlu0.c.b16.start [1/16] %v427, %v426, 128
        %434 = vxpose.binary.xlu0.c.b16.cont [2/16] 0, 0, 128
        %435 = vxpose.binary.xlu0.c.b16.cont [3/16] 0, 0, 128
        %436 = vxpose.binary.xlu0.c.b16.cont [4/16] 0, 0, 128
        %437 = vxpose.binary.xlu0.c.b16.cont [5/16] 0, 0, 128
        %438 = vxpose.binary.xlu0.c.b16.cont [6/16] 0, 0, 128
        %439 = vxpose.binary.xlu0.c.b16.cont [7/16] 0, 0, 128
        %440 = vxpose.binary.xlu0.c.b16.end [8/16] 0, 0, 128
        %v441 = vpop.trf.xlu0
        %v442 = vpop.trf.xlu0
        %v443 = vpop.trf.xlu0
        %v444 = vpop.trf.xlu0
        %v445 = vpop.trf.xlu0
        %v446 = vpop.trf.xlu0
        %v447 = vpop.trf.xlu0
        %v448 = vpop.trf.xlu0
        %v449 = vpop.trf.xlu0
        %v450 = vpop.trf.xlu0
        %v451 = vpop.trf.xlu0
        %v452 = vpop.trf.xlu0
        %v453 = vpop.trf.xlu0
        %v454 = vpop.trf.xlu0
        %v455 = vpop.trf.xlu0
        %v456 = vpop.trf.xlu0
        %vm457 = vcmask 64512
        %v459 = vsel %vm457, %v441, 0
        %v462 = vsel %vm457, %v443, 0
        %v465 = vsel %vm457, %v445, 0
        %v468 = vsel %vm457, %v447, 0
        %v471 = vsel %vm457, %v449, 0
        %v474 = vsel %vm457, %v451, 0
        %v477 = vsel %vm457, %v453, 0
        %v480 = vsel %vm457, %v455, 0
        %v483 = vsel %vm457, %v442, 0
        %v486 = vsel %vm457, %v444, 0
        %v489 = vsel %vm457, %v446, 0
        %v492 = vsel %vm457, %v448, 0
        %v495 = vsel %vm457, %v450, 0
        %v498 = vsel %vm457, %v452, 0
        %v501 = vsel %vm457, %v454, 0
        %v504 = vsel %vm457, %v456, 0
        %vm506 = vcmask 1043456
        %v508 = vsel %vm506, %v428, 0
        %510 = vmatpush.bf16.msra.mxu0 0
        %511 = vmatpush.bf16.msra.mxu0 0
        %512 = vmatpush.bf16.msra.mxu0 0
        %513 = vmatpush.bf16.msra.mxu0 0
        %514 = vmatpush.bf16.msra.mxu0 0
        %515 = vmatpush.bf16.msra.mxu0 0
        %516 = vmatpush.bf16.msra.mxu0 0
        %517 = vmatpush.bf16.msra.mxu0 %v508
        %518 = vmatmul.bf16.gmra.mxu0 %v459
        %v519 = vpop.f32.mrf.mxu0
        %v520 = vadd.f32 %v431, %v519
        %v521 = vpop.f32.mrf.mxu0
        %v522 = vadd.f32 %v431, %v521
        %523 = vmatmul.bf16.gmra.mxu0 %v462
        %v524 = vpop.f32.mrf.mxu0
        %v525 = vadd.f32 %v431, %v524
        %v526 = vpop.f32.mrf.mxu0
        %v527 = vadd.f32 %v431, %v526
        %528 = vmatmul.bf16.gmra.mxu0 %v465
        %v529 = vpop.f32.mrf.mxu0
        %v530 = vadd.f32 %v431, %v529
        %v531 = vpop.f32.mrf.mxu0
        %v532 = vadd.f32 %v431, %v531
        %533 = vmatmul.bf16.gmra.mxu0 %v468
        %v534 = vpop.f32.mrf.mxu0
        %v535 = vadd.f32 %v431, %v534
        %v536 = vpop.f32.mrf.mxu0
        %v537 = vadd.f32 %v431, %v536
        %538 = vmatmul.bf16.gmra.mxu0 %v471
        %v539 = vpop.f32.mrf.mxu0
        %v540 = vadd.f32 %v431, %v539
        %v541 = vpop.f32.mrf.mxu0
        %v542 = vadd.f32 %v431, %v541
        %543 = vmatmul.bf16.gmra.mxu0 %v474
        %v544 = vpop.f32.mrf.mxu0
        %v545 = vadd.f32 %v431, %v544
        %v546 = vpop.f32.mrf.mxu0
        %v547 = vadd.f32 %v431, %v546
        %548 = vmatmul.bf16.gmra.mxu0 %v477
        %v549 = vpop.f32.mrf.mxu0
        %v550 = vadd.f32 %v431, %v549
        %v551 = vpop.f32.mrf.mxu0
        %v552 = vadd.f32 %v431, %v551
        %553 = vmatmul.bf16.gmra.mxu0 %v480
        %v554 = vpop.f32.mrf.mxu0
        %v555 = vadd.f32 %v431, %v554
        %v556 = vpop.f32.mrf.mxu0
        %v557 = vadd.f32 %v431, %v556
        %558 = vmatmul.bf16.gmra.mxu0 %v483
        %v559 = vpop.f32.mrf.mxu0
        %v560 = vadd.f32 %v431, %v559
        %v561 = vpop.f32.mrf.mxu0
        %v562 = vadd.f32 %v431, %v561
        %563 = vmatmul.bf16.gmra.mxu0 %v486
        %v564 = vpop.f32.mrf.mxu0
        %v565 = vadd.f32 %v431, %v564
        %v566 = vpop.f32.mrf.mxu0
        %v567 = vadd.f32 %v431, %v566
        %568 = vmatmul.bf16.gmra.mxu0 %v489
        %v569 = vpop.f32.mrf.mxu0
        %v570 = vadd.f32 %v431, %v569
        %v571 = vpop.f32.mrf.mxu0
        %v572 = vadd.f32 %v431, %v571
        %573 = vmatmul.bf16.gmra.mxu0 %v492
        %v574 = vpop.f32.mrf.mxu0
        %v575 = vadd.f32 %v431, %v574
        %v576 = vpop.f32.mrf.mxu0
        %v577 = vadd.f32 %v431, %v576
        %578 = vmatmul.bf16.gmra.mxu0 %v495
        %v579 = vpop.f32.mrf.mxu0
        %v580 = vadd.f32 %v431, %v579
        %v581 = vpop.f32.mrf.mxu0
        %v582 = vadd.f32 %v431, %v581
        %583 = vmatmul.bf16.gmra.mxu0 %v498
        %v584 = vpop.f32.mrf.mxu0
        %v585 = vadd.f32 %v431, %v584
        %v586 = vpop.f32.mrf.mxu0
        %v587 = vadd.f32 %v431, %v586
        %588 = vmatmul.bf16.gmra.mxu0 %v501
        %v589 = vpop.f32.mrf.mxu0
        %v590 = vadd.f32 %v431, %v589
        %v591 = vpop.f32.mrf.mxu0
        %v592 = vadd.f32 %v431, %v591
        %593 = vmatmul.bf16.gmra.mxu0 %v504
        %v594 = vpop.f32.mrf.mxu0
        %v595 = vadd.f32 %v431, %v594
        %v596 = vpop.f32.mrf.mxu0
        %v597 = vadd.f32 %v431, %v596
        %598 = vdwg.mxu0
        %v599 = vxor.u32 %v520, 2147483648
        %v600 = vxor.u32 %v522, 2147483648
        %v601 = vxor.u32 %v525, 2147483648
        %v602 = vxor.u32 %v527, 2147483648
        %v603 = vxor.u32 %v530, 2147483648
        %v604 = vxor.u32 %v532, 2147483648
        %v605 = vxor.u32 %v535, 2147483648
        %v606 = vxor.u32 %v537, 2147483648
        %v607 = vxor.u32 %v540, 2147483648
        %v608 = vxor.u32 %v542, 2147483648
        %v609 = vxor.u32 %v545, 2147483648
        %v610 = vxor.u32 %v547, 2147483648
        %v611 = vxor.u32 %v550, 2147483648
        %v612 = vxor.u32 %v552, 2147483648
        %v613 = vxor.u32 %v555, 2147483648
        %v614 = vxor.u32 %v557, 2147483648
        %v615 = vxor.u32 %v560, 2147483648
        %v616 = vxor.u32 %v562, 2147483648
        %v617 = vxor.u32 %v565, 2147483648
        %v618 = vxor.u32 %v567, 2147483648
        %v619 = vxor.u32 %v570, 2147483648
        %v620 = vxor.u32 %v572, 2147483648
        %v621 = vxor.u32 %v575, 2147483648
        %v622 = vxor.u32 %v577, 2147483648
        %v623 = vxor.u32 %v580, 2147483648
        %v624 = vxor.u32 %v582, 2147483648
        %v625 = vxor.u32 %v585, 2147483648
        %v626 = vxor.u32 %v587, 2147483648
        %v627 = vxor.u32 %v590, 2147483648
        %v628 = vxor.u32 %v592, 2147483648
        %v629 = vxor.u32 %v595, 2147483648
        %v630 = vxor.u32 %v597, 2147483648
        %v631 = vmul.f32 %v599, 1.442695
        %v632 = vpow.pop %v631
        %v633 = vmul.f32 %v600, 1.442695
        %v634 = vpow.pop %v633
        %v635 = vmul.f32 %v601, 1.442695
        %v636 = vpow.pop %v635
        %v637 = vmul.f32 %v602, 1.442695
        %v638 = vpow.pop %v637
        %v639 = vmul.f32 %v603, 1.442695
        %v640 = vpow.pop %v639
        %v641 = vmul.f32 %v604, 1.442695
        %v642 = vpow.pop %v641
        %v643 = vmul.f32 %v605, 1.442695
        %v644 = vpow.pop %v643
        %v645 = vmul.f32 %v606, 1.442695
        %v646 = vpow.pop %v645
        %v647 = vmul.f32 %v607, 1.442695
        %v648 = vpow.pop %v647
        %v649 = vmul.f32 %v608, 1.442695
        %v650 = vpow.pop %v649
        %v651 = vmul.f32 %v609, 1.442695
        %v652 = vpow.pop %v651
        %v653 = vmul.f32 %v610, 1.442695
        %v654 = vpow.pop %v653
        %v655 = vmul.f32 %v611, 1.442695
        %v656 = vpow.pop %v655
        %v657 = vmul.f32 %v612, 1.442695
        %v658 = vpow.pop %v657
        %v659 = vmul.f32 %v613, 1.442695
        %v660 = vpow.pop %v659
        %v661 = vmul.f32 %v614, 1.442695
        %v662 = vpow.pop %v661
        %v663 = vmul.f32 %v615, 1.442695
        %v664 = vpow.pop %v663
        %v665 = vmul.f32 %v616, 1.442695
        %v666 = vpow.pop %v665
        %v667 = vmul.f32 %v617, 1.442695
        %v668 = vpow.pop %v667
        %v669 = vmul.f32 %v618, 1.442695
        %v670 = vpow.pop %v669
        %v671 = vmul.f32 %v619, 1.442695
        %v672 = vpow.pop %v671
        %v673 = vmul.f32 %v620, 1.442695
        %v674 = vpow.pop %v673
        %v675 = vmul.f32 %v621, 1.442695
        %v676 = vpow.pop %v675
        %v677 = vmul.f32 %v622, 1.442695
        %v678 = vpow.pop %v677
        %v679 = vmul.f32 %v623, 1.442695
        %v680 = vpow.pop %v679
        %v681 = vmul.f32 %v624, 1.442695
        %v682 = vpow.pop %v681
        %v683 = vmul.f32 %v625, 1.442695
        %v684 = vpow.pop %v683
        %v685 = vmul.f32 %v626, 1.442695
        %v686 = vpow.pop %v685
        %v687 = vmul.f32 %v627, 1.442695
        %v688 = vpow.pop %v687
        %v689 = vmul.f32 %v628, 1.442695
        %v690 = vpow.pop %v689
        %v691 = vmul.f32 %v629, 1.442695
        %v692 = vpow.pop %v691
        %v693 = vmul.f32 %v630, 1.442695
        %v694 = vpow.pop %v693
        %v695 = vadd.f32 %v632, 1.0
        %v696 = vadd.f32 %v634, 1.0
        %v697 = vadd.f32 %v636, 1.0
        %v698 = vadd.f32 %v638, 1.0
        %v699 = vadd.f32 %v640, 1.0
        %v700 = vadd.f32 %v642, 1.0
        %v701 = vadd.f32 %v644, 1.0
        %v702 = vadd.f32 %v646, 1.0
        %v703 = vadd.f32 %v648, 1.0
        %v704 = vadd.f32 %v650, 1.0
        %v705 = vadd.f32 %v652, 1.0
        %v706 = vadd.f32 %v654, 1.0
        %v707 = vadd.f32 %v656, 1.0
        %v708 = vadd.f32 %v658, 1.0
        %v709 = vadd.f32 %v660, 1.0
        %v710 = vadd.f32 %v662, 1.0
        %v711 = vadd.f32 %v664, 1.0
        %v712 = vadd.f32 %v666, 1.0
        %v713 = vadd.f32 %v668, 1.0
        %v714 = vadd.f32 %v670, 1.0
        %v715 = vadd.f32 %v672, 1.0
        %v716 = vadd.f32 %v674, 1.0
        %v717 = vadd.f32 %v676, 1.0
        %v718 = vadd.f32 %v678, 1.0
        %v719 = vadd.f32 %v680, 1.0
        %v720 = vadd.f32 %v682, 1.0
        %v721 = vadd.f32 %v684, 1.0
        %v722 = vadd.f32 %v686, 1.0
        %v723 = vadd.f32 %v688, 1.0
        %v724 = vadd.f32 %v690, 1.0
        %v725 = vadd.f32 %v692, 1.0
        %v726 = vadd.f32 %v694, 1.0
        %v727 = vrcp.pop %v695
        %v728 = vmul.f32 %v695, %v727
        %v729 = vsub.f32 1.0, %v728
        %v730 = vmul.f32 %v727, %v729
        %v731 = vadd.f32 %v727, %v730
        %vm732 = vweird.f32 %v695
        %vm733 = vweird.f32 %v727
        %vm734 = vmor %vm732, %vm733
        %v735 = vsel %vm734, %v727, %v731
        %v736 = vand.u32 2147483647, %v695
        %vm737 = vcmp.eq.f32.partialorder %v736, 8.507059e+37
        %v738 = vand.u32 %v695, 2147483648
        %v739 = vor.u32 1.1754944e-38, %v738
        %v740 = vsel %vm737, %v739, %v735
        %v741 = vmul.f32 1.0, %v740
        %v742 = vrcp.pop %v696
        %v743 = vmul.f32 %v696, %v742
        %v744 = vsub.f32 1.0, %v743
        %v745 = vmul.f32 %v742, %v744
        %v746 = vadd.f32 %v742, %v745
        %vm747 = vweird.f32 %v696
        %vm748 = vweird.f32 %v742
        %vm749 = vmor %vm747, %vm748
        %v750 = vsel %vm749, %v742, %v746
        %v751 = vand.u32 2147483647, %v696
        %vm752 = vcmp.eq.f32.partialorder %v751, 8.507059e+37
        %v753 = vand.u32 %v696, 2147483648
        %v754 = vor.u32 1.1754944e-38, %v753
        %v755 = vsel %vm752, %v754, %v750
        %v756 = vmul.f32 1.0, %v755
        %v757 = vrcp.pop %v697
        %v758 = vmul.f32 %v697, %v757
        %v759 = vsub.f32 1.0, %v758
        %v760 = vmul.f32 %v757, %v759
        %v761 = vadd.f32 %v757, %v760
        %vm762 = vweird.f32 %v697
        %vm763 = vweird.f32 %v757
        %vm764 = vmor %vm762, %vm763
        %v765 = vsel %vm764, %v757, %v761
        %v766 = vand.u32 2147483647, %v697
        %vm767 = vcmp.eq.f32.partialorder %v766, 8.507059e+37
        %v768 = vand.u32 %v697, 2147483648
        %v769 = vor.u32 1.1754944e-38, %v768
        %v770 = vsel %vm767, %v769, %v765
        %v771 = vmul.f32 1.0, %v770
        %v772 = vrcp.pop %v698
        %v773 = vmul.f32 %v698, %v772
        %v774 = vsub.f32 1.0, %v773
        %v775 = vmul.f32 %v772, %v774
        %v776 = vadd.f32 %v772, %v775
        %vm777 = vweird.f32 %v698
        %vm778 = vweird.f32 %v772
        %vm779 = vmor %vm777, %vm778
        %v780 = vsel %vm779, %v772, %v776
        %v781 = vand.u32 2147483647, %v698
        %vm782 = vcmp.eq.f32.partialorder %v781, 8.507059e+37
        %v783 = vand.u32 %v698, 2147483648
        %v784 = vor.u32 1.1754944e-38, %v783
        %v785 = vsel %vm782, %v784, %v780
        %v786 = vmul.f32 1.0, %v785
        %v787 = vrcp.pop %v699
        %v788 = vmul.f32 %v699, %v787
        %v789 = vsub.f32 1.0, %v788
        %v790 = vmul.f32 %v787, %v789
        %v791 = vadd.f32 %v787, %v790
        %vm792 = vweird.f32 %v699
        %vm793 = vweird.f32 %v787
        %vm794 = vmor %vm792, %vm793
        %v795 = vsel %vm794, %v787, %v791
        %v796 = vand.u32 2147483647, %v699
        %vm797 = vcmp.eq.f32.partialorder %v796, 8.507059e+37
        %v798 = vand.u32 %v699, 2147483648
        %v799 = vor.u32 1.1754944e-38, %v798
        %v800 = vsel %vm797, %v799, %v795
        %v801 = vmul.f32 1.0, %v800
        %v802 = vrcp.pop %v700
        %v803 = vmul.f32 %v700, %v802
        %v804 = vsub.f32 1.0, %v803
        %v805 = vmul.f32 %v802, %v804
        %v806 = vadd.f32 %v802, %v805
        %vm807 = vweird.f32 %v700
        %vm808 = vweird.f32 %v802
        %vm809 = vmor %vm807, %vm808
        %v810 = vsel %vm809, %v802, %v806
        %v811 = vand.u32 2147483647, %v700
        %vm812 = vcmp.eq.f32.partialorder %v811, 8.507059e+37
        %v813 = vand.u32 %v700, 2147483648
        %v814 = vor.u32 1.1754944e-38, %v813
        %v815 = vsel %vm812, %v814, %v810
        %v816 = vmul.f32 1.0, %v815
        %v817 = vrcp.pop %v701
        %v818 = vmul.f32 %v701, %v817
        %v819 = vsub.f32 1.0, %v818
        %v820 = vmul.f32 %v817, %v819
        %v821 = vadd.f32 %v817, %v820
        %vm822 = vweird.f32 %v701
        %vm823 = vweird.f32 %v817
        %vm824 = vmor %vm822, %vm823
        %v825 = vsel %vm824, %v817, %v821
        %v826 = vand.u32 2147483647, %v701
        %vm827 = vcmp.eq.f32.partialorder %v826, 8.507059e+37
        %v828 = vand.u32 %v701, 2147483648
        %v829 = vor.u32 1.1754944e-38, %v828
        %v830 = vsel %vm827, %v829, %v825
        %v831 = vmul.f32 1.0, %v830
        %v832 = vrcp.pop %v702
        %v833 = vmul.f32 %v702, %v832
        %v834 = vsub.f32 1.0, %v833
        %v835 = vmul.f32 %v832, %v834
        %v836 = vadd.f32 %v832, %v835
        %vm837 = vweird.f32 %v702
        %vm838 = vweird.f32 %v832
        %vm839 = vmor %vm837, %vm838
        %v840 = vsel %vm839, %v832, %v836
        %v841 = vand.u32 2147483647, %v702
        %vm842 = vcmp.eq.f32.partialorder %v841, 8.507059e+37
        %v843 = vand.u32 %v702, 2147483648
        %v844 = vor.u32 1.1754944e-38, %v843
        %v845 = vsel %vm842, %v844, %v840
        %v846 = vmul.f32 1.0, %v845
        %v847 = vrcp.pop %v703
        %v848 = vmul.f32 %v703, %v847
        %v849 = vsub.f32 1.0, %v848
        %v850 = vmul.f32 %v847, %v849
        %v851 = vadd.f32 %v847, %v850
        %vm852 = vweird.f32 %v703
        %vm853 = vweird.f32 %v847
        %vm854 = vmor %vm852, %vm853
        %v855 = vsel %vm854, %v847, %v851
        %v856 = vand.u32 2147483647, %v703
        %vm857 = vcmp.eq.f32.partialorder %v856, 8.507059e+37
        %v858 = vand.u32 %v703, 2147483648
        %v859 = vor.u32 1.1754944e-38, %v858
        %v860 = vsel %vm857, %v859, %v855
        %v861 = vmul.f32 1.0, %v860
        %v862 = vrcp.pop %v704
        %v863 = vmul.f32 %v704, %v862
        %v864 = vsub.f32 1.0, %v863
        %v865 = vmul.f32 %v862, %v864
        %v866 = vadd.f32 %v862, %v865
        %vm867 = vweird.f32 %v704
        %vm868 = vweird.f32 %v862
        %vm869 = vmor %vm867, %vm868
        %v870 = vsel %vm869, %v862, %v866
        %v871 = vand.u32 2147483647, %v704
        %vm872 = vcmp.eq.f32.partialorder %v871, 8.507059e+37
        %v873 = vand.u32 %v704, 2147483648
        %v874 = vor.u32 1.1754944e-38, %v873
        %v875 = vsel %vm872, %v874, %v870
        %v876 = vmul.f32 1.0, %v875
        %v877 = vrcp.pop %v705
        %v878 = vmul.f32 %v705, %v877
        %v879 = vsub.f32 1.0, %v878
        %v880 = vmul.f32 %v877, %v879
        %v881 = vadd.f32 %v877, %v880
        %vm882 = vweird.f32 %v705
        %vm883 = vweird.f32 %v877
        %vm884 = vmor %vm882, %vm883
        %v885 = vsel %vm884, %v877, %v881
        %v886 = vand.u32 2147483647, %v705
        %vm887 = vcmp.eq.f32.partialorder %v886, 8.507059e+37
        %v888 = vand.u32 %v705, 2147483648
        %v889 = vor.u32 1.1754944e-38, %v888
        %v890 = vsel %vm887, %v889, %v885
        %v891 = vmul.f32 1.0, %v890
        %v892 = vrcp.pop %v706
        %v893 = vmul.f32 %v706, %v892
        %v894 = vsub.f32 1.0, %v893
        %v895 = vmul.f32 %v892, %v894
        %v896 = vadd.f32 %v892, %v895
        %vm897 = vweird.f32 %v706
        %vm898 = vweird.f32 %v892
        %vm899 = vmor %vm897, %vm898
        %v900 = vsel %vm899, %v892, %v896
        %v901 = vand.u32 2147483647, %v706
        %vm902 = vcmp.eq.f32.partialorder %v901, 8.507059e+37
        %v903 = vand.u32 %v706, 2147483648
        %v904 = vor.u32 1.1754944e-38, %v903
        %v905 = vsel %vm902, %v904, %v900
        %v906 = vmul.f32 1.0, %v905
        %v907 = vrcp.pop %v707
        %v908 = vmul.f32 %v707, %v907
        %v909 = vsub.f32 1.0, %v908
        %v910 = vmul.f32 %v907, %v909
        %v911 = vadd.f32 %v907, %v910
        %vm912 = vweird.f32 %v707
        %vm913 = vweird.f32 %v907
        %vm914 = vmor %vm912, %vm913
        %v915 = vsel %vm914, %v907, %v911
        %v916 = vand.u32 2147483647, %v707
        %vm917 = vcmp.eq.f32.partialorder %v916, 8.507059e+37
        %v918 = vand.u32 %v707, 2147483648
        %v919 = vor.u32 1.1754944e-38, %v918
        %v920 = vsel %vm917, %v919, %v915
        %v921 = vmul.f32 1.0, %v920
        %v922 = vrcp.pop %v708
        %v923 = vmul.f32 %v708, %v922
        %v924 = vsub.f32 1.0, %v923
        %v925 = vmul.f32 %v922, %v924
        %v926 = vadd.f32 %v922, %v925
        %vm927 = vweird.f32 %v708
        %vm928 = vweird.f32 %v922
        %vm929 = vmor %vm927, %vm928
        %v930 = vsel %vm929, %v922, %v926
        %v931 = vand.u32 2147483647, %v708
        %vm932 = vcmp.eq.f32.partialorder %v931, 8.507059e+37
        %v933 = vand.u32 %v708, 2147483648
        %v934 = vor.u32 1.1754944e-38, %v933
        %v935 = vsel %vm932, %v934, %v930
        %v936 = vmul.f32 1.0, %v935
        %v937 = vrcp.pop %v709
        %v938 = vmul.f32 %v709, %v937
        %v939 = vsub.f32 1.0, %v938
        %v940 = vmul.f32 %v937, %v939
        %v941 = vadd.f32 %v937, %v940
        %vm942 = vweird.f32 %v709
        %vm943 = vweird.f32 %v937
        %vm944 = vmor %vm942, %vm943
        %v945 = vsel %vm944, %v937, %v941
        %v946 = vand.u32 2147483647, %v709
        %vm947 = vcmp.eq.f32.partialorder %v946, 8.507059e+37
        %v948 = vand.u32 %v709, 2147483648
        %v949 = vor.u32 1.1754944e-38, %v948
        %v950 = vsel %vm947, %v949, %v945
        %v951 = vmul.f32 1.0, %v950
        %v952 = vrcp.pop %v710
        %v953 = vmul.f32 %v710, %v952
        %v954 = vsub.f32 1.0, %v953
        %v955 = vmul.f32 %v952, %v954
        %v956 = vadd.f32 %v952, %v955
        %vm957 = vweird.f32 %v710
        %vm958 = vweird.f32 %v952
        %vm959 = vmor %vm957, %vm958
        %v960 = vsel %vm959, %v952, %v956
        %v961 = vand.u32 2147483647, %v710
        %vm962 = vcmp.eq.f32.partialorder %v961, 8.507059e+37
        %v963 = vand.u32 %v710, 2147483648
        %v964 = vor.u32 1.1754944e-38, %v963
        %v965 = vsel %vm962, %v964, %v960
        %v966 = vmul.f32 1.0, %v965
        %v967 = vrcp.pop %v711
        %v968 = vmul.f32 %v711, %v967
        %v969 = vsub.f32 1.0, %v968
        %v970 = vmul.f32 %v967, %v969
        %v971 = vadd.f32 %v967, %v970
        %vm972 = vweird.f32 %v711
        %vm973 = vweird.f32 %v967
        %vm974 = vmor %vm972, %vm973
        %v975 = vsel %vm974, %v967, %v971
        %v976 = vand.u32 2147483647, %v711
        %vm977 = vcmp.eq.f32.partialorder %v976, 8.507059e+37
        %v978 = vand.u32 %v711, 2147483648
        %v979 = vor.u32 1.1754944e-38, %v978
        %v980 = vsel %vm977, %v979, %v975
        %v981 = vmul.f32 1.0, %v980
        %v982 = vrcp.pop %v712
        %v983 = vmul.f32 %v712, %v982
        %v984 = vsub.f32 1.0, %v983
        %v985 = vmul.f32 %v982, %v984
        %v986 = vadd.f32 %v982, %v985
        %vm987 = vweird.f32 %v712
        %vm988 = vweird.f32 %v982
        %vm989 = vmor %vm987, %vm988
        %v990 = vsel %vm989, %v982, %v986
        %v991 = vand.u32 2147483647, %v712
        %vm992 = vcmp.eq.f32.partialorder %v991, 8.507059e+37
        %v993 = vand.u32 %v712, 2147483648
        %v994 = vor.u32 1.1754944e-38, %v993
        %v995 = vsel %vm992, %v994, %v990
        %v996 = vmul.f32 1.0, %v995
        %v997 = vrcp.pop %v713
        %v998 = vmul.f32 %v713, %v997
        %v999 = vsub.f32 1.0, %v998
        %v1000 = vmul.f32 %v997, %v999
        %v1001 = vadd.f32 %v997, %v1000
        %vm1002 = vweird.f32 %v713
        %vm1003 = vweird.f32 %v997
        %vm1004 = vmor %vm1002, %vm1003
        %v1005 = vsel %vm1004, %v997, %v1001
        %v1006 = vand.u32 2147483647, %v713
        %vm1007 = vcmp.eq.f32.partialorder %v1006, 8.507059e+37
        %v1008 = vand.u32 %v713, 2147483648
        %v1009 = vor.u32 1.1754944e-38, %v1008
        %v1010 = vsel %vm1007, %v1009, %v1005
        %v1011 = vmul.f32 1.0, %v1010
        %v1012 = vrcp.pop %v714
        %v1013 = vmul.f32 %v714, %v1012
        %v1014 = vsub.f32 1.0, %v1013
        %v1015 = vmul.f32 %v1012, %v1014
        %v1016 = vadd.f32 %v1012, %v1015
        %vm1017 = vweird.f32 %v714
        %vm1018 = vweird.f32 %v1012
        %vm1019 = vmor %vm1017, %vm1018
        %v1020 = vsel %vm1019, %v1012, %v1016
        %v1021 = vand.u32 2147483647, %v714
        %vm1022 = vcmp.eq.f32.partialorder %v1021, 8.507059e+37
        %v1023 = vand.u32 %v714, 2147483648
        %v1024 = vor.u32 1.1754944e-38, %v1023
        %v1025 = vsel %vm1022, %v1024, %v1020
        %v1026 = vmul.f32 1.0, %v1025
        %v1027 = vrcp.pop %v715
        %v1028 = vmul.f32 %v715, %v1027
        %v1029 = vsub.f32 1.0, %v1028
        %v1030 = vmul.f32 %v1027, %v1029
        %v1031 = vadd.f32 %v1027, %v1030
        %vm1032 = vweird.f32 %v715
        %vm1033 = vweird.f32 %v1027
        %vm1034 = vmor %vm1032, %vm1033
        %v1035 = vsel %vm1034, %v1027, %v1031
        %v1036 = vand.u32 2147483647, %v715
        %vm1037 = vcmp.eq.f32.partialorder %v1036, 8.507059e+37
        %v1038 = vand.u32 %v715, 2147483648
        %v1039 = vor.u32 1.1754944e-38, %v1038
        %v1040 = vsel %vm1037, %v1039, %v1035
        %v1041 = vmul.f32 1.0, %v1040
        %v1042 = vrcp.pop %v716
        %v1043 = vmul.f32 %v716, %v1042
        %v1044 = vsub.f32 1.0, %v1043
        %v1045 = vmul.f32 %v1042, %v1044
        %v1046 = vadd.f32 %v1042, %v1045
        %vm1047 = vweird.f32 %v716
        %vm1048 = vweird.f32 %v1042
        %vm1049 = vmor %vm1047, %vm1048
        %v1050 = vsel %vm1049, %v1042, %v1046
        %v1051 = vand.u32 2147483647, %v716
        %vm1052 = vcmp.eq.f32.partialorder %v1051, 8.507059e+37
        %v1053 = vand.u32 %v716, 2147483648
        %v1054 = vor.u32 1.1754944e-38, %v1053
        %v1055 = vsel %vm1052, %v1054, %v1050
        %v1056 = vmul.f32 1.0, %v1055
        %v1057 = vrcp.pop %v717
        %v1058 = vmul.f32 %v717, %v1057
        %v1059 = vsub.f32 1.0, %v1058
        %v1060 = vmul.f32 %v1057, %v1059
        %v1061 = vadd.f32 %v1057, %v1060
        %vm1062 = vweird.f32 %v717
        %vm1063 = vweird.f32 %v1057
        %vm1064 = vmor %vm1062, %vm1063
        %v1065 = vsel %vm1064, %v1057, %v1061
        %v1066 = vand.u32 2147483647, %v717
        %vm1067 = vcmp.eq.f32.partialorder %v1066, 8.507059e+37
        %v1068 = vand.u32 %v717, 2147483648
        %v1069 = vor.u32 1.1754944e-38, %v1068
        %v1070 = vsel %vm1067, %v1069, %v1065
        %v1071 = vmul.f32 1.0, %v1070
        %v1072 = vrcp.pop %v718
        %v1073 = vmul.f32 %v718, %v1072
        %v1074 = vsub.f32 1.0, %v1073
        %v1075 = vmul.f32 %v1072, %v1074
        %v1076 = vadd.f32 %v1072, %v1075
        %vm1077 = vweird.f32 %v718
        %vm1078 = vweird.f32 %v1072
        %vm1079 = vmor %vm1077, %vm1078
        %v1080 = vsel %vm1079, %v1072, %v1076
        %v1081 = vand.u32 2147483647, %v718
        %vm1082 = vcmp.eq.f32.partialorder %v1081, 8.507059e+37
        %v1083 = vand.u32 %v718, 2147483648
        %v1084 = vor.u32 1.1754944e-38, %v1083
        %v1085 = vsel %vm1082, %v1084, %v1080
        %v1086 = vmul.f32 1.0, %v1085
        %v1087 = vrcp.pop %v719
        %v1088 = vmul.f32 %v719, %v1087
        %v1089 = vsub.f32 1.0, %v1088
        %v1090 = vmul.f32 %v1087, %v1089
        %v1091 = vadd.f32 %v1087, %v1090
        %vm1092 = vweird.f32 %v719
        %vm1093 = vweird.f32 %v1087
        %vm1094 = vmor %vm1092, %vm1093
        %v1095 = vsel %vm1094, %v1087, %v1091
        %v1096 = vand.u32 2147483647, %v719
        %vm1097 = vcmp.eq.f32.partialorder %v1096, 8.507059e+37
        %v1098 = vand.u32 %v719, 2147483648
        %v1099 = vor.u32 1.1754944e-38, %v1098
        %v1100 = vsel %vm1097, %v1099, %v1095
        %v1101 = vmul.f32 1.0, %v1100
        %v1102 = vrcp.pop %v720
        %v1103 = vmul.f32 %v720, %v1102
        %v1104 = vsub.f32 1.0, %v1103
        %v1105 = vmul.f32 %v1102, %v1104
        %v1106 = vadd.f32 %v1102, %v1105
        %vm1107 = vweird.f32 %v720
        %vm1108 = vweird.f32 %v1102
        %vm1109 = vmor %vm1107, %vm1108
        %v1110 = vsel %vm1109, %v1102, %v1106
        %v1111 = vand.u32 2147483647, %v720
        %vm1112 = vcmp.eq.f32.partialorder %v1111, 8.507059e+37
        %v1113 = vand.u32 %v720, 2147483648
        %v1114 = vor.u32 1.1754944e-38, %v1113
        %v1115 = vsel %vm1112, %v1114, %v1110
        %v1116 = vmul.f32 1.0, %v1115
        %v1117 = vrcp.pop %v721
        %v1118 = vmul.f32 %v721, %v1117
        %v1119 = vsub.f32 1.0, %v1118
        %v1120 = vmul.f32 %v1117, %v1119
        %v1121 = vadd.f32 %v1117, %v1120
        %vm1122 = vweird.f32 %v721
        %vm1123 = vweird.f32 %v1117
        %vm1124 = vmor %vm1122, %vm1123
        %v1125 = vsel %vm1124, %v1117, %v1121
        %v1126 = vand.u32 2147483647, %v721
        %vm1127 = vcmp.eq.f32.partialorder %v1126, 8.507059e+37
        %v1128 = vand.u32 %v721, 2147483648
        %v1129 = vor.u32 1.1754944e-38, %v1128
        %v1130 = vsel %vm1127, %v1129, %v1125
        %v1131 = vmul.f32 1.0, %v1130
        %v1132 = vrcp.pop %v722
        %v1133 = vmul.f32 %v722, %v1132
        %v1134 = vsub.f32 1.0, %v1133
        %v1135 = vmul.f32 %v1132, %v1134
        %v1136 = vadd.f32 %v1132, %v1135
        %vm1137 = vweird.f32 %v722
        %vm1138 = vweird.f32 %v1132
        %vm1139 = vmor %vm1137, %vm1138
        %v1140 = vsel %vm1139, %v1132, %v1136
        %v1141 = vand.u32 2147483647, %v722
        %vm1142 = vcmp.eq.f32.partialorder %v1141, 8.507059e+37
        %v1143 = vand.u32 %v722, 2147483648
        %v1144 = vor.u32 1.1754944e-38, %v1143
        %v1145 = vsel %vm1142, %v1144, %v1140
        %v1146 = vmul.f32 1.0, %v1145
        %v1147 = vrcp.pop %v723
        %v1148 = vmul.f32 %v723, %v1147
        %v1149 = vsub.f32 1.0, %v1148
        %v1150 = vmul.f32 %v1147, %v1149
        %v1151 = vadd.f32 %v1147, %v1150
        %vm1152 = vweird.f32 %v723
        %vm1153 = vweird.f32 %v1147
        %vm1154 = vmor %vm1152, %vm1153
        %v1155 = vsel %vm1154, %v1147, %v1151
        %v1156 = vand.u32 2147483647, %v723
        %vm1157 = vcmp.eq.f32.partialorder %v1156, 8.507059e+37
        %v1158 = vand.u32 %v723, 2147483648
        %v1159 = vor.u32 1.1754944e-38, %v1158
        %v1160 = vsel %vm1157, %v1159, %v1155
        %v1161 = vmul.f32 1.0, %v1160
        %v1162 = vrcp.pop %v724
        %v1163 = vmul.f32 %v724, %v1162
        %v1164 = vsub.f32 1.0, %v1163
        %v1165 = vmul.f32 %v1162, %v1164
        %v1166 = vadd.f32 %v1162, %v1165
        %vm1167 = vweird.f32 %v724
        %vm1168 = vweird.f32 %v1162
        %vm1169 = vmor %vm1167, %vm1168
        %v1170 = vsel %vm1169, %v1162, %v1166
        %v1171 = vand.u32 2147483647, %v724
        %vm1172 = vcmp.eq.f32.partialorder %v1171, 8.507059e+37
        %v1173 = vand.u32 %v724, 2147483648
        %v1174 = vor.u32 1.1754944e-38, %v1173
        %v1175 = vsel %vm1172, %v1174, %v1170
        %v1176 = vmul.f32 1.0, %v1175
        %v1177 = vrcp.pop %v725
        %v1178 = vmul.f32 %v725, %v1177
        %v1179 = vsub.f32 1.0, %v1178
        %v1180 = vmul.f32 %v1177, %v1179
        %v1181 = vadd.f32 %v1177, %v1180
        %vm1182 = vweird.f32 %v725
        %vm1183 = vweird.f32 %v1177
        %vm1184 = vmor %vm1182, %vm1183
        %v1185 = vsel %vm1184, %v1177, %v1181
        %v1186 = vand.u32 2147483647, %v725
        %vm1187 = vcmp.eq.f32.partialorder %v1186, 8.507059e+37
        %v1188 = vand.u32 %v725, 2147483648
        %v1189 = vor.u32 1.1754944e-38, %v1188
        %v1190 = vsel %vm1187, %v1189, %v1185
        %v1191 = vmul.f32 1.0, %v1190
        %v1192 = vrcp.pop %v726
        %v1193 = vmul.f32 %v726, %v1192
        %v1194 = vsub.f32 1.0, %v1193
        %v1195 = vmul.f32 %v1192, %v1194
        %v1196 = vadd.f32 %v1192, %v1195
        %vm1197 = vweird.f32 %v726
        %vm1198 = vweird.f32 %v1192
        %vm1199 = vmor %vm1197, %vm1198
        %v1200 = vsel %vm1199, %v1192, %v1196
        %v1201 = vand.u32 2147483647, %v726
        %vm1202 = vcmp.eq.f32.partialorder %v1201, 8.507059e+37
        %v1203 = vand.u32 %v726, 2147483648
        %v1204 = vor.u32 1.1754944e-38, %v1203
        %v1205 = vsel %vm1202, %v1204, %v1200
        %v1206 = vmul.f32 1.0, %v1205
        %v1207 = vmul.f32 %v520, %v741
        %v1208 = vmul.f32 %v522, %v756
        %v1209 = vmul.f32 %v525, %v771
        %v1210 = vmul.f32 %v527, %v786
        %v1211 = vmul.f32 %v530, %v801
        %v1212 = vmul.f32 %v532, %v816
        %v1213 = vmul.f32 %v535, %v831
        %v1214 = vmul.f32 %v537, %v846
        %v1215 = vmul.f32 %v540, %v861
        %v1216 = vmul.f32 %v542, %v876
        %v1217 = vmul.f32 %v545, %v891
        %v1218 = vmul.f32 %v547, %v906
        %v1219 = vmul.f32 %v550, %v921
        %v1220 = vmul.f32 %v552, %v936
        %v1221 = vmul.f32 %v555, %v951
        %v1222 = vmul.f32 %v557, %v966
        %v1223 = vmul.f32 %v560, %v981
        %v1224 = vmul.f32 %v562, %v996
        %v1225 = vmul.f32 %v565, %v1011
        %v1226 = vmul.f32 %v567, %v1026
        %v1227 = vmul.f32 %v570, %v1041
        %v1228 = vmul.f32 %v572, %v1056
        %v1229 = vmul.f32 %v575, %v1071
        %v1230 = vmul.f32 %v577, %v1086
        %v1231 = vmul.f32 %v580, %v1101
        %v1232 = vmul.f32 %v582, %v1116
        %v1233 = vmul.f32 %v585, %v1131
        %v1234 = vmul.f32 %v587, %v1146
        %v1235 = vmul.f32 %v590, %v1161
        %v1236 = vmul.f32 %v592, %v1176
        %v1237 = vmul.f32 %v595, %v1191
        %v1238 = vmul.f32 %v597, %v1206
        %vm1239 = vcmask 31744
        %1240 = vst.msk [vmem:[#allocation2] sm:$0xff] %vm1239, -inf
        %1241 = vst.msk [vmem:[#allocation2 + $0x8] sm:$0xff] %vm1239, -inf
        %1242 = vst.msk [vmem:[#allocation2 + $0x10] sm:$0xff] %vm1239, -inf
        %vm1243 = vcmask 25600
        %1244 = vst.msk [vmem:[#allocation2 + $0x18] sm:$0x3] %vm1243, -inf
        %1245 = vst.msk [vmem:[#allocation2 + $0x20] sm:$0xff] %vm1239, -inf
        %1246 = vst.msk [vmem:[#allocation2 + $0x28] sm:$0xff] %vm1239, -inf
        %1247 = vst.msk [vmem:[#allocation2 + $0x30] sm:$0xff] %vm1239, -inf
        %1248 = vst.msk [vmem:[#allocation2 + $0x38] sm:$0x3] %vm1243, -inf
        %s1249 = scalar_lea.vmem [#allocation2], 576
        %1250 = vst.msk [vmem:[%s1249] sm:$0xff] %vm1239, -inf
        %1251 = vst.msk [vmem:[%s1249 + $0x8] sm:$0xff] %vm1239, -inf
        %1252 = vst.msk [vmem:[%s1249 + $0x10] sm:$0xff] %vm1239, -inf
        %1253 = vst.msk [vmem:[%s1249 + $0x18] sm:$0x3] %vm1243, -inf
        %1254 = vst.msk [vmem:[%s1249 + $0x20] sm:$0xff] %vm1239, -inf
        %1255 = vst.msk [vmem:[%s1249 + $0x28] sm:$0xff] %vm1239, -inf
        %1256 = vst.msk [vmem:[%s1249 + $0x30] sm:$0xff] %vm1239, -inf
        %1257 = vst.msk [vmem:[%s1249 + $0x38] sm:$0x3] %vm1243, -inf
        %s1258 = scalar_lea.vmem [#allocation2], 64
        %1259 = vst.msk [vmem:[%s1258] sm:$0xff] %vm1239, -inf
        %1260 = vst.msk [vmem:[%s1258 + $0x20] sm:$0xff] %vm1239, -inf
        %1261 = vst.msk [vmem:[%s1258 + $0x40] sm:$0xff] %vm1239, -inf
        %1262 = vst.msk [vmem:[%s1258 + $0x60] sm:$0xff] %vm1239, -inf
        %1263 = vst.msk [vmem:[%s1258 + $0x80] sm:$0xff] %vm1239, -inf
        %1264 = vst.msk [vmem:[%s1258 + $0xa0] sm:$0xff] %vm1239, -inf
        %1265 = vst.msk [vmem:[%s1258 + $0xc0] sm:$0xff] %vm1239, -inf
        %1266 = vst.msk [vmem:[%s1258 + $0xe0] sm:$0xff] %vm1239, -inf
        %1267 = vst.msk [vmem:[%s1258 + $0x100] sm:$0xff] %vm1239, -inf
        %1268 = vst.msk [vmem:[%s1258 + $0x120] sm:$0xff] %vm1239, -inf
        %1269 = vst.msk [vmem:[%s1258 + $0x140] sm:$0xff] %vm1239, -inf
        %1270 = vst.msk [vmem:[%s1258 + $0x160] sm:$0xff] %vm1239, -inf
        %1271 = vst.msk [vmem:[%s1258 + $0x180] sm:$0xff] %vm1239, -inf
        %1272 = vst.msk [vmem:[%s1258 + $0x1a0] sm:$0xff] %vm1239, -inf
        %1273 = vst.msk [vmem:[%s1258 + $0x1c0] sm:$0xff] %vm1239, -inf
        %1274 = vst.msk [vmem:[%s1258 + $0x1e0] sm:$0xff] %vm1239, -inf
        %1275 = vst.msk [vmem:[%s1258 + $0x18] sm:$0x3] %vm1243, -inf
        %1276 = vst.msk [vmem:[%s1258 + $0x38] sm:$0x3] %vm1243, -inf
        %1277 = vst.msk [vmem:[%s1258 + $0x58] sm:$0x3] %vm1243, -inf
        %1278 = vst.msk [vmem:[%s1258 + $0x78] sm:$0x3] %vm1243, -inf
        %1279 = vst.msk [vmem:[%s1258 + $0x98] sm:$0x3] %vm1243, -inf
        %1280 = vst.msk [vmem:[%s1258 + $0xb8] sm:$0x3] %vm1243, -inf
        %1281 = vst.msk [vmem:[%s1258 + $0xd8] sm:$0x3] %vm1243, -inf
        %1282 = vst.msk [vmem:[%s1258 + $0xf8] sm:$0x3] %vm1243, -inf
        %1283 = vst.msk [vmem:[%s1258 + $0x118] sm:$0x3] %vm1243, -inf
        %1284 = vst.msk [vmem:[%s1258 + $0x138] sm:$0x3] %vm1243, -inf
        %1285 = vst.msk [vmem:[%s1258 + $0x158] sm:$0x3] %vm1243, -inf
        %1286 = vst.msk [vmem:[%s1258 + $0x178] sm:$0x3] %vm1243, -inf
        %1287 = vst.msk [vmem:[%s1258 + $0x198] sm:$0x3] %vm1243, -inf
        %1288 = vst.msk [vmem:[%s1258 + $0x1b8] sm:$0x3] %vm1243, -inf
        %1289 = vst.msk [vmem:[%s1258 + $0x1d8] sm:$0x3] %vm1243, -inf
        %1290 = vst.msk [vmem:[%s1258 + $0x1f8] sm:$0x3] %vm1243, -inf
        %v1291 = vld [vmem:[%s418] sm:$0xf]
        %v1292 = vpack.c.bf16 %v1208, %v1207
        %v1293 = vpack.c.bf16 %v1210, %v1209
        %v1294 = vpack.c.bf16 %v1212, %v1211
        %v1295 = vpack.c.bf16 %v1214, %v1213
        %v1296 = vpack.c.bf16 %v1216, %v1215
        %v1297 = vpack.c.bf16 %v1218, %v1217
        %v1298 = vpack.c.bf16 %v1220, %v1219
        %v1299 = vpack.c.bf16 %v1222, %v1221
        %v1300 = vpack.c.bf16 %v1224, %v1223
        %v1301 = vpack.c.bf16 %v1226, %v1225
        %v1302 = vpack.c.bf16 %v1228, %v1227
        %v1303 = vpack.c.bf16 %v1230, %v1229
        %v1304 = vpack.c.bf16 %v1232, %v1231
        %v1305 = vpack.c.bf16 %v1234, %v1233
        %v1306 = vpack.c.bf16 %v1236, %v1235
        %v1307 = vpack.c.bf16 %v1238, %v1237
        %1308 = vst.msk [vmem:[%s1258 + $0x8] sm:$0xff] %vm1239, %v1207
        %1309 = vst.msk [vmem:[%s1258 + $0x10] sm:$0xff] %vm1239, %v1208
        %1310 = vst.msk [vmem:[%s1258 + $0x28] sm:$0xff] %vm1239, %v1209
        %1311 = vst.msk [vmem:[%s1258 + $0x30] sm:$0xff] %vm1239, %v1210
        %1312 = vst.msk [vmem:[%s1258 + $0x48] sm:$0xff] %vm1239, %v1211
        %1313 = vst.msk [vmem:[%s1258 + $0x50] sm:$0xff] %vm1239, %v1212
        %1314 = vst.msk [vmem:[%s1258 + $0x68] sm:$0xff] %vm1239, %v1213
        %1315 = vst.msk [vmem:[%s1258 + $0x70] sm:$0xff] %vm1239, %v1214
        %1316 = vst.msk [vmem:[%s1258 + $0x88] sm:$0xff] %vm1239, %v1215
        %1317 = vst.msk [vmem:[%s1258 + $0x90] sm:$0xff] %vm1239, %v1216
        %1318 = vst.msk [vmem:[%s1258 + $0xa8] sm:$0xff] %vm1239, %v1217
        %1319 = vst.msk [vmem:[%s1258 + $0xb0] sm:$0xff] %vm1239, %v1218
        %1320 = vst.msk [vmem:[%s1258 + $0xc8] sm:$0xff] %vm1239, %v1219
        %1321 = vst.msk [vmem:[%s1258 + $0xd0] sm:$0xff] %vm1239, %v1220
        %1322 = vst.msk [vmem:[%s1258 + $0xe8] sm:$0xff] %vm1239, %v1221
        %1323 = vst.msk [vmem:[%s1258 + $0xf0] sm:$0xff] %vm1239, %v1222
        %1324 = vst.msk [vmem:[%s1258 + $0x108] sm:$0xff] %vm1239, %v1223
        %1325 = vst.msk [vmem:[%s1258 + $0x110] sm:$0xff] %vm1239, %v1224
        %1326 = vst.msk [vmem:[%s1258 + $0x128] sm:$0xff] %vm1239, %v1225
        %1327 = vst.msk [vmem:[%s1258 + $0x130] sm:$0xff] %vm1239, %v1226
        %1328 = vst.msk [vmem:[%s1258 + $0x148] sm:$0xff] %vm1239, %v1227
        %1329 = vst.msk [vmem:[%s1258 + $0x150] sm:$0xff] %vm1239, %v1228
        %1330 = vst.msk [vmem:[%s1258 + $0x168] sm:$0xff] %vm1239, %v1229
        %1331 = vst.msk [vmem:[%s1258 + $0x170] sm:$0xff] %vm1239, %v1230
        %1332 = vst.msk [vmem:[%s1258 + $0x188] sm:$0xff] %vm1239, %v1231
        %1333 = vst.msk [vmem:[%s1258 + $0x190] sm:$0xff] %vm1239, %v1232
        %1334 = vst.msk [vmem:[%s1258 + $0x1a8] sm:$0xff] %vm1239, %v1233
        %1335 = vst.msk [vmem:[%s1258 + $0x1b0] sm:$0xff] %vm1239, %v1234
        %1336 = vst.msk [vmem:[%s1258 + $0x1c8] sm:$0xff] %vm1239, %v1235
        %1337 = vst.msk [vmem:[%s1258 + $0x1d0] sm:$0xff] %vm1239, %v1236
        %1338 = vst.msk [vmem:[%s1258 + $0x1e8] sm:$0xff] %vm1239, %v1237
        %1339 = vst.msk [vmem:[%s1258 + $0x1f0] sm:$0xff] %vm1239, %v1238
        %v1340 = vld [vmem:[#allocation2] sm:$0xff]
        %v1341 = vld [vmem:[#allocation2 + $0x8] sm:$0xff]
        %v1342 = vld [vmem:[#allocation2 + $0x10] sm:$0xff]
        %v1343 = vld [vmem:[#allocation2 + $0x18] sm:$0x3]
        %v1344 = vld [vmem:[#allocation2 + $0x20] sm:$0xff]
        %v1345 = vld [vmem:[#allocation2 + $0x28] sm:$0xff]
        %v1346 = vld [vmem:[#allocation2 + $0x30] sm:$0xff]
        %v1347 = vld [vmem:[#allocation2 + $0x38] sm:$0x3]
        %v1348 = vld [vmem:[#allocation2 + $0x40] sm:$0xff]
        %v1349 = vld [vmem:[#allocation2 + $0x48] sm:$0xff]
        %v1350 = vld [vmem:[#allocation2 + $0x50] sm:$0xff]
        %v1351 = vld [vmem:[#allocation2 + $0x58] sm:$0x3]
        %v1352 = vld [vmem:[#allocation2 + $0x60] sm:$0xff]
        %v1353 = vld [vmem:[#allocation2 + $0x68] sm:$0xff]
        %v1354 = vld [vmem:[#allocation2 + $0x70] sm:$0xff]
        %v1355 = vld [vmem:[#allocation2 + $0x78] sm:$0x3]
        %v1356 = vld [vmem:[#allocation2 + $0x80] sm:$0xff]
        %v1357 = vld [vmem:[#allocation2 + $0x88] sm:$0xff]
        %v1358 = vld [vmem:[#allocation2 + $0x90] sm:$0xff]
        %v1359 = vld [vmem:[#allocation2 + $0x98] sm:$0x3]
        %v1360 = vld [vmem:[#allocation2 + $0xa0] sm:$0xff]
        %v1361 = vld [vmem:[#allocation2 + $0xa8] sm:$0xff]
        %v1362 = vld [vmem:[#allocation2 + $0xb0] sm:$0xff]
        %v1363 = vld [vmem:[#allocation2 + $0xb8] sm:$0x3]
        %v1364 = vld [vmem:[#allocation2 + $0xc0] sm:$0xff]
        %v1365 = vld [vmem:[#allocation2 + $0xc8] sm:$0xff]
        %v1366 = vld [vmem:[#allocation2 + $0xd0] sm:$0xff]
        %v1367 = vld [vmem:[#allocation2 + $0xd8] sm:$0x3]
        %v1368 = vld [vmem:[#allocation2 + $0xe0] sm:$0xff]
        %v1369 = vld [vmem:[#allocation2 + $0xe8] sm:$0xff]
        %v1370 = vld [vmem:[#allocation2 + $0xf0] sm:$0xff]
        %v1371 = vld [vmem:[#allocation2 + $0xf8] sm:$0x3]
        %v1372 = vld [vmem:[#allocation2 + $0x100] sm:$0xff]
        %v1373 = vld [vmem:[#allocation2 + $0x108] sm:$0xff]
        %v1374 = vld [vmem:[#allocation2 + $0x110] sm:$0xff]
        %v1375 = vld [vmem:[#allocation2 + $0x118] sm:$0x3]
        %v1376 = vld [vmem:[#allocation2 + $0x120] sm:$0xff]
        %v1377 = vld [vmem:[#allocation2 + $0x128] sm:$0xff]
        %v1378 = vld [vmem:[#allocation2 + $0x130] sm:$0xff]
        %v1379 = vld [vmem:[#allocation2 + $0x138] sm:$0x3]
        %v1380 = vld [vmem:[#allocation2 + $0x140] sm:$0xff]
        %v1381 = vld [vmem:[#allocation2 + $0x148] sm:$0xff]
        %v1382 = vld [vmem:[#allocation2 + $0x150] sm:$0xff]
        %v1383 = vld [vmem:[#allocation2 + $0x158] sm:$0x3]
        %v1384 = vld [vmem:[#allocation2 + $0x160] sm:$0xff]
        %v1385 = vld [vmem:[#allocation2 + $0x168] sm:$0xff]
        %v1386 = vld [vmem:[#allocation2 + $0x170] sm:$0xff]
        %v1387 = vld [vmem:[#allocation2 + $0x178] sm:$0x3]
        %v1388 = vld [vmem:[#allocation2 + $0x180] sm:$0xff]
        %v1389 = vld [vmem:[#allocation2 + $0x188] sm:$0xff]
        %v1390 = vld [vmem:[#allocation2 + $0x190] sm:$0xff]
        %v1391 = vld [vmem:[#allocation2 + $0x198] sm:$0x3]
        %v1392 = vld [vmem:[#allocation2 + $0x1a0] sm:$0xff]
        %v1393 = vld [vmem:[#allocation2 + $0x1a8] sm:$0xff]
        %v1394 = vld [vmem:[#allocation2 + $0x1b0] sm:$0xff]
        %v1395 = vld [vmem:[#allocation2 + $0x1b8] sm:$0x3]
        %v1396 = vld [vmem:[#allocation2 + $0x1c0] sm:$0xff]
        %v1397 = vld [vmem:[#allocation2 + $0x1c8] sm:$0xff]
        %v1398 = vld [vmem:[#allocation2 + $0x1d0] sm:$0xff]
        %v1399 = vld [vmem:[#allocation2 + $0x1d8] sm:$0x3]
        %v1400 = vld [vmem:[#allocation2 + $0x1e0] sm:$0xff]
        %v1401 = vld [vmem:[#allocation2 + $0x1e8] sm:$0xff]
        %v1402 = vld [vmem:[#allocation2 + $0x1f0] sm:$0xff]
        %v1403 = vld [vmem:[#allocation2 + $0x1f8] sm:$0x3]
        %s1404 = scalar_lea.vmem [#allocation2], 32
        %v1405 = vld [vmem:[%s1404] sm:$0xff]
        %v1406 = vld [vmem:[%s1404 + $0x8] sm:$0xff]
        %v1407 = vld [vmem:[%s1404 + $0x10] sm:$0xff]
        %v1408 = vld [vmem:[%s1404 + $0x18] sm:$0x3]
        %v1409 = vld [vmem:[%s1404 + $0x20] sm:$0xff]
        %v1410 = vld [vmem:[%s1404 + $0x28] sm:$0xff]
        %v1411 = vld [vmem:[%s1404 + $0x30] sm:$0xff]
        %v1412 = vld [vmem:[%s1404 + $0x38] sm:$0x3]
        %v1413 = vld [vmem:[%s1404 + $0x40] sm:$0xff]
        %v1414 = vld [vmem:[%s1404 + $0x48] sm:$0xff]
        %v1415 = vld [vmem:[%s1404 + $0x50] sm:$0xff]
        %v1416 = vld [vmem:[%s1404 + $0x58] sm:$0x3]
        %v1417 = vld [vmem:[%s1404 + $0x60] sm:$0xff]
        %v1418 = vld [vmem:[%s1404 + $0x68] sm:$0xff]
        %v1419 = vld [vmem:[%s1404 + $0x70] sm:$0xff]
        %v1420 = vld [vmem:[%s1404 + $0x78] sm:$0x3]
        %v1421 = vld [vmem:[%s1404 + $0x80] sm:$0xff]
        %v1422 = vld [vmem:[%s1404 + $0x88] sm:$0xff]
        %v1423 = vld [vmem:[%s1404 + $0x90] sm:$0xff]
        %v1424 = vld [vmem:[%s1404 + $0x98] sm:$0x3]
        %v1425 = vld [vmem:[%s1404 + $0xa0] sm:$0xff]
        %v1426 = vld [vmem:[%s1404 + $0xa8] sm:$0xff]
        %v1427 = vld [vmem:[%s1404 + $0xb0] sm:$0xff]
        %v1428 = vld [vmem:[%s1404 + $0xb8] sm:$0x3]
        %v1429 = vld [vmem:[%s1404 + $0xc0] sm:$0xff]
        %v1430 = vld [vmem:[%s1404 + $0xc8] sm:$0xff]
        %v1431 = vld [vmem:[%s1404 + $0xd0] sm:$0xff]
        %v1432 = vld [vmem:[%s1404 + $0xd8] sm:$0x3]
        %v1433 = vld [vmem:[%s1404 + $0xe0] sm:$0xff]
        %v1434 = vld [vmem:[%s1404 + $0xe8] sm:$0xff]
        %v1435 = vld [vmem:[%s1404 + $0xf0] sm:$0xff]
        %v1436 = vld [vmem:[%s1404 + $0xf8] sm:$0x3]
        %v1437 = vld [vmem:[%s1404 + $0x100] sm:$0xff]
        %v1438 = vld [vmem:[%s1404 + $0x108] sm:$0xff]
        %v1439 = vld [vmem:[%s1404 + $0x110] sm:$0xff]
        %v1440 = vld [vmem:[%s1404 + $0x118] sm:$0x3]
        %v1441 = vld [vmem:[%s1404 + $0x120] sm:$0xff]
        %v1442 = vld [vmem:[%s1404 + $0x128] sm:$0xff]
        %v1443 = vld [vmem:[%s1404 + $0x130] sm:$0xff]
        %v1444 = vld [vmem:[%s1404 + $0x138] sm:$0x3]
        %v1445 = vld [vmem:[%s1404 + $0x140] sm:$0xff]
        %v1446 = vld [vmem:[%s1404 + $0x148] sm:$0xff]
        %v1447 = vld [vmem:[%s1404 + $0x150] sm:$0xff]
        %v1448 = vld [vmem:[%s1404 + $0x158] sm:$0x3]
        %v1449 = vld [vmem:[%s1404 + $0x160] sm:$0xff]
        %v1450 = vld [vmem:[%s1404 + $0x168] sm:$0xff]
        %v1451 = vld [vmem:[%s1404 + $0x170] sm:$0xff]
        %v1452 = vld [vmem:[%s1404 + $0x178] sm:$0x3]
        %v1453 = vld [vmem:[%s1404 + $0x180] sm:$0xff]
        %v1454 = vld [vmem:[%s1404 + $0x188] sm:$0xff]
        %v1455 = vld [vmem:[%s1404 + $0x190] sm:$0xff]
        %v1456 = vld [vmem:[%s1404 + $0x198] sm:$0x3]
        %v1457 = vld [vmem:[%s1404 + $0x1a0] sm:$0xff]
        %v1458 = vld [vmem:[%s1404 + $0x1a8] sm:$0xff]
        %v1459 = vld [vmem:[%s1404 + $0x1b0] sm:$0xff]
        %v1460 = vld [vmem:[%s1404 + $0x1b8] sm:$0x3]
        %v1461 = vld [vmem:[%s1404 + $0x1c0] sm:$0xff]
        %v1462 = vld [vmem:[%s1404 + $0x1c8] sm:$0xff]
        %v1463 = vld [vmem:[%s1404 + $0x1d0] sm:$0xff]
        %v1464 = vld [vmem:[%s1404 + $0x1d8] sm:$0x3]
        %v1465 = vld [vmem:[%s1404 + $0x1e0] sm:$0xff]
        %v1466 = vld [vmem:[%s1404 + $0x1e8] sm:$0xff]
        %v1467 = vld [vmem:[%s1404 + $0x1f0] sm:$0xff]
        %v1468 = vld [vmem:[%s1404 + $0x1f8] sm:$0x3]
        %v1469 = vmax.f32 %v1340, %v1405
        %v1470 = vmax.f32 %v1341, %v1406
        %v1471 = vmax.f32 %v1342, %v1407
        %v1472 = vmax.f32 %v1343, %v1408
        %v1473 = vmax.f32 %v1344, %v1409
        %v1474 = vmax.f32 %v1345, %v1410
        %v1475 = vmax.f32 %v1346, %v1411
        %v1476 = vmax.f32 %v1347, %v1412
        %v1477 = vmax.f32 %v1348, %v1413
        %v1478 = vmax.f32 %v1349, %v1414
        %v1479 = vmax.f32 %v1350, %v1415
        %v1480 = vmax.f32 %v1351, %v1416
        %v1481 = vmax.f32 %v1352, %v1417
        %v1482 = vmax.f32 %v1353, %v1418
        %v1483 = vmax.f32 %v1354, %v1419
        %v1484 = vmax.f32 %v1355, %v1420
        %v1485 = vmax.f32 %v1356, %v1421
        %v1486 = vmax.f32 %v1357, %v1422
        %v1487 = vmax.f32 %v1358, %v1423
        %v1488 = vmax.f32 %v1359, %v1424
        %v1489 = vmax.f32 %v1360, %v1425
        %v1490 = vmax.f32 %v1361, %v1426
        %v1491 = vmax.f32 %v1362, %v1427
        %v1492 = vmax.f32 %v1363, %v1428
        %v1493 = vmax.f32 %v1364, %v1429
        %v1494 = vmax.f32 %v1365, %v1430
        %v1495 = vmax.f32 %v1366, %v1431
        %v1496 = vmax.f32 %v1367, %v1432
        %v1497 = vmax.f32 %v1368, %v1433
        %v1498 = vmax.f32 %v1369, %v1434
        %v1499 = vmax.f32 %v1370, %v1435
        %v1500 = vmax.f32 %v1371, %v1436
        %v1501 = vmax.f32 %v1372, %v1437
        %v1502 = vmax.f32 %v1373, %v1438
        %v1503 = vmax.f32 %v1374, %v1439
        %v1504 = vmax.f32 %v1375, %v1440
        %v1505 = vmax.f32 %v1376, %v1441
        %v1506 = vmax.f32 %v1377, %v1442
        %v1507 = vmax.f32 %v1378, %v1443
        %v1508 = vmax.f32 %v1379, %v1444
        %v1509 = vmax.f32 %v1380, %v1445
        %v1510 = vmax.f32 %v1381, %v1446
        %v1511 = vmax.f32 %v1382, %v1447
        %v1512 = vmax.f32 %v1383, %v1448
        %v1513 = vmax.f32 %v1384, %v1449
        %v1514 = vmax.f32 %v1385, %v1450
        %v1515 = vmax.f32 %v1386, %v1451
        %v1516 = vmax.f32 %v1387, %v1452
        %v1517 = vmax.f32 %v1388, %v1453
        %v1518 = vmax.f32 %v1389, %v1454
        %v1519 = vmax.f32 %v1390, %v1455
        %v1520 = vmax.f32 %v1391, %v1456
        %v1521 = vmax.f32 %v1392, %v1457
        %v1522 = vmax.f32 %v1393, %v1458
        %v1523 = vmax.f32 %v1394, %v1459
        %v1524 = vmax.f32 %v1395, %v1460
        %v1525 = vmax.f32 %v1396, %v1461
        %v1526 = vmax.f32 %v1397, %v1462
        %v1527 = vmax.f32 %v1398, %v1463
        %v1528 = vmax.f32 %v1399, %v1464
        %v1529 = vmax.f32 %v1400, %v1465
        %v1530 = vmax.f32 %v1401, %v1466
        %v1531 = vmax.f32 %v1402, %v1467
        %v1532 = vmax.f32 %v1403, %v1468
        %v1533 = vld [vmem:[%s1258] sm:$0xff]
        %v1534 = vld [vmem:[%s1258 + $0x8] sm:$0xff]
        %v1535 = vld [vmem:[%s1258 + $0x10] sm:$0xff]
        %v1536 = vld [vmem:[%s1258 + $0x18] sm:$0x3]
        %v1537 = vld [vmem:[%s1258 + $0x20] sm:$0xff]
        %v1538 = vld [vmem:[%s1258 + $0x28] sm:$0xff]
        %v1539 = vld [vmem:[%s1258 + $0x30] sm:$0xff]
        %v1540 = vld [vmem:[%s1258 + $0x38] sm:$0x3]
        %v1541 = vld [vmem:[%s1258 + $0x40] sm:$0xff]
        %v1542 = vld [vmem:[%s1258 + $0x48] sm:$0xff]
        %v1543 = vld [vmem:[%s1258 + $0x50] sm:$0xff]
        %v1544 = vld [vmem:[%s1258 + $0x58] sm:$0x3]
        %v1545 = vld [vmem:[%s1258 + $0x60] sm:$0xff]
        %v1546 = vld [vmem:[%s1258 + $0x68] sm:$0xff]
        %v1547 = vld [vmem:[%s1258 + $0x70] sm:$0xff]
        %v1548 = vld [vmem:[%s1258 + $0x78] sm:$0x3]
        %v1549 = vld [vmem:[%s1258 + $0x80] sm:$0xff]
        %v1550 = vld [vmem:[%s1258 + $0x88] sm:$0xff]
        %v1551 = vld [vmem:[%s1258 + $0x90] sm:$0xff]
        %v1552 = vld [vmem:[%s1258 + $0x98] sm:$0x3]
        %v1553 = vld [vmem:[%s1258 + $0xa0] sm:$0xff]
        %v1554 = vld [vmem:[%s1258 + $0xa8] sm:$0xff]
        %v1555 = vld [vmem:[%s1258 + $0xb0] sm:$0xff]
        %v1556 = vld [vmem:[%s1258 + $0xb8] sm:$0x3]
        %v1557 = vld [vmem:[%s1258 + $0xc0] sm:$0xff]
        %v1558 = vld [vmem:[%s1258 + $0xc8] sm:$0xff]
        %v1559 = vld [vmem:[%s1258 + $0xd0] sm:$0xff]
        %v1560 = vld [vmem:[%s1258 + $0xd8] sm:$0x3]
        %v1561 = vld [vmem:[%s1258 + $0xe0] sm:$0xff]
        %v1562 = vld [vmem:[%s1258 + $0xe8] sm:$0xff]
        %v1563 = vld [vmem:[%s1258 + $0xf0] sm:$0xff]
        %v1564 = vld [vmem:[%s1258 + $0xf8] sm:$0x3]
        %v1565 = vld [vmem:[%s1258 + $0x100] sm:$0xff]
        %v1566 = vld [vmem:[%s1258 + $0x108] sm:$0xff]
        %v1567 = vld [vmem:[%s1258 + $0x110] sm:$0xff]
        %v1568 = vld [vmem:[%s1258 + $0x118] sm:$0x3]
        %v1569 = vld [vmem:[%s1258 + $0x120] sm:$0xff]
        %v1570 = vld [vmem:[%s1258 + $0x128] sm:$0xff]
        %v1571 = vld [vmem:[%s1258 + $0x130] sm:$0xff]
        %v1572 = vld [vmem:[%s1258 + $0x138] sm:$0x3]
        %v1573 = vld [vmem:[%s1258 + $0x140] sm:$0xff]
        %v1574 = vld [vmem:[%s1258 + $0x148] sm:$0xff]
        %v1575 = vld [vmem:[%s1258 + $0x150] sm:$0xff]
        %v1576 = vld [vmem:[%s1258 + $0x158] sm:$0x3]
        %v1577 = vld [vmem:[%s1258 + $0x160] sm:$0xff]
        %v1578 = vld [vmem:[%s1258 + $0x168] sm:$0xff]
        %v1579 = vld [vmem:[%s1258 + $0x170] sm:$0xff]
        %v1580 = vld [vmem:[%s1258 + $0x178] sm:$0x3]
        %v1581 = vld [vmem:[%s1258 + $0x180] sm:$0xff]
        %v1582 = vld [vmem:[%s1258 + $0x188] sm:$0xff]
        %v1583 = vld [vmem:[%s1258 + $0x190] sm:$0xff]
        %v1584 = vld [vmem:[%s1258 + $0x198] sm:$0x3]
        %v1585 = vld [vmem:[%s1258 + $0x1a0] sm:$0xff]
        %v1586 = vld [vmem:[%s1258 + $0x1a8] sm:$0xff]
        %v1587 = vld [vmem:[%s1258 + $0x1b0] sm:$0xff]
        %v1588 = vld [vmem:[%s1258 + $0x1b8] sm:$0x3]
        %v1589 = vld [vmem:[%s1258 + $0x1c0] sm:$0xff]
        %v1590 = vld [vmem:[%s1258 + $0x1c8] sm:$0xff]
        %v1591 = vld [vmem:[%s1258 + $0x1d0] sm:$0xff]
        %v1592 = vld [vmem:[%s1258 + $0x1d8] sm:$0x3]
        %v1593 = vld [vmem:[%s1258 + $0x1e0] sm:$0xff]
        %v1594 = vld [vmem:[%s1258 + $0x1e8] sm:$0xff]
        %v1595 = vld [vmem:[%s1258 + $0x1f0] sm:$0xff]
        %v1596 = vld [vmem:[%s1258 + $0x1f8] sm:$0x3]
        %v1597 = vmax.f32 %v1469, %v1533
        %v1598 = vmax.f32 %v1470, %v1534
        %v1599 = vmax.f32 %v1471, %v1535
        %v1600 = vmax.f32 %v1472, %v1536
        %v1601 = vmax.f32 %v1473, %v1537
        %v1602 = vmax.f32 %v1474, %v1538
        %v1603 = vmax.f32 %v1475, %v1539
        %v1604 = vmax.f32 %v1476, %v1540
        %v1605 = vmax.f32 %v1477, %v1541
        %v1606 = vmax.f32 %v1478, %v1542
        %v1607 = vmax.f32 %v1479, %v1543
        %v1608 = vmax.f32 %v1480, %v1544
        %v1609 = vmax.f32 %v1481, %v1545
        %v1610 = vmax.f32 %v1482, %v1546
        %v1611 = vmax.f32 %v1483, %v1547
        %v1612 = vmax.f32 %v1484, %v1548
        %v1613 = vmax.f32 %v1485, %v1549
        %v1614 = vmax.f32 %v1486, %v1550
        %v1615 = vmax.f32 %v1487, %v1551
        %v1616 = vmax.f32 %v1488, %v1552
        %v1617 = vmax.f32 %v1489, %v1553
        %v1618 = vmax.f32 %v1490, %v1554
        %v1619 = vmax.f32 %v1491, %v1555
        %v1620 = vmax.f32 %v1492, %v1556
        %v1621 = vmax.f32 %v1493, %v1557
        %v1622 = vmax.f32 %v1494, %v1558
        %v1623 = vmax.f32 %v1495, %v1559
        %v1624 = vmax.f32 %v1496, %v1560
        %v1625 = vmax.f32 %v1497, %v1561
        %v1626 = vmax.f32 %v1498, %v1562
        %v1627 = vmax.f32 %v1499, %v1563
        %v1628 = vmax.f32 %v1500, %v1564
        %v1629 = vmax.f32 %v1501, %v1565
        %v1630 = vmax.f32 %v1502, %v1566
        %v1631 = vmax.f32 %v1503, %v1567
        %v1632 = vmax.f32 %v1504, %v1568
        %v1633 = vmax.f32 %v1505, %v1569
        %v1634 = vmax.f32 %v1506, %v1570
        %v1635 = vmax.f32 %v1507, %v1571
        %v1636 = vmax.f32 %v1508, %v1572
        %v1637 = vmax.f32 %v1509, %v1573
        %v1638 = vmax.f32 %v1510, %v1574
        %v1639 = vmax.f32 %v1511, %v1575
        %v1640 = vmax.f32 %v1512, %v1576
        %v1641 = vmax.f32 %v1513, %v1577
        %v1642 = vmax.f32 %v1514, %v1578
        %v1643 = vmax.f32 %v1515, %v1579
        %v1644 = vmax.f32 %v1516, %v1580
        %v1645 = vmax.f32 %v1517, %v1581
        %v1646 = vmax.f32 %v1518, %v1582
        %v1647 = vmax.f32 %v1519, %v1583
        %v1648 = vmax.f32 %v1520, %v1584
        %v1649 = vmax.f32 %v1521, %v1585
        %v1650 = vmax.f32 %v1522, %v1586
        %v1651 = vmax.f32 %v1523, %v1587
        %v1652 = vmax.f32 %v1524, %v1588
        %v1653 = vmax.f32 %v1525, %v1589
        %v1654 = vmax.f32 %v1526, %v1590
        %v1655 = vmax.f32 %v1527, %v1591
        %v1656 = vmax.f32 %v1528, %v1592
        %v1657 = vmax.f32 %v1529, %v1593
        %v1658 = vmax.f32 %v1530, %v1594
        %v1659 = vmax.f32 %v1531, %v1595
        %v1660 = vmax.f32 %v1532, %v1596
        %s1661 = scalar_lea.vmem [#allocation2], 96
        %v1662 = vld [vmem:[%s1661] sm:$0xff]
        %v1663 = vld [vmem:[%s1661 + $0x8] sm:$0xff]
        %v1664 = vld [vmem:[%s1661 + $0x10] sm:$0xff]
        %v1665 = vld [vmem:[%s1661 + $0x18] sm:$0x3]
        %v1666 = vld [vmem:[%s1661 + $0x20] sm:$0xff]
        %v1667 = vld [vmem:[%s1661 + $0x28] sm:$0xff]
        %v1668 = vld [vmem:[%s1661 + $0x30] sm:$0xff]
        %v1669 = vld [vmem:[%s1661 + $0x38] sm:$0x3]
        %v1670 = vld [vmem:[%s1661 + $0x40] sm:$0xff]
        %v1671 = vld [vmem:[%s1661 + $0x48] sm:$0xff]
        %v1672 = vld [vmem:[%s1661 + $0x50] sm:$0xff]
        %v1673 = vld [vmem:[%s1661 + $0x58] sm:$0x3]
        %v1674 = vld [vmem:[%s1661 + $0x60] sm:$0xff]
        %v1675 = vld [vmem:[%s1661 + $0x68] sm:$0xff]
        %v1676 = vld [vmem:[%s1661 + $0x70] sm:$0xff]
        %v1677 = vld [vmem:[%s1661 + $0x78] sm:$0x3]
        %v1678 = vld [vmem:[%s1661 + $0x80] sm:$0xff]
        %v1679 = vld [vmem:[%s1661 + $0x88] sm:$0xff]
        %v1680 = vld [vmem:[%s1661 + $0x90] sm:$0xff]
        %v1681 = vld [vmem:[%s1661 + $0x98] sm:$0x3]
        %v1682 = vld [vmem:[%s1661 + $0xa0] sm:$0xff]
        %v1683 = vld [vmem:[%s1661 + $0xa8] sm:$0xff]
        %v1684 = vld [vmem:[%s1661 + $0xb0] sm:$0xff]
        %v1685 = vld [vmem:[%s1661 + $0xb8] sm:$0x3]
        %v1686 = vld [vmem:[%s1661 + $0xc0] sm:$0xff]
        %v1687 = vld [vmem:[%s1661 + $0xc8] sm:$0xff]
        %v1688 = vld [vmem:[%s1661 + $0xd0] sm:$0xff]
        %v1689 = vld [vmem:[%s1661 + $0xd8] sm:$0x3]
        %v1690 = vld [vmem:[%s1661 + $0xe0] sm:$0xff]
        %v1691 = vld [vmem:[%s1661 + $0xe8] sm:$0xff]
        %v1692 = vld [vmem:[%s1661 + $0xf0] sm:$0xff]
        %v1693 = vld [vmem:[%s1661 + $0xf8] sm:$0x3]
        %v1694 = vld [vmem:[%s1661 + $0x100] sm:$0xff]
        %v1695 = vld [vmem:[%s1661 + $0x108] sm:$0xff]
        %v1696 = vld [vmem:[%s1661 + $0x110] sm:$0xff]
        %v1697 = vld [vmem:[%s1661 + $0x118] sm:$0x3]
        %v1698 = vld [vmem:[%s1661 + $0x120] sm:$0xff]
        %v1699 = vld [vmem:[%s1661 + $0x128] sm:$0xff]
        %v1700 = vld [vmem:[%s1661 + $0x130] sm:$0xff]
        %v1701 = vld [vmem:[%s1661 + $0x138] sm:$0x3]
        %v1702 = vld [vmem:[%s1661 + $0x140] sm:$0xff]
        %v1703 = vld [vmem:[%s1661 + $0x148] sm:$0xff]
        %v1704 = vld [vmem:[%s1661 + $0x150] sm:$0xff]
        %v1705 = vld [vmem:[%s1661 + $0x158] sm:$0x3]
        %v1706 = vld [vmem:[%s1661 + $0x160] sm:$0xff]
        %v1707 = vld [vmem:[%s1661 + $0x168] sm:$0xff]
        %v1708 = vld [vmem:[%s1661 + $0x170] sm:$0xff]
        %v1709 = vld [vmem:[%s1661 + $0x178] sm:$0x3]
        %v1710 = vld [vmem:[%s1661 + $0x180] sm:$0xff]
        %v1711 = vld [vmem:[%s1661 + $0x188] sm:$0xff]
        %v1712 = vld [vmem:[%s1661 + $0x190] sm:$0xff]
        %v1713 = vld [vmem:[%s1661 + $0x198] sm:$0x3]
        %v1714 = vld [vmem:[%s1661 + $0x1a0] sm:$0xff]
        %v1715 = vld [vmem:[%s1661 + $0x1a8] sm:$0xff]
        %v1716 = vld [vmem:[%s1661 + $0x1b0] sm:$0xff]
        %v1717 = vld [vmem:[%s1661 + $0x1b8] sm:$0x3]
        %v1718 = vld [vmem:[%s1661 + $0x1c0] sm:$0xff]
        %v1719 = vld [vmem:[%s1661 + $0x1c8] sm:$0xff]
        %v1720 = vld [vmem:[%s1661 + $0x1d0] sm:$0xff]
        %v1721 = vld [vmem:[%s1661 + $0x1d8] sm:$0x3]
        %v1722 = vld [vmem:[%s1661 + $0x1e0] sm:$0xff]
        %v1723 = vld [vmem:[%s1661 + $0x1e8] sm:$0xff]
        %v1724 = vld [vmem:[%s1661 + $0x1f0] sm:$0xff]
        %v1725 = vld [vmem:[%s1661 + $0x1f8] sm:$0x3]
        %v1726 = vmax.f32 %v1597, %v1662
        %v1727 = vmax.f32 %v1598, %v1663
        %v1728 = vmax.f32 %v1599, %v1664
        %v1729 = vmax.f32 %v1600, %v1665
        %v1730 = vmax.f32 %v1601, %v1666
        %v1731 = vmax.f32 %v1602, %v1667
        %v1732 = vmax.f32 %v1603, %v1668
        %v1733 = vmax.f32 %v1604, %v1669
        %v1734 = vmax.f32 %v1605, %v1670
        %v1735 = vmax.f32 %v1606, %v1671
        %v1736 = vmax.f32 %v1607, %v1672
        %v1737 = vmax.f32 %v1608, %v1673
        %v1738 = vmax.f32 %v1609, %v1674
        %v1739 = vmax.f32 %v1610, %v1675
        %v1740 = vmax.f32 %v1611, %v1676
        %v1741 = vmax.f32 %v1612, %v1677
        %v1742 = vmax.f32 %v1613, %v1678
        %v1743 = vmax.f32 %v1614, %v1679
        %v1744 = vmax.f32 %v1615, %v1680
        %v1745 = vmax.f32 %v1616, %v1681
        %v1746 = vmax.f32 %v1617, %v1682
        %v1747 = vmax.f32 %v1618, %v1683
        %v1748 = vmax.f32 %v1619, %v1684
        %v1749 = vmax.f32 %v1620, %v1685
        %v1750 = vmax.f32 %v1621, %v1686
        %v1751 = vmax.f32 %v1622, %v1687
        %v1752 = vmax.f32 %v1623, %v1688
        %v1753 = vmax.f32 %v1624, %v1689
        %v1754 = vmax.f32 %v1625, %v1690
        %v1755 = vmax.f32 %v1626, %v1691
        %v1756 = vmax.f32 %v1627, %v1692
        %v1757 = vmax.f32 %v1628, %v1693
        %v1758 = vmax.f32 %v1629, %v1694
        %v1759 = vmax.f32 %v1630, %v1695
        %v1760 = vmax.f32 %v1631, %v1696
        %v1761 = vmax.f32 %v1632, %v1697
        %v1762 = vmax.f32 %v1633, %v1698
        %v1763 = vmax.f32 %v1634, %v1699
        %v1764 = vmax.f32 %v1635, %v1700
        %v1765 = vmax.f32 %v1636, %v1701
        %v1766 = vmax.f32 %v1637, %v1702
        %v1767 = vmax.f32 %v1638, %v1703
        %v1768 = vmax.f32 %v1639, %v1704
        %v1769 = vmax.f32 %v1640, %v1705
        %v1770 = vmax.f32 %v1641, %v1706
        %v1771 = vmax.f32 %v1642, %v1707
        %v1772 = vmax.f32 %v1643, %v1708
        %v1773 = vmax.f32 %v1644, %v1709
        %v1774 = vmax.f32 %v1645, %v1710
        %v1775 = vmax.f32 %v1646, %v1711
        %v1776 = vmax.f32 %v1647, %v1712
        %v1777 = vmax.f32 %v1648, %v1713
        %v1778 = vmax.f32 %v1649, %v1714
        %v1779 = vmax.f32 %v1650, %v1715
        %v1780 = vmax.f32 %v1651, %v1716
        %v1781 = vmax.f32 %v1652, %v1717
        %v1782 = vmax.f32 %v1653, %v1718
        %v1783 = vmax.f32 %v1654, %v1719
        %v1784 = vmax.f32 %v1655, %v1720
        %v1785 = vmax.f32 %v1656, %v1721
        %v1786 = vmax.f32 %v1657, %v1722
        %v1787 = vmax.f32 %v1658, %v1723
        %v1788 = vmax.f32 %v1659, %v1724
        %v1789 = vmax.f32 %v1660, %v1725
        %s1790 = scalar_lea.vmem [#allocation2], 128
        %v1791 = vld [vmem:[%s1790] sm:$0xff]
        %v1792 = vld [vmem:[%s1790 + $0x8] sm:$0xff]
        %v1793 = vld [vmem:[%s1790 + $0x10] sm:$0xff]
        %v1794 = vld [vmem:[%s1790 + $0x18] sm:$0x3]
        %v1795 = vld [vmem:[%s1790 + $0x20] sm:$0xff]
        %v1796 = vld [vmem:[%s1790 + $0x28] sm:$0xff]
        %v1797 = vld [vmem:[%s1790 + $0x30] sm:$0xff]
        %v1798 = vld [vmem:[%s1790 + $0x38] sm:$0x3]
        %v1799 = vld [vmem:[%s1790 + $0x40] sm:$0xff]
        %v1800 = vld [vmem:[%s1790 + $0x48] sm:$0xff]
        %v1801 = vld [vmem:[%s1790 + $0x50] sm:$0xff]
        %v1802 = vld [vmem:[%s1790 + $0x58] sm:$0x3]
        %v1803 = vld [vmem:[%s1790 + $0x60] sm:$0xff]
        %v1804 = vld [vmem:[%s1790 + $0x68] sm:$0xff]
        %v1805 = vld [vmem:[%s1790 + $0x70] sm:$0xff]
        %v1806 = vld [vmem:[%s1790 + $0x78] sm:$0x3]
        %v1807 = vld [vmem:[%s1790 + $0x80] sm:$0xff]
        %v1808 = vld [vmem:[%s1790 + $0x88] sm:$0xff]
        %v1809 = vld [vmem:[%s1790 + $0x90] sm:$0xff]
        %v1810 = vld [vmem:[%s1790 + $0x98] sm:$0x3]
        %v1811 = vld [vmem:[%s1790 + $0xa0] sm:$0xff]
        %v1812 = vld [vmem:[%s1790 + $0xa8] sm:$0xff]
        %v1813 = vld [vmem:[%s1790 + $0xb0] sm:$0xff]
        %v1814 = vld [vmem:[%s1790 + $0xb8] sm:$0x3]
        %v1815 = vld [vmem:[%s1790 + $0xc0] sm:$0xff]
        %v1816 = vld [vmem:[%s1790 + $0xc8] sm:$0xff]
        %v1817 = vld [vmem:[%s1790 + $0xd0] sm:$0xff]
        %v1818 = vld [vmem:[%s1790 + $0xd8] sm:$0x3]
        %v1819 = vld [vmem:[%s1790 + $0xe0] sm:$0xff]
        %v1820 = vld [vmem:[%s1790 + $0xe8] sm:$0xff]
        %v1821 = vld [vmem:[%s1790 + $0xf0] sm:$0xff]
        %v1822 = vld [vmem:[%s1790 + $0xf8] sm:$0x3]
        %v1823 = vld [vmem:[%s1790 + $0x100] sm:$0xff]
        %v1824 = vld [vmem:[%s1790 + $0x108] sm:$0xff]
        %v1825 = vld [vmem:[%s1790 + $0x110] sm:$0xff]
        %v1826 = vld [vmem:[%s1790 + $0x118] sm:$0x3]
        %v1827 = vld [vmem:[%s1790 + $0x120] sm:$0xff]
        %v1828 = vld [vmem:[%s1790 + $0x128] sm:$0xff]
        %v1829 = vld [vmem:[%s1790 + $0x130] sm:$0xff]
        %v1830 = vld [vmem:[%s1790 + $0x138] sm:$0x3]
        %v1831 = vld [vmem:[%s1790 + $0x140] sm:$0xff]
        %v1832 = vld [vmem:[%s1790 + $0x148] sm:$0xff]
        %v1833 = vld [vmem:[%s1790 + $0x150] sm:$0xff]
        %v1834 = vld [vmem:[%s1790 + $0x158] sm:$0x3]
        %v1835 = vld [vmem:[%s1790 + $0x160] sm:$0xff]
        %v1836 = vld [vmem:[%s1790 + $0x168] sm:$0xff]
        %v1837 = vld [vmem:[%s1790 + $0x170] sm:$0xff]
        %v1838 = vld [vmem:[%s1790 + $0x178] sm:$0x3]
        %v1839 = vld [vmem:[%s1790 + $0x180] sm:$0xff]
        %v1840 = vld [vmem:[%s1790 + $0x188] sm:$0xff]
        %v1841 = vld [vmem:[%s1790 + $0x190] sm:$0xff]
        %v1842 = vld [vmem:[%s1790 + $0x198] sm:$0x3]
        %v1843 = vld [vmem:[%s1790 + $0x1a0] sm:$0xff]
        %v1844 = vld [vmem:[%s1790 + $0x1a8] sm:$0xff]
        %v1845 = vld [vmem:[%s1790 + $0x1b0] sm:$0xff]
        %v1846 = vld [vmem:[%s1790 + $0x1b8] sm:$0x3]
        %v1847 = vld [vmem:[%s1790 + $0x1c0] sm:$0xff]
        %v1848 = vld [vmem:[%s1790 + $0x1c8] sm:$0xff]
        %v1849 = vld [vmem:[%s1790 + $0x1d0] sm:$0xff]
        %v1850 = vld [vmem:[%s1790 + $0x1d8] sm:$0x3]
        %v1851 = vld [vmem:[%s1790 + $0x1e0] sm:$0xff]
        %v1852 = vld [vmem:[%s1790 + $0x1e8] sm:$0xff]
        %v1853 = vld [vmem:[%s1790 + $0x1f0] sm:$0xff]
        %v1854 = vld [vmem:[%s1790 + $0x1f8] sm:$0x3]
        %v1855 = vmax.f32 %v1726, %v1791
        %v1856 = vmax.f32 %v1727, %v1792
        %v1857 = vmax.f32 %v1728, %v1793
        %v1858 = vmax.f32 %v1729, %v1794
        %v1859 = vmax.f32 %v1730, %v1795
        %v1860 = vmax.f32 %v1731, %v1796
        %v1861 = vmax.f32 %v1732, %v1797
        %v1862 = vmax.f32 %v1733, %v1798
        %v1863 = vmax.f32 %v1734, %v1799
        %v1864 = vmax.f32 %v1735, %v1800
        %v1865 = vmax.f32 %v1736, %v1801
        %v1866 = vmax.f32 %v1737, %v1802
        %v1867 = vmax.f32 %v1738, %v1803
        %v1868 = vmax.f32 %v1739, %v1804
        %v1869 = vmax.f32 %v1740, %v1805
        %v1870 = vmax.f32 %v1741, %v1806
        %v1871 = vmax.f32 %v1742, %v1807
        %v1872 = vmax.f32 %v1743, %v1808
        %v1873 = vmax.f32 %v1744, %v1809
        %v1874 = vmax.f32 %v1745, %v1810
        %v1875 = vmax.f32 %v1746, %v1811
        %v1876 = vmax.f32 %v1747, %v1812
        %v1877 = vmax.f32 %v1748, %v1813
        %v1878 = vmax.f32 %v1749, %v1814
        %v1879 = vmax.f32 %v1750, %v1815
        %v1880 = vmax.f32 %v1751, %v1816
        %v1881 = vmax.f32 %v1752, %v1817
        %v1882 = vmax.f32 %v1753, %v1818
        %v1883 = vmax.f32 %v1754, %v1819
        %v1884 = vmax.f32 %v1755, %v1820
        %v1885 = vmax.f32 %v1756, %v1821
        %v1886 = vmax.f32 %v1757, %v1822
        %v1887 = vmax.f32 %v1758, %v1823
        %v1888 = vmax.f32 %v1759, %v1824
        %v1889 = vmax.f32 %v1760, %v1825
        %v1890 = vmax.f32 %v1761, %v1826
        %v1891 = vmax.f32 %v1762, %v1827
        %v1892 = vmax.f32 %v1763, %v1828
        %v1893 = vmax.f32 %v1764, %v1829
        %v1894 = vmax.f32 %v1765, %v1830
        %v1895 = vmax.f32 %v1766, %v1831
        %v1896 = vmax.f32 %v1767, %v1832
        %v1897 = vmax.f32 %v1768, %v1833
        %v1898 = vmax.f32 %v1769, %v1834
        %v1899 = vmax.f32 %v1770, %v1835
        %v1900 = vmax.f32 %v1771, %v1836
        %v1901 = vmax.f32 %v1772, %v1837
        %v1902 = vmax.f32 %v1773, %v1838
        %v1903 = vmax.f32 %v1774, %v1839
        %v1904 = vmax.f32 %v1775, %v1840
        %v1905 = vmax.f32 %v1776, %v1841
        %v1906 = vmax.f32 %v1777, %v1842
        %v1907 = vmax.f32 %v1778, %v1843
        %v1908 = vmax.f32 %v1779, %v1844
        %v1909 = vmax.f32 %v1780, %v1845
        %v1910 = vmax.f32 %v1781, %v1846
        %v1911 = vmax.f32 %v1782, %v1847
        %v1912 = vmax.f32 %v1783, %v1848
        %v1913 = vmax.f32 %v1784, %v1849
        %v1914 = vmax.f32 %v1785, %v1850
        %v1915 = vmax.f32 %v1786, %v1851
        %v1916 = vmax.f32 %v1787, %v1852
        %v1917 = vmax.f32 %v1788, %v1853
        %v1918 = vmax.f32 %v1789, %v1854
        %1919 = vst.msk [vmem:[#allocation3] sm:$0xff] %vm1239, %v1855
        %1920 = vst.msk [vmem:[#allocation3 + $0x8] sm:$0xff] %vm1239, %v1856
        %1921 = vst.msk [vmem:[#allocation3 + $0x10] sm:$0xff] %vm1239, %v1857
        %1922 = vst.msk [vmem:[#allocation3 + $0x18] sm:$0x3] %vm1243, %v1858
        %1923 = vst.msk [vmem:[#allocation3 + $0x20] sm:$0xff] %vm1239, %v1859
        %1924 = vst.msk [vmem:[#allocation3 + $0x28] sm:$0xff] %vm1239, %v1860
        %1925 = vst.msk [vmem:[#allocation3 + $0x30] sm:$0xff] %vm1239, %v1861
        %1926 = vst.msk [vmem:[#allocation3 + $0x38] sm:$0x3] %vm1243, %v1862
        %1927 = vst.msk [vmem:[#allocation3 + $0x40] sm:$0xff] %vm1239, %v1863
        %1928 = vst.msk [vmem:[#allocation3 + $0x48] sm:$0xff] %vm1239, %v1864
        %1929 = vst.msk [vmem:[#allocation3 + $0x50] sm:$0xff] %vm1239, %v1865
        %1930 = vst.msk [vmem:[#allocation3 + $0x58] sm:$0x3] %vm1243, %v1866
        %1931 = vst.msk [vmem:[#allocation3 + $0x60] sm:$0xff] %vm1239, %v1867
        %1932 = vst.msk [vmem:[#allocation3 + $0x68] sm:$0xff] %vm1239, %v1868
        %1933 = vst.msk [vmem:[#allocation3 + $0x70] sm:$0xff] %vm1239, %v1869
        %1934 = vst.msk [vmem:[#allocation3 + $0x78] sm:$0x3] %vm1243, %v1870
        %1935 = vst.msk [vmem:[#allocation3 + $0x80] sm:$0xff] %vm1239, %v1871
        %1936 = vst.msk [vmem:[#allocation3 + $0x88] sm:$0xff] %vm1239, %v1872
        %1937 = vst.msk [vmem:[#allocation3 + $0x90] sm:$0xff] %vm1239, %v1873
        %1938 = vst.msk [vmem:[#allocation3 + $0x98] sm:$0x3] %vm1243, %v1874
        %1939 = vst.msk [vmem:[#allocation3 + $0xa0] sm:$0xff] %vm1239, %v1875
        %1940 = vst.msk [vmem:[#allocation3 + $0xa8] sm:$0xff] %vm1239, %v1876
        %1941 = vst.msk [vmem:[#allocation3 + $0xb0] sm:$0xff] %vm1239, %v1877
        %1942 = vst.msk [vmem:[#allocation3 + $0xb8] sm:$0x3] %vm1243, %v1878
        %1943 = vst.msk [vmem:[#allocation3 + $0xc0] sm:$0xff] %vm1239, %v1879
        %1944 = vst.msk [vmem:[#allocation3 + $0xc8] sm:$0xff] %vm1239, %v1880
        %1945 = vst.msk [vmem:[#allocation3 + $0xd0] sm:$0xff] %vm1239, %v1881
        %1946 = vst.msk [vmem:[#allocation3 + $0xd8] sm:$0x3] %vm1243, %v1882
        %1947 = vst.msk [vmem:[#allocation3 + $0xe0] sm:$0xff] %vm1239, %v1883
        %1948 = vst.msk [vmem:[#allocation3 + $0xe8] sm:$0xff] %vm1239, %v1884
        %1949 = vst.msk [vmem:[#allocation3 + $0xf0] sm:$0xff] %vm1239, %v1885
        %1950 = vst.msk [vmem:[#allocation3 + $0xf8] sm:$0x3] %vm1243, %v1886
        %1951 = vst.msk [vmem:[#allocation3 + $0x100] sm:$0xff] %vm1239, %v1887
        %1952 = vst.msk [vmem:[#allocation3 + $0x108] sm:$0xff] %vm1239, %v1888
        %1953 = vst.msk [vmem:[#allocation3 + $0x110] sm:$0xff] %vm1239, %v1889
        %1954 = vst.msk [vmem:[#allocation3 + $0x118] sm:$0x3] %vm1243, %v1890
        %1955 = vst.msk [vmem:[#allocation3 + $0x120] sm:$0xff] %vm1239, %v1891
        %1956 = vst.msk [vmem:[#allocation3 + $0x128] sm:$0xff] %vm1239, %v1892
        %1957 = vst.msk [vmem:[#allocation3 + $0x130] sm:$0xff] %vm1239, %v1893
        %1958 = vst.msk [vmem:[#allocation3 + $0x138] sm:$0x3] %vm1243, %v1894
        %1959 = vst.msk [vmem:[#allocation3 + $0x140] sm:$0xff] %vm1239, %v1895
        %1960 = vst.msk [vmem:[#allocation3 + $0x148] sm:$0xff] %vm1239, %v1896
        %1961 = vst.msk [vmem:[#allocation3 + $0x150] sm:$0xff] %vm1239, %v1897
        %1962 = vst.msk [vmem:[#allocation3 + $0x158] sm:$0x3] %vm1243, %v1898
        %1963 = vst.msk [vmem:[#allocation3 + $0x160] sm:$0xff] %vm1239, %v1899
        %1964 = vst.msk [vmem:[#allocation3 + $0x168] sm:$0xff] %vm1239, %v1900
        %1965 = vst.msk [vmem:[#allocation3 + $0x170] sm:$0xff] %vm1239, %v1901
        %1966 = vst.msk [vmem:[#allocation3 + $0x178] sm:$0x3] %vm1243, %v1902
        %1967 = vst.msk [vmem:[#allocation3 + $0x180] sm:$0xff] %vm1239, %v1903
        %1968 = vst.msk [vmem:[#allocation3 + $0x188] sm:$0xff] %vm1239, %v1904
        %1969 = vst.msk [vmem:[#allocation3 + $0x190] sm:$0xff] %vm1239, %v1905
        %1970 = vst.msk [vmem:[#allocation3 + $0x198] sm:$0x3] %vm1243, %v1906
        %1971 = vst.msk [vmem:[#allocation3 + $0x1a0] sm:$0xff] %vm1239, %v1907
        %1972 = vst.msk [vmem:[#allocation3 + $0x1a8] sm:$0xff] %vm1239, %v1908
        %1973 = vst.msk [vmem:[#allocation3 + $0x1b0] sm:$0xff] %vm1239, %v1909
        %1974 = vst.msk [vmem:[#allocation3 + $0x1b8] sm:$0x3] %vm1243, %v1910
        %1975 = vst.msk [vmem:[#allocation3 + $0x1c0] sm:$0xff] %vm1239, %v1911
        %1976 = vst.msk [vmem:[#allocation3 + $0x1c8] sm:$0xff] %vm1239, %v1912
        %1977 = vst.msk [vmem:[#allocation3 + $0x1d0] sm:$0xff] %vm1239, %v1913
        %1978 = vst.msk [vmem:[#allocation3 + $0x1d8] sm:$0x3] %vm1243, %v1914
        %1979 = vst.msk [vmem:[#allocation3 + $0x1e0] sm:$0xff] %vm1239, %v1915
        %1980 = vst.msk [vmem:[#allocation3 + $0x1e8] sm:$0xff] %vm1239, %v1916
        %1981 = vst.msk [vmem:[#allocation3 + $0x1f0] sm:$0xff] %vm1239, %v1917
        %1982 = vst.msk [vmem:[#allocation3 + $0x1f8] sm:$0x3] %vm1243, %v1918
        %v1983 = vld [vmem:[#allocation3 + $0x6] sm:$0xff]
        %v1984 = vld [vmem:[#allocation3 + $0xe] sm:$0xff]
        %v1985 = vld [vmem:[#allocation3 + $0x26] sm:$0xff]
        %v1986 = vld [vmem:[#allocation3 + $0x2e] sm:$0xff]
        %v1987 = vld [vmem:[#allocation3 + $0x46] sm:$0xff]
        %v1988 = vld [vmem:[#allocation3 + $0x4e] sm:$0xff]
        %v1989 = vld [vmem:[#allocation3 + $0x66] sm:$0xff]
        %v1990 = vld [vmem:[#allocation3 + $0x6e] sm:$0xff]
        %v1991 = vld [vmem:[#allocation3 + $0x86] sm:$0xff]
        %v1992 = vld [vmem:[#allocation3 + $0x8e] sm:$0xff]
        %v1993 = vld [vmem:[#allocation3 + $0xa6] sm:$0xff]
        %v1994 = vld [vmem:[#allocation3 + $0xae] sm:$0xff]
        %v1995 = vld [vmem:[#allocation3 + $0xc6] sm:$0xff]
        %v1996 = vld [vmem:[#allocation3 + $0xce] sm:$0xff]
        %v1997 = vld [vmem:[#allocation3 + $0xe6] sm:$0xff]
        %v1998 = vld [vmem:[#allocation3 + $0xee] sm:$0xff]
        %v1999 = vld [vmem:[#allocation3 + $0x106] sm:$0xff]
        %v2000 = vld [vmem:[#allocation3 + $0x10e] sm:$0xff]
        %v2001 = vld [vmem:[#allocation3 + $0x126] sm:$0xff]
        %v2002 = vld [vmem:[#allocation3 + $0x12e] sm:$0xff]
        %v2003 = vld [vmem:[#allocation3 + $0x146] sm:$0xff]
        %v2004 = vld [vmem:[#allocation3 + $0x14e] sm:$0xff]
        %v2005 = vld [vmem:[#allocation3 + $0x166] sm:$0xff]
        %v2006 = vld [vmem:[#allocation3 + $0x16e] sm:$0xff]
        %v2007 = vld [vmem:[#allocation3 + $0x186] sm:$0xff]
        %v2008 = vld [vmem:[#allocation3 + $0x18e] sm:$0xff]
        %v2009 = vld [vmem:[#allocation3 + $0x1a6] sm:$0xff]
        %v2010 = vld [vmem:[#allocation3 + $0x1ae] sm:$0xff]
        %v2011 = vld [vmem:[#allocation3 + $0x1c6] sm:$0xff]
        %v2012 = vld [vmem:[#allocation3 + $0x1ce] sm:$0xff]
        %v2013 = vld [vmem:[#allocation3 + $0x1e6] sm:$0xff]
        %v2014 = vld [vmem:[#allocation3 + $0x1ee] sm:$0xff]
        %v2015 = vld [vmem:[#allocation3 + $0x7] sm:$0xff]
        %v2016 = vld [vmem:[#allocation3 + $0xf] sm:$0xff]
        %v2017 = vld [vmem:[#allocation3 + $0x27] sm:$0xff]
        %v2018 = vld [vmem:[#allocation3 + $0x2f] sm:$0xff]
        %v2019 = vld [vmem:[#allocation3 + $0x47] sm:$0xff]
        %v2020 = vld [vmem:[#allocation3 + $0x4f] sm:$0xff]
        %v2021 = vld [vmem:[#allocation3 + $0x67] sm:$0xff]
        %v2022 = vld [vmem:[#allocation3 + $0x6f] sm:$0xff]
        %v2023 = vld [vmem:[#allocation3 + $0x87] sm:$0xff]
        %v2024 = vld [vmem:[#allocation3 + $0x8f] sm:$0xff]
        %v2025 = vld [vmem:[#allocation3 + $0xa7] sm:$0xff]
        %v2026 = vld [vmem:[#allocation3 + $0xaf] sm:$0xff]
        %v2027 = vld [vmem:[#allocation3 + $0xc7] sm:$0xff]
        %v2028 = vld [vmem:[#allocation3 + $0xcf] sm:$0xff]
        %v2029 = vld [vmem:[#allocation3 + $0xe7] sm:$0xff]
        %v2030 = vld [vmem:[#allocation3 + $0xef] sm:$0xff]
        %v2031 = vld [vmem:[#allocation3 + $0x107] sm:$0xff]
        %v2032 = vld [vmem:[#allocation3 + $0x10f] sm:$0xff]
        %v2033 = vld [vmem:[#allocation3 + $0x127] sm:$0xff]
        %v2034 = vld [vmem:[#allocation3 + $0x12f] sm:$0xff]
        %v2035 = vld [vmem:[#allocation3 + $0x147] sm:$0xff]
        %v2036 = vld [vmem:[#allocation3 + $0x14f] sm:$0xff]
        %v2037 = vld [vmem:[#allocation3 + $0x167] sm:$0xff]
        %v2038 = vld [vmem:[#allocation3 + $0x16f] sm:$0xff]
        %v2039 = vld [vmem:[#allocation3 + $0x187] sm:$0xff]
        %v2040 = vld [vmem:[#allocation3 + $0x18f] sm:$0xff]
        %v2041 = vld [vmem:[#allocation3 + $0x1a7] sm:$0xff]
        %v2042 = vld [vmem:[#allocation3 + $0x1af] sm:$0xff]
        %v2043 = vld [vmem:[#allocation3 + $0x1c7] sm:$0xff]
        %v2044 = vld [vmem:[#allocation3 + $0x1cf] sm:$0xff]
        %v2045 = vld [vmem:[#allocation3 + $0x1e7] sm:$0xff]
        %v2046 = vld [vmem:[#allocation3 + $0x1ef] sm:$0xff]
        %v2047 = vmax.f32 %v1983, %v2015
        %v2048 = vmax.f32 %v1984, %v2016
        %v2049 = vmax.f32 %v1985, %v2017
        %v2050 = vmax.f32 %v1986, %v2018
        %v2051 = vmax.f32 %v1987, %v2019
        %v2052 = vmax.f32 %v1988, %v2020
        %v2053 = vmax.f32 %v1989, %v2021
        %v2054 = vmax.f32 %v1990, %v2022
        %v2055 = vmax.f32 %v1991, %v2023
        %v2056 = vmax.f32 %v1992, %v2024
        %v2057 = vmax.f32 %v1993, %v2025
        %v2058 = vmax.f32 %v1994, %v2026
        %v2059 = vmax.f32 %v1995, %v2027
        %v2060 = vmax.f32 %v1996, %v2028
        %v2061 = vmax.f32 %v1997, %v2029
        %v2062 = vmax.f32 %v1998, %v2030
        %v2063 = vmax.f32 %v1999, %v2031
        %v2064 = vmax.f32 %v2000, %v2032
        %v2065 = vmax.f32 %v2001, %v2033
        %v2066 = vmax.f32 %v2002, %v2034
        %v2067 = vmax.f32 %v2003, %v2035
        %v2068 = vmax.f32 %v2004, %v2036
        %v2069 = vmax.f32 %v2005, %v2037
        %v2070 = vmax.f32 %v2006, %v2038
        %v2071 = vmax.f32 %v2007, %v2039
        %v2072 = vmax.f32 %v2008, %v2040
        %v2073 = vmax.f32 %v2009, %v2041
        %v2074 = vmax.f32 %v2010, %v2042
        %v2075 = vmax.f32 %v2011, %v2043
        %v2076 = vmax.f32 %v2012, %v2044
        %v2077 = vmax.f32 %v2013, %v2045
        %v2078 = vmax.f32 %v2014, %v2046
        %v2079 = vld [vmem:[#allocation3 + $0x8] sm:$0xff]
        %v2080 = vld [vmem:[#allocation3 + $0x10] sm:$0xff]
        %v2081 = vld [vmem:[#allocation3 + $0x28] sm:$0xff]
        %v2082 = vld [vmem:[#allocation3 + $0x30] sm:$0xff]
        %v2083 = vld [vmem:[#allocation3 + $0x48] sm:$0xff]
        %v2084 = vld [vmem:[#allocation3 + $0x50] sm:$0xff]
        %v2085 = vld [vmem:[#allocation3 + $0x68] sm:$0xff]
        %v2086 = vld [vmem:[#allocation3 + $0x70] sm:$0xff]
        %v2087 = vld [vmem:[#allocation3 + $0x88] sm:$0xff]
        %v2088 = vld [vmem:[#allocation3 + $0x90] sm:$0xff]
        %v2089 = vld [vmem:[#allocation3 + $0xa8] sm:$0xff]
        %v2090 = vld [vmem:[#allocation3 + $0xb0] sm:$0xff]
        %v2091 = vld [vmem:[#allocation3 + $0xc8] sm:$0xff]
        %v2092 = vld [vmem:[#allocation3 + $0xd0] sm:$0xff]
        %v2093 = vld [vmem:[#allocation3 + $0xe8] sm:$0xff]
        %v2094 = vld [vmem:[#allocation3 + $0xf0] sm:$0xff]
        %v2095 = vld [vmem:[#allocation3 + $0x108] sm:$0xff]
        %v2096 = vld [vmem:[#allocation3 + $0x110] sm:$0xff]
        %v2097 = vld [vmem:[#allocation3 + $0x128] sm:$0xff]
        %v2098 = vld [vmem:[#allocation3 + $0x130] sm:$0xff]
        %v2099 = vld [vmem:[#allocation3 + $0x148] sm:$0xff]
        %v2100 = vld [vmem:[#allocation3 + $0x150] sm:$0xff]
        %v2101 = vld [vmem:[#allocation3 + $0x168] sm:$0xff]
        %v2102 = vld [vmem:[#allocation3 + $0x170] sm:$0xff]
        %v2103 = vld [vmem:[#allocation3 + $0x188] sm:$0xff]
        %v2104 = vld [vmem:[#allocation3 + $0x190] sm:$0xff]
        %v2105 = vld [vmem:[#allocation3 + $0x1a8] sm:$0xff]
        %v2106 = vld [vmem:[#allocation3 + $0x1b0] sm:$0xff]
        %v2107 = vld [vmem:[#allocation3 + $0x1c8] sm:$0xff]
        %v2108 = vld [vmem:[#allocation3 + $0x1d0] sm:$0xff]
        %v2109 = vld [vmem:[#allocation3 + $0x1e8] sm:$0xff]
        %v2110 = vld [vmem:[#allocation3 + $0x1f0] sm:$0xff]
        %v2111 = vmax.f32 %v2047, %v2079
        %v2112 = vmax.f32 %v2048, %v2080
        %v2113 = vmax.f32 %v2049, %v2081
        %v2114 = vmax.f32 %v2050, %v2082
        %v2115 = vmax.f32 %v2051, %v2083
        %v2116 = vmax.f32 %v2052, %v2084
        %v2117 = vmax.f32 %v2053, %v2085
        %v2118 = vmax.f32 %v2054, %v2086
        %v2119 = vmax.f32 %v2055, %v2087
        %v2120 = vmax.f32 %v2056, %v2088
        %v2121 = vmax.f32 %v2057, %v2089
        %v2122 = vmax.f32 %v2058, %v2090
        %v2123 = vmax.f32 %v2059, %v2091
        %v2124 = vmax.f32 %v2060, %v2092
        %v2125 = vmax.f32 %v2061, %v2093
        %v2126 = vmax.f32 %v2062, %v2094
        %v2127 = vmax.f32 %v2063, %v2095
        %v2128 = vmax.f32 %v2064, %v2096
        %v2129 = vmax.f32 %v2065, %v2097
        %v2130 = vmax.f32 %v2066, %v2098
        %v2131 = vmax.f32 %v2067, %v2099
        %v2132 = vmax.f32 %v2068, %v2100
        %v2133 = vmax.f32 %v2069, %v2101
        %v2134 = vmax.f32 %v2070, %v2102
        %v2135 = vmax.f32 %v2071, %v2103
        %v2136 = vmax.f32 %v2072, %v2104
        %v2137 = vmax.f32 %v2073, %v2105
        %v2138 = vmax.f32 %v2074, %v2106
        %v2139 = vmax.f32 %v2075, %v2107
        %v2140 = vmax.f32 %v2076, %v2108
        %v2141 = vmax.f32 %v2077, %v2109
        %v2142 = vmax.f32 %v2078, %v2110
        %v2143 = vld [vmem:[#allocation3 + $0x9] sm:$0xff]
        %v2144 = vld [vmem:[#allocation3 + $0x11] sm:$0xff]
        %v2145 = vld [vmem:[#allocation3 + $0x29] sm:$0xff]
        %v2146 = vld [vmem:[#allocation3 + $0x31] sm:$0xff]
        %v2147 = vld [vmem:[#allocation3 + $0x49] sm:$0xff]
        %v2148 = vld [vmem:[#allocation3 + $0x51] sm:$0xff]
        %v2149 = vld [vmem:[#allocation3 + $0x69] sm:$0xff]
        %v2150 = vld [vmem:[#allocation3 + $0x71] sm:$0xff]
        %v2151 = vld [vmem:[#allocation3 + $0x89] sm:$0xff]
        %v2152 = vld [vmem:[#allocation3 + $0x91] sm:$0xff]
        %v2153 = vld [vmem:[#allocation3 + $0xa9] sm:$0xff]
        %v2154 = vld [vmem:[#allocation3 + $0xb1] sm:$0xff]
        %v2155 = vld [vmem:[#allocation3 + $0xc9] sm:$0xff]
        %v2156 = vld [vmem:[#allocation3 + $0xd1] sm:$0xff]
        %v2157 = vld [vmem:[#allocation3 + $0xe9] sm:$0xff]
        %v2158 = vld [vmem:[#allocation3 + $0xf1] sm:$0xff]
        %v2159 = vld [vmem:[#allocation3 + $0x109] sm:$0xff]
        %v2160 = vld [vmem:[#allocation3 + $0x111] sm:$0xff]
        %v2161 = vld [vmem:[#allocation3 + $0x129] sm:$0xff]
        %v2162 = vld [vmem:[#allocation3 + $0x131] sm:$0xff]
        %v2163 = vld [vmem:[#allocation3 + $0x149] sm:$0xff]
        %v2164 = vld [vmem:[#allocation3 + $0x151] sm:$0xff]
        %v2165 = vld [vmem:[#allocation3 + $0x169] sm:$0xff]
        %v2166 = vld [vmem:[#allocation3 + $0x171] sm:$0xff]
        %v2167 = vld [vmem:[#allocation3 + $0x189] sm:$0xff]
        %v2168 = vld [vmem:[#allocation3 + $0x191] sm:$0xff]
        %v2169 = vld [vmem:[#allocation3 + $0x1a9] sm:$0xff]
        %v2170 = vld [vmem:[#allocation3 + $0x1b1] sm:$0xff]
        %v2171 = vld [vmem:[#allocation3 + $0x1c9] sm:$0xff]
        %v2172 = vld [vmem:[#allocation3 + $0x1d1] sm:$0xff]
        %v2173 = vld [vmem:[#allocation3 + $0x1e9] sm:$0xff]
        %v2174 = vld [vmem:[#allocation3 + $0x1f1] sm:$0xff]
        %v2175 = vmax.f32 %v2111, %v2143
        %v2176 = vmax.f32 %v2112, %v2144
        %v2177 = vmax.f32 %v2113, %v2145
        %v2178 = vmax.f32 %v2114, %v2146
        %v2179 = vmax.f32 %v2115, %v2147
        %v2180 = vmax.f32 %v2116, %v2148
        %v2181 = vmax.f32 %v2117, %v2149
        %v2182 = vmax.f32 %v2118, %v2150
        %v2183 = vmax.f32 %v2119, %v2151
        %v2184 = vmax.f32 %v2120, %v2152
        %v2185 = vmax.f32 %v2121, %v2153
        %v2186 = vmax.f32 %v2122, %v2154
        %v2187 = vmax.f32 %v2123, %v2155
        %v2188 = vmax.f32 %v2124, %v2156
        %v2189 = vmax.f32 %v2125, %v2157
        %v2190 = vmax.f32 %v2126, %v2158
        %v2191 = vmax.f32 %v2127, %v2159
        %v2192 = vmax.f32 %v2128, %v2160
        %v2193 = vmax.f32 %v2129, %v2161
        %v2194 = vmax.f32 %v2130, %v2162
        %v2195 = vmax.f32 %v2131, %v2163
        %v2196 = vmax.f32 %v2132, %v2164
        %v2197 = vmax.f32 %v2133, %v2165
        %v2198 = vmax.f32 %v2134, %v2166
        %v2199 = vmax.f32 %v2135, %v2167
        %v2200 = vmax.f32 %v2136, %v2168
        %v2201 = vmax.f32 %v2137, %v2169
        %v2202 = vmax.f32 %v2138, %v2170
        %v2203 = vmax.f32 %v2139, %v2171
        %v2204 = vmax.f32 %v2140, %v2172
        %v2205 = vmax.f32 %v2141, %v2173
        %v2206 = vmax.f32 %v2142, %v2174
        %v2207 = vld [vmem:[#allocation3 + $0xa] sm:$0xff]
        %v2208 = vld [vmem:[#allocation3 + $0x12] sm:$0xff]
        %v2209 = vld [vmem:[#allocation3 + $0x2a] sm:$0xff]
        %v2210 = vld [vmem:[#allocation3 + $0x32] sm:$0xff]
        %v2211 = vld [vmem:[#allocation3 + $0x4a] sm:$0xff]
        %v2212 = vld [vmem:[#allocation3 + $0x52] sm:$0xff]
        %v2213 = vld [vmem:[#allocation3 + $0x6a] sm:$0xff]
        %v2214 = vld [vmem:[#allocation3 + $0x72] sm:$0xff]
        %v2215 = vld [vmem:[#allocation3 + $0x8a] sm:$0xff]
        %v2216 = vld [vmem:[#allocation3 + $0x92] sm:$0xff]
        %v2217 = vld [vmem:[#allocation3 + $0xaa] sm:$0xff]
        %v2218 = vld [vmem:[#allocation3 + $0xb2] sm:$0xff]
        %v2219 = vld [vmem:[#allocation3 + $0xca] sm:$0xff]
        %v2220 = vld [vmem:[#allocation3 + $0xd2] sm:$0xff]
        %v2221 = vld [vmem:[#allocation3 + $0xea] sm:$0xff]
        %v2222 = vld [vmem:[#allocation3 + $0xf2] sm:$0xff]
        %v2223 = vld [vmem:[#allocation3 + $0x10a] sm:$0xff]
        %v2224 = vld [vmem:[#allocation3 + $0x112] sm:$0xff]
        %v2225 = vld [vmem:[#allocation3 + $0x12a] sm:$0xff]
        %v2226 = vld [vmem:[#allocation3 + $0x132] sm:$0xff]
        %v2227 = vld [vmem:[#allocation3 + $0x14a] sm:$0xff]
        %v2228 = vld [vmem:[#allocation3 + $0x152] sm:$0xff]
        %v2229 = vld [vmem:[#allocation3 + $0x16a] sm:$0xff]
        %v2230 = vld [vmem:[#allocation3 + $0x172] sm:$0xff]
        %v2231 = vld [vmem:[#allocation3 + $0x18a] sm:$0xff]
        %v2232 = vld [vmem:[#allocation3 + $0x192] sm:$0xff]
        %v2233 = vld [vmem:[#allocation3 + $0x1aa] sm:$0xff]
        %v2234 = vld [vmem:[#allocation3 + $0x1b2] sm:$0xff]
        %v2235 = vld [vmem:[#allocation3 + $0x1ca] sm:$0xff]
        %v2236 = vld [vmem:[#allocation3 + $0x1d2] sm:$0xff]
        %v2237 = vld [vmem:[#allocation3 + $0x1ea] sm:$0xff]
        %v2238 = vld [vmem:[#allocation3 + $0x1f2] sm:$0xff]
        %v2239 = vmax.f32 %v2175, %v2207
        %v2240 = vmax.f32 %v2176, %v2208
        %v2241 = vmax.f32 %v2177, %v2209
        %v2242 = vmax.f32 %v2178, %v2210
        %v2243 = vmax.f32 %v2179, %v2211
        %v2244 = vmax.f32 %v2180, %v2212
        %v2245 = vmax.f32 %v2181, %v2213
        %v2246 = vmax.f32 %v2182, %v2214
        %v2247 = vmax.f32 %v2183, %v2215
        %v2248 = vmax.f32 %v2184, %v2216
        %v2249 = vmax.f32 %v2185, %v2217
        %v2250 = vmax.f32 %v2186, %v2218
        %v2251 = vmax.f32 %v2187, %v2219
        %v2252 = vmax.f32 %v2188, %v2220
        %v2253 = vmax.f32 %v2189, %v2221
        %v2254 = vmax.f32 %v2190, %v2222
        %v2255 = vmax.f32 %v2191, %v2223
        %v2256 = vmax.f32 %v2192, %v2224
        %v2257 = vmax.f32 %v2193, %v2225
        %v2258 = vmax.f32 %v2194, %v2226
        %v2259 = vmax.f32 %v2195, %v2227
        %v2260 = vmax.f32 %v2196, %v2228
        %v2261 = vmax.f32 %v2197, %v2229
        %v2262 = vmax.f32 %v2198, %v2230
        %v2263 = vmax.f32 %v2199, %v2231
        %v2264 = vmax.f32 %v2200, %v2232
        %v2265 = vmax.f32 %v2201, %v2233
        %v2266 = vmax.f32 %v2202, %v2234
        %v2267 = vmax.f32 %v2203, %v2235
        %v2268 = vmax.f32 %v2204, %v2236
        %v2269 = vmax.f32 %v2205, %v2237
        %v2270 = vmax.f32 %v2206, %v2238
        %v2271 = vld [vmem:[%s406] sm:$0xf]
        %v2272 = vpack.c.bf16 %v2240, %v2239
        %v2273 = vpack.c.bf16 %v2242, %v2241
        %v2274 = vpack.c.bf16 %v2244, %v2243
        %v2275 = vpack.c.bf16 %v2246, %v2245
        %v2276 = vpack.c.bf16 %v2248, %v2247
        %v2277 = vpack.c.bf16 %v2250, %v2249
        %v2278 = vpack.c.bf16 %v2252, %v2251
        %v2279 = vpack.c.bf16 %v2254, %v2253
        %v2280 = vpack.c.bf16 %v2256, %v2255
        %v2281 = vpack.c.bf16 %v2258, %v2257
        %v2282 = vpack.c.bf16 %v2260, %v2259
        %v2283 = vpack.c.bf16 %v2262, %v2261
        %v2284 = vpack.c.bf16 %v2264, %v2263
        %v2285 = vpack.c.bf16 %v2266, %v2265
        %v2286 = vpack.c.bf16 %v2268, %v2267
        %v2287 = vpack.c.bf16 %v2270, %v2269
        %v2289 = vsel %vm1239, %v2271, 0
        %v2292 = vsel %vm1239, %v2272, 0
        %v2295 = vsel %vm1239, %v2273, 0
        %v2298 = vsel %vm1239, %v2274, 0
        %v2301 = vsel %vm1239, %v2275, 0
        %v2304 = vsel %vm1239, %v2276, 0
        %v2307 = vsel %vm1239, %v2277, 0
        %v2310 = vsel %vm1239, %v2278, 0
        %v2313 = vsel %vm1239, %v2279, 0
        %v2316 = vsel %vm1239, %v2280, 0
        %v2319 = vsel %vm1239, %v2281, 0
        %v2322 = vsel %vm1239, %v2282, 0
        %v2325 = vsel %vm1239, %v2283, 0
        %v2328 = vsel %vm1239, %v2284, 0
        %v2331 = vsel %vm1239, %v2285, 0
        %v2334 = vsel %vm1239, %v2286, 0
        %v2337 = vsel %vm1239, %v2287, 0
        %2339 = vmatpush.bf16.xpose.msra.mxu0 %v2313
        %2340 = vmatpush.bf16.xpose.msra.mxu0 %v2310
        %2341 = vmatpush.bf16.xpose.msra.mxu0 %v2307
        %2342 = vmatpush.bf16.xpose.msra.mxu0 %v2304
        %2343 = vmatpush.bf16.xpose.msra.mxu0 %v2301
        %2344 = vmatpush.bf16.xpose.msra.mxu0 %v2298
        %2345 = vmatpush.bf16.xpose.msra.mxu0 %v2295
        %2346 = vmatpush.bf16.xpose.msra.mxu0 %v2292
        %2347 = vmatmul.bf16.gmra.mxu0 %v2289
        %v2348 = vpop.f32.mrf.mxu0
        %v2349 = vadd.f32 0.0, %v2348
        %v2350 = vpop.f32.mrf.mxu0
        %2351 = vdwg.mxu0
        %2352 = vmatpush.bf16.xpose.msra.mxu0 %v2337
        %2353 = vmatpush.bf16.xpose.msra.mxu0 %v2334
        %2354 = vmatpush.bf16.xpose.msra.mxu0 %v2331
        %2355 = vmatpush.bf16.xpose.msra.mxu0 %v2328
        %2356 = vmatpush.bf16.xpose.msra.mxu0 %v2325
        %2357 = vmatpush.bf16.xpose.msra.mxu0 %v2322
        %2358 = vmatpush.bf16.xpose.msra.mxu0 %v2319
        %2359 = vmatpush.bf16.xpose.msra.mxu0 %v2316
        %2360 = vmatmul.bf16.gmra.mxu0 %v2289
        %v2361 = vpop.f32.mrf.mxu0
        %v2362 = vadd.f32 0.0, %v2361
        %v2363 = vpop.f32.mrf.mxu0
        %2364 = vdwg.mxu0
        %v2366 = vsel %vm1239, %v1291, 0
        %v2369 = vsel %vm1239, %v1292, 0
        %v2372 = vsel %vm1239, %v1293, 0
        %v2375 = vsel %vm1239, %v1294, 0
        %v2378 = vsel %vm1239, %v1295, 0
        %v2381 = vsel %vm1239, %v1296, 0
        %v2384 = vsel %vm1239, %v1297, 0
        %v2387 = vsel %vm1239, %v1298, 0
        %v2390 = vsel %vm1239, %v1299, 0
        %v2393 = vsel %vm1239, %v1300, 0
        %v2396 = vsel %vm1239, %v1301, 0
        %v2399 = vsel %vm1239, %v1302, 0
        %v2402 = vsel %vm1239, %v1303, 0
        %v2405 = vsel %vm1239, %v1304, 0
        %v2408 = vsel %vm1239, %v1305, 0
        %v2411 = vsel %vm1239, %v1306, 0
        %v2414 = vsel %vm1239, %v1307, 0
        %2416 = vmatpush.bf16.xpose.msra.mxu0 %v2390
        %2417 = vmatpush.bf16.xpose.msra.mxu0 %v2387
        %2418 = vmatpush.bf16.xpose.msra.mxu0 %v2384
        %2419 = vmatpush.bf16.xpose.msra.mxu0 %v2381
        %2420 = vmatpush.bf16.xpose.msra.mxu0 %v2378
        %2421 = vmatpush.bf16.xpose.msra.mxu0 %v2375
        %2422 = vmatpush.bf16.xpose.msra.mxu0 %v2372
        %2423 = vmatpush.bf16.xpose.msra.mxu0 %v2369
        %2424 = vmatmul.bf16.gmra.mxu0 %v2366
        %v2425 = vpop.f32.mrf.mxu0
        %v2426 = vadd.f32 %v2349, %v2425
        %v2427 = vpop.f32.mrf.mxu0
        %2428 = vdwg.mxu0
        %2429 = vmatpush.bf16.xpose.msra.mxu0 %v2414
        %2430 = vmatpush.bf16.xpose.msra.mxu0 %v2411
        %2431 = vmatpush.bf16.xpose.msra.mxu0 %v2408
        %2432 = vmatpush.bf16.xpose.msra.mxu0 %v2405
        %2433 = vmatpush.bf16.xpose.msra.mxu0 %v2402
        %2434 = vmatpush.bf16.xpose.msra.mxu0 %v2399
        %2435 = vmatpush.bf16.xpose.msra.mxu0 %v2396
        %2436 = vmatpush.bf16.xpose.msra.mxu0 %v2393
        %2437 = vmatmul.bf16.gmra.mxu0 %v2366
        %v2438 = vpop.f32.mrf.mxu0
        %v2439 = vadd.f32 %v2362, %v2438
        %v2440 = vpop.f32.mrf.mxu0
        %2441 = vdwg.mxu0
        %2442 = vst.msk [vmem:[%s1258 + $0x8] sm:$0xff] %vm1239, %v2239
        %2443 = vst.msk [vmem:[%s1258 + $0x10] sm:$0xff] %vm1239, %v2240
        %2444 = vst.msk [vmem:[%s1258 + $0x28] sm:$0xff] %vm1239, %v2241
        %2445 = vst.msk [vmem:[%s1258 + $0x30] sm:$0xff] %vm1239, %v2242
        %2446 = vst.msk [vmem:[%s1258 + $0x48] sm:$0xff] %vm1239, %v2243
        %2447 = vst.msk [vmem:[%s1258 + $0x50] sm:$0xff] %vm1239, %v2244
        %2448 = vst.msk [vmem:[%s1258 + $0x68] sm:$0xff] %vm1239, %v2245
        %2449 = vst.msk [vmem:[%s1258 + $0x70] sm:$0xff] %vm1239, %v2246
        %2450 = vst.msk [vmem:[%s1258 + $0x88] sm:$0xff] %vm1239, %v2247
        %2451 = vst.msk [vmem:[%s1258 + $0x90] sm:$0xff] %vm1239, %v2248
        %2452 = vst.msk [vmem:[%s1258 + $0xa8] sm:$0xff] %vm1239, %v2249
        %2453 = vst.msk [vmem:[%s1258 + $0xb0] sm:$0xff] %vm1239, %v2250
        %2454 = vst.msk [vmem:[%s1258 + $0xc8] sm:$0xff] %vm1239, %v2251
        %2455 = vst.msk [vmem:[%s1258 + $0xd0] sm:$0xff] %vm1239, %v2252
        %2456 = vst.msk [vmem:[%s1258 + $0xe8] sm:$0xff] %vm1239, %v2253
        %2457 = vst.msk [vmem:[%s1258 + $0xf0] sm:$0xff] %vm1239, %v2254
        %2458 = vst.msk [vmem:[%s1258 + $0x108] sm:$0xff] %vm1239, %v2255
        %2459 = vst.msk [vmem:[%s1258 + $0x110] sm:$0xff] %vm1239, %v2256
        %2460 = vst.msk [vmem:[%s1258 + $0x128] sm:$0xff] %vm1239, %v2257
        %2461 = vst.msk [vmem:[%s1258 + $0x130] sm:$0xff] %vm1239, %v2258
        %2462 = vst.msk [vmem:[%s1258 + $0x148] sm:$0xff] %vm1239, %v2259
        %2463 = vst.msk [vmem:[%s1258 + $0x150] sm:$0xff] %vm1239, %v2260
        %2464 = vst.msk [vmem:[%s1258 + $0x168] sm:$0xff] %vm1239, %v2261
        %2465 = vst.msk [vmem:[%s1258 + $0x170] sm:$0xff] %vm1239, %v2262
        %2466 = vst.msk [vmem:[%s1258 + $0x188] sm:$0xff] %vm1239, %v2263
        %2467 = vst.msk [vmem:[%s1258 + $0x190] sm:$0xff] %vm1239, %v2264
        %2468 = vst.msk [vmem:[%s1258 + $0x1a8] sm:$0xff] %vm1239, %v2265
        %2469 = vst.msk [vmem:[%s1258 + $0x1b0] sm:$0xff] %vm1239, %v2266
        %2470 = vst.msk [vmem:[%s1258 + $0x1c8] sm:$0xff] %vm1239, %v2267
        %2471 = vst.msk [vmem:[%s1258 + $0x1d0] sm:$0xff] %vm1239, %v2268
        %2472 = vst.msk [vmem:[%s1258 + $0x1e8] sm:$0xff] %vm1239, %v2269
        %2473 = vst.msk [vmem:[%s1258 + $0x1f0] sm:$0xff] %vm1239, %v2270
        %v2474 = vld [vmem:[#allocation2] sm:$0xff]
        %v2475 = vld [vmem:[#allocation2 + $0x8] sm:$0xff]
        %v2476 = vld [vmem:[#allocation2 + $0x10] sm:$0xff]
        %v2477 = vld [vmem:[#allocation2 + $0x18] sm:$0x3]
        %v2478 = vld [vmem:[#allocation2 + $0x20] sm:$0xff]
        %v2479 = vld [vmem:[#allocation2 + $0x28] sm:$0xff]
        %v2480 = vld [vmem:[#allocation2 + $0x30] sm:$0xff]
        %v2481 = vld [vmem:[#allocation2 + $0x38] sm:$0x3]
        %v2482 = vld [vmem:[#allocation2 + $0x40] sm:$0xff]
        %v2483 = vld [vmem:[#allocation2 + $0x48] sm:$0xff]
        %v2484 = vld [vmem:[#allocation2 + $0x50] sm:$0xff]
        %v2485 = vld [vmem:[#allocation2 + $0x58] sm:$0x3]
        %v2486 = vld [vmem:[#allocation2 + $0x60] sm:$0xff]
        %v2487 = vld [vmem:[#allocation2 + $0x68] sm:$0xff]
        %v2488 = vld [vmem:[#allocation2 + $0x70] sm:$0xff]
        %v2489 = vld [vmem:[#allocation2 + $0x78] sm:$0x3]
        %v2490 = vld [vmem:[#allocation2 + $0x80] sm:$0xff]
        %v2491 = vld [vmem:[#allocation2 + $0x88] sm:$0xff]
        %v2492 = vld [vmem:[#allocation2 + $0x90] sm:$0xff]
        %v2493 = vld [vmem:[#allocation2 + $0x98] sm:$0x3]
        %v2494 = vld [vmem:[#allocation2 + $0xa0] sm:$0xff]
        %v2495 = vld [vmem:[#allocation2 + $0xa8] sm:$0xff]
        %v2496 = vld [vmem:[#allocation2 + $0xb0] sm:$0xff]
        %v2497 = vld [vmem:[#allocation2 + $0xb8] sm:$0x3]
        %v2498 = vld [vmem:[#allocation2 + $0xc0] sm:$0xff]
        %v2499 = vld [vmem:[#allocation2 + $0xc8] sm:$0xff]
        %v2500 = vld [vmem:[#allocation2 + $0xd0] sm:$0xff]
        %v2501 = vld [vmem:[#allocation2 + $0xd8] sm:$0x3]
        %v2502 = vld [vmem:[#allocation2 + $0xe0] sm:$0xff]
        %v2503 = vld [vmem:[#allocation2 + $0xe8] sm:$0xff]
        %v2504 = vld [vmem:[#allocation2 + $0xf0] sm:$0xff]
        %v2505 = vld [vmem:[#allocation2 + $0xf8] sm:$0x3]
        %v2506 = vld [vmem:[#allocation2 + $0x100] sm:$0xff]
        %v2507 = vld [vmem:[#allocation2 + $0x108] sm:$0xff]
        %v2508 = vld [vmem:[#allocation2 + $0x110] sm:$0xff]
        %v2509 = vld [vmem:[#allocation2 + $0x118] sm:$0x3]
        %v2510 = vld [vmem:[#allocation2 + $0x120] sm:$0xff]
        %v2511 = vld [vmem:[#allocation2 + $0x128] sm:$0xff]
        %v2512 = vld [vmem:[#allocation2 + $0x130] sm:$0xff]
        %v2513 = vld [vmem:[#allocation2 + $0x138] sm:$0x3]
        %v2514 = vld [vmem:[#allocation2 + $0x140] sm:$0xff]
        %v2515 = vld [vmem:[#allocation2 + $0x148] sm:$0xff]
        %v2516 = vld [vmem:[#allocation2 + $0x150] sm:$0xff]
        %v2517 = vld [vmem:[#allocation2 + $0x158] sm:$0x3]
        %v2518 = vld [vmem:[#allocation2 + $0x160] sm:$0xff]
        %v2519 = vld [vmem:[#allocation2 + $0x168] sm:$0xff]
        %v2520 = vld [vmem:[#allocation2 + $0x170] sm:$0xff]
        %v2521 = vld [vmem:[#allocation2 + $0x178] sm:$0x3]
        %v2522 = vld [vmem:[#allocation2 + $0x180] sm:$0xff]
        %v2523 = vld [vmem:[#allocation2 + $0x188] sm:$0xff]
        %v2524 = vld [vmem:[#allocation2 + $0x190] sm:$0xff]
        %v2525 = vld [vmem:[#allocation2 + $0x198] sm:$0x3]
        %v2526 = vld [vmem:[#allocation2 + $0x1a0] sm:$0xff]
        %v2527 = vld [vmem:[#allocation2 + $0x1a8] sm:$0xff]
        %v2528 = vld [vmem:[#allocation2 + $0x1b0] sm:$0xff]
        %v2529 = vld [vmem:[#allocation2 + $0x1b8] sm:$0x3]
        %v2530 = vld [vmem:[#allocation2 + $0x1c0] sm:$0xff]
        %v2531 = vld [vmem:[#allocation2 + $0x1c8] sm:$0xff]
        %v2532 = vld [vmem:[#allocation2 + $0x1d0] sm:$0xff]
        %v2533 = vld [vmem:[#allocation2 + $0x1d8] sm:$0x3]
        %v2534 = vld [vmem:[#allocation2 + $0x1e0] sm:$0xff]
        %v2535 = vld [vmem:[#allocation2 + $0x1e8] sm:$0xff]
        %v2536 = vld [vmem:[#allocation2 + $0x1f0] sm:$0xff]
        %v2537 = vld [vmem:[#allocation2 + $0x1f8] sm:$0x3]
        %v2538 = vld [vmem:[%s1404] sm:$0xff]
        %v2539 = vld [vmem:[%s1404 + $0x8] sm:$0xff]
        %v2540 = vld [vmem:[%s1404 + $0x10] sm:$0xff]
        %v2541 = vld [vmem:[%s1404 + $0x18] sm:$0x3]
        %v2542 = vld [vmem:[%s1404 + $0x20] sm:$0xff]
        %v2543 = vld [vmem:[%s1404 + $0x28] sm:$0xff]
        %v2544 = vld [vmem:[%s1404 + $0x30] sm:$0xff]
        %v2545 = vld [vmem:[%s1404 + $0x38] sm:$0x3]
        %v2546 = vld [vmem:[%s1404 + $0x40] sm:$0xff]
        %v2547 = vld [vmem:[%s1404 + $0x48] sm:$0xff]
        %v2548 = vld [vmem:[%s1404 + $0x50] sm:$0xff]
        %v2549 = vld [vmem:[%s1404 + $0x58] sm:$0x3]
        %v2550 = vld [vmem:[%s1404 + $0x60] sm:$0xff]
        %v2551 = vld [vmem:[%s1404 + $0x68] sm:$0xff]
        %v2552 = vld [vmem:[%s1404 + $0x70] sm:$0xff]
        %v2553 = vld [vmem:[%s1404 + $0x78] sm:$0x3]
        %v2554 = vld [vmem:[%s1404 + $0x80] sm:$0xff]
        %v2555 = vld [vmem:[%s1404 + $0x88] sm:$0xff]
        %v2556 = vld [vmem:[%s1404 + $0x90] sm:$0xff]
        %v2557 = vld [vmem:[%s1404 + $0x98] sm:$0x3]
        %v2558 = vld [vmem:[%s1404 + $0xa0] sm:$0xff]
        %v2559 = vld [vmem:[%s1404 + $0xa8] sm:$0xff]
        %v2560 = vld [vmem:[%s1404 + $0xb0] sm:$0xff]
        %v2561 = vld [vmem:[%s1404 + $0xb8] sm:$0x3]
        %v2562 = vld [vmem:[%s1404 + $0xc0] sm:$0xff]
        %v2563 = vld [vmem:[%s1404 + $0xc8] sm:$0xff]
        %v2564 = vld [vmem:[%s1404 + $0xd0] sm:$0xff]
        %v2565 = vld [vmem:[%s1404 + $0xd8] sm:$0x3]
        %v2566 = vld [vmem:[%s1404 + $0xe0] sm:$0xff]
        %v2567 = vld [vmem:[%s1404 + $0xe8] sm:$0xff]
        %v2568 = vld [vmem:[%s1404 + $0xf0] sm:$0xff]
        %v2569 = vld [vmem:[%s1404 + $0xf8] sm:$0x3]
        %v2570 = vld [vmem:[%s1404 + $0x100] sm:$0xff]
        %v2571 = vld [vmem:[%s1404 + $0x108] sm:$0xff]
        %v2572 = vld [vmem:[%s1404 + $0x110] sm:$0xff]
        %v2573 = vld [vmem:[%s1404 + $0x118] sm:$0x3]
        %v2574 = vld [vmem:[%s1404 + $0x120] sm:$0xff]
        %v2575 = vld [vmem:[%s1404 + $0x128] sm:$0xff]
        %v2576 = vld [vmem:[%s1404 + $0x130] sm:$0xff]
        %v2577 = vld [vmem:[%s1404 + $0x138] sm:$0x3]
        %v2578 = vld [vmem:[%s1404 + $0x140] sm:$0xff]
        %v2579 = vld [vmem:[%s1404 + $0x148] sm:$0xff]
        %v2580 = vld [vmem:[%s1404 + $0x150] sm:$0xff]
        %v2581 = vld [vmem:[%s1404 + $0x158] sm:$0x3]
        %v2582 = vld [vmem:[%s1404 + $0x160] sm:$0xff]
        %v2583 = vld [vmem:[%s1404 + $0x168] sm:$0xff]
        %v2584 = vld [vmem:[%s1404 + $0x170] sm:$0xff]
        %v2585 = vld [vmem:[%s1404 + $0x178] sm:$0x3]
        %v2586 = vld [vmem:[%s1404 + $0x180] sm:$0xff]
        %v2587 = vld [vmem:[%s1404 + $0x188] sm:$0xff]
        %v2588 = vld [vmem:[%s1404 + $0x190] sm:$0xff]
        %v2589 = vld [vmem:[%s1404 + $0x198] sm:$0x3]
        %v2590 = vld [vmem:[%s1404 + $0x1a0] sm:$0xff]
        %v2591 = vld [vmem:[%s1404 + $0x1a8] sm:$0xff]
        %v2592 = vld [vmem:[%s1404 + $0x1b0] sm:$0xff]
        %v2593 = vld [vmem:[%s1404 + $0x1b8] sm:$0x3]
        %v2594 = vld [vmem:[%s1404 + $0x1c0] sm:$0xff]
        %v2595 = vld [vmem:[%s1404 + $0x1c8] sm:$0xff]
        %v2596 = vld [vmem:[%s1404 + $0x1d0] sm:$0xff]
        %v2597 = vld [vmem:[%s1404 + $0x1d8] sm:$0x3]
        %v2598 = vld [vmem:[%s1404 + $0x1e0] sm:$0xff]
        %v2599 = vld [vmem:[%s1404 + $0x1e8] sm:$0xff]
        %v2600 = vld [vmem:[%s1404 + $0x1f0] sm:$0xff]
        %v2601 = vld [vmem:[%s1404 + $0x1f8] sm:$0x3]
        %v2602 = vmax.f32 %v2474, %v2538
        %v2603 = vmax.f32 %v2475, %v2539
        %v2604 = vmax.f32 %v2476, %v2540
        %v2605 = vmax.f32 %v2477, %v2541
        %v2606 = vmax.f32 %v2478, %v2542
        %v2607 = vmax.f32 %v2479, %v2543
        %v2608 = vmax.f32 %v2480, %v2544
        %v2609 = vmax.f32 %v2481, %v2545
        %v2610 = vmax.f32 %v2482, %v2546
        %v2611 = vmax.f32 %v2483, %v2547
        %v2612 = vmax.f32 %v2484, %v2548
        %v2613 = vmax.f32 %v2485, %v2549
        %v2614 = vmax.f32 %v2486, %v2550
        %v2615 = vmax.f32 %v2487, %v2551
        %v2616 = vmax.f32 %v2488, %v2552
        %v2617 = vmax.f32 %v2489, %v2553
        %v2618 = vmax.f32 %v2490, %v2554
        %v2619 = vmax.f32 %v2491, %v2555
        %v2620 = vmax.f32 %v2492, %v2556
        %v2621 = vmax.f32 %v2493, %v2557
        %v2622 = vmax.f32 %v2494, %v2558
        %v2623 = vmax.f32 %v2495, %v2559
        %v2624 = vmax.f32 %v2496, %v2560
        %v2625 = vmax.f32 %v2497, %v2561
        %v2626 = vmax.f32 %v2498, %v2562
        %v2627 = vmax.f32 %v2499, %v2563
        %v2628 = vmax.f32 %v2500, %v2564
        %v2629 = vmax.f32 %v2501, %v2565
        %v2630 = vmax.f32 %v2502, %v2566
        %v2631 = vmax.f32 %v2503, %v2567
        %v2632 = vmax.f32 %v2504, %v2568
        %v2633 = vmax.f32 %v2505, %v2569
        %v2634 = vmax.f32 %v2506, %v2570
        %v2635 = vmax.f32 %v2507, %v2571
        %v2636 = vmax.f32 %v2508, %v2572
        %v2637 = vmax.f32 %v2509, %v2573
        %v2638 = vmax.f32 %v2510, %v2574
        %v2639 = vmax.f32 %v2511, %v2575
        %v2640 = vmax.f32 %v2512, %v2576
        %v2641 = vmax.f32 %v2513, %v2577
        %v2642 = vmax.f32 %v2514, %v2578
        %v2643 = vmax.f32 %v2515, %v2579
        %v2644 = vmax.f32 %v2516, %v2580
        %v2645 = vmax.f32 %v2517, %v2581
        %v2646 = vmax.f32 %v2518, %v2582
        %v2647 = vmax.f32 %v2519, %v2583
        %v2648 = vmax.f32 %v2520, %v2584
        %v2649 = vmax.f32 %v2521, %v2585
        %v2650 = vmax.f32 %v2522, %v2586
        %v2651 = vmax.f32 %v2523, %v2587
        %v2652 = vmax.f32 %v2524, %v2588
        %v2653 = vmax.f32 %v2525, %v2589
        %v2654 = vmax.f32 %v2526, %v2590
        %v2655 = vmax.f32 %v2527, %v2591
        %v2656 = vmax.f32 %v2528, %v2592
        %v2657 = vmax.f32 %v2529, %v2593
        %v2658 = vmax.f32 %v2530, %v2594
        %v2659 = vmax.f32 %v2531, %v2595
        %v2660 = vmax.f32 %v2532, %v2596
        %v2661 = vmax.f32 %v2533, %v2597
        %v2662 = vmax.f32 %v2534, %v2598
        %v2663 = vmax.f32 %v2535, %v2599
        %v2664 = vmax.f32 %v2536, %v2600
        %v2665 = vmax.f32 %v2537, %v2601
        %v2666 = vld [vmem:[%s1258] sm:$0xff]
        %v2667 = vld [vmem:[%s1258 + $0x8] sm:$0xff]
        %v2668 = vld [vmem:[%s1258 + $0x10] sm:$0xff]
        %v2669 = vld [vmem:[%s1258 + $0x18] sm:$0x3]
        %v2670 = vld [vmem:[%s1258 + $0x20] sm:$0xff]
        %v2671 = vld [vmem:[%s1258 + $0x28] sm:$0xff]
        %v2672 = vld [vmem:[%s1258 + $0x30] sm:$0xff]
        %v2673 = vld [vmem:[%s1258 + $0x38] sm:$0x3]
        %v2674 = vld [vmem:[%s1258 + $0x40] sm:$0xff]
        %v2675 = vld [vmem:[%s1258 + $0x48] sm:$0xff]
        %v2676 = vld [vmem:[%s1258 + $0x50] sm:$0xff]
        %v2677 = vld [vmem:[%s1258 + $0x58] sm:$0x3]
        %v2678 = vld [vmem:[%s1258 + $0x60] sm:$0xff]
        %v2679 = vld [vmem:[%s1258 + $0x68] sm:$0xff]
        %v2680 = vld [vmem:[%s1258 + $0x70] sm:$0xff]
        %v2681 = vld [vmem:[%s1258 + $0x78] sm:$0x3]
        %v2682 = vld [vmem:[%s1258 + $0x80] sm:$0xff]
        %v2683 = vld [vmem:[%s1258 + $0x88] sm:$0xff]
        %v2684 = vld [vmem:[%s1258 + $0x90] sm:$0xff]
        %v2685 = vld [vmem:[%s1258 + $0x98] sm:$0x3]
        %v2686 = vld [vmem:[%s1258 + $0xa0] sm:$0xff]
        %v2687 = vld [vmem:[%s1258 + $0xa8] sm:$0xff]
        %v2688 = vld [vmem:[%s1258 + $0xb0] sm:$0xff]
        %v2689 = vld [vmem:[%s1258 + $0xb8] sm:$0x3]
        %v2690 = vld [vmem:[%s1258 + $0xc0] sm:$0xff]
        %v2691 = vld [vmem:[%s1258 + $0xc8] sm:$0xff]
        %v2692 = vld [vmem:[%s1258 + $0xd0] sm:$0xff]
        %v2693 = vld [vmem:[%s1258 + $0xd8] sm:$0x3]
        %v2694 = vld [vmem:[%s1258 + $0xe0] sm:$0xff]
        %v2695 = vld [vmem:[%s1258 + $0xe8] sm:$0xff]
        %v2696 = vld [vmem:[%s1258 + $0xf0] sm:$0xff]
        %v2697 = vld [vmem:[%s1258 + $0xf8] sm:$0x3]
        %v2698 = vld [vmem:[%s1258 + $0x100] sm:$0xff]
        %v2699 = vld [vmem:[%s1258 + $0x108] sm:$0xff]
        %v2700 = vld [vmem:[%s1258 + $0x110] sm:$0xff]
        %v2701 = vld [vmem:[%s1258 + $0x118] sm:$0x3]
        %v2702 = vld [vmem:[%s1258 + $0x120] sm:$0xff]
        %v2703 = vld [vmem:[%s1258 + $0x128] sm:$0xff]
        %v2704 = vld [vmem:[%s1258 + $0x130] sm:$0xff]
        %v2705 = vld [vmem:[%s1258 + $0x138] sm:$0x3]
        %v2706 = vld [vmem:[%s1258 + $0x140] sm:$0xff]
        %v2707 = vld [vmem:[%s1258 + $0x148] sm:$0xff]
        %v2708 = vld [vmem:[%s1258 + $0x150] sm:$0xff]
        %v2709 = vld [vmem:[%s1258 + $0x158] sm:$0x3]
        %v2710 = vld [vmem:[%s1258 + $0x160] sm:$0xff]
        %v2711 = vld [vmem:[%s1258 + $0x168] sm:$0xff]
        %v2712 = vld [vmem:[%s1258 + $0x170] sm:$0xff]
        %v2713 = vld [vmem:[%s1258 + $0x178] sm:$0x3]
        %v2714 = vld [vmem:[%s1258 + $0x180] sm:$0xff]
        %v2715 = vld [vmem:[%s1258 + $0x188] sm:$0xff]
        %v2716 = vld [vmem:[%s1258 + $0x190] sm:$0xff]
        %v2717 = vld [vmem:[%s1258 + $0x198] sm:$0x3]
        %v2718 = vld [vmem:[%s1258 + $0x1a0] sm:$0xff]
        %v2719 = vld [vmem:[%s1258 + $0x1a8] sm:$0xff]
        %v2720 = vld [vmem:[%s1258 + $0x1b0] sm:$0xff]
        %v2721 = vld [vmem:[%s1258 + $0x1b8] sm:$0x3]
        %v2722 = vld [vmem:[%s1258 + $0x1c0] sm:$0xff]
        %v2723 = vld [vmem:[%s1258 + $0x1c8] sm:$0xff]
        %v2724 = vld [vmem:[%s1258 + $0x1d0] sm:$0xff]
        %v2725 = vld [vmem:[%s1258 + $0x1d8] sm:$0x3]
        %v2726 = vld [vmem:[%s1258 + $0x1e0] sm:$0xff]
        %v2727 = vld [vmem:[%s1258 + $0x1e8] sm:$0xff]
        %v2728 = vld [vmem:[%s1258 + $0x1f0] sm:$0xff]
        %v2729 = vld [vmem:[%s1258 + $0x1f8] sm:$0x3]
        %v2730 = vmax.f32 %v2602, %v2666
        %v2731 = vmax.f32 %v2603, %v2667
        %v2732 = vmax.f32 %v2604, %v2668
        %v2733 = vmax.f32 %v2605, %v2669
        %v2734 = vmax.f32 %v2606, %v2670
        %v2735 = vmax.f32 %v2607, %v2671
        %v2736 = vmax.f32 %v2608, %v2672
        %v2737 = vmax.f32 %v2609, %v2673
        %v2738 = vmax.f32 %v2610, %v2674
        %v2739 = vmax.f32 %v2611, %v2675
        %v2740 = vmax.f32 %v2612, %v2676
        %v2741 = vmax.f32 %v2613, %v2677
        %v2742 = vmax.f32 %v2614, %v2678
        %v2743 = vmax.f32 %v2615, %v2679
        %v2744 = vmax.f32 %v2616, %v2680
        %v2745 = vmax.f32 %v2617, %v2681
        %v2746 = vmax.f32 %v2618, %v2682
        %v2747 = vmax.f32 %v2619, %v2683
        %v2748 = vmax.f32 %v2620, %v2684
        %v2749 = vmax.f32 %v2621, %v2685
        %v2750 = vmax.f32 %v2622, %v2686
        %v2751 = vmax.f32 %v2623, %v2687
        %v2752 = vmax.f32 %v2624, %v2688
        %v2753 = vmax.f32 %v2625, %v2689
        %v2754 = vmax.f32 %v2626, %v2690
        %v2755 = vmax.f32 %v2627, %v2691
        %v2756 = vmax.f32 %v2628, %v2692
        %v2757 = vmax.f32 %v2629, %v2693
        %v2758 = vmax.f32 %v2630, %v2694
        %v2759 = vmax.f32 %v2631, %v2695
        %v2760 = vmax.f32 %v2632, %v2696
        %v2761 = vmax.f32 %v2633, %v2697
        %v2762 = vmax.f32 %v2634, %v2698
        %v2763 = vmax.f32 %v2635, %v2699
        %v2764 = vmax.f32 %v2636, %v2700
        %v2765 = vmax.f32 %v2637, %v2701
        %v2766 = vmax.f32 %v2638, %v2702
        %v2767 = vmax.f32 %v2639, %v2703
        %v2768 = vmax.f32 %v2640, %v2704
        %v2769 = vmax.f32 %v2641, %v2705
        %v2770 = vmax.f32 %v2642, %v2706
        %v2771 = vmax.f32 %v2643, %v2707
        %v2772 = vmax.f32 %v2644, %v2708
        %v2773 = vmax.f32 %v2645, %v2709
        %v2774 = vmax.f32 %v2646, %v2710
        %v2775 = vmax.f32 %v2647, %v2711
        %v2776 = vmax.f32 %v2648, %v2712
        %v2777 = vmax.f32 %v2649, %v2713
        %v2778 = vmax.f32 %v2650, %v2714
        %v2779 = vmax.f32 %v2651, %v2715
        %v2780 = vmax.f32 %v2652, %v2716
        %v2781 = vmax.f32 %v2653, %v2717
        %v2782 = vmax.f32 %v2654, %v2718
        %v2783 = vmax.f32 %v2655, %v2719
        %v2784 = vmax.f32 %v2656, %v2720
        %v2785 = vmax.f32 %v2657, %v2721
        %v2786 = vmax.f32 %v2658, %v2722
        %v2787 = vmax.f32 %v2659, %v2723
        %v2788 = vmax.f32 %v2660, %v2724
        %v2789 = vmax.f32 %v2661, %v2725
        %v2790 = vmax.f32 %v2662, %v2726
        %v2791 = vmax.f32 %v2663, %v2727
        %v2792 = vmax.f32 %v2664, %v2728
        %v2793 = vmax.f32 %v2665, %v2729
        %v2794 = vld [vmem:[%s1661] sm:$0xff]
        %v2795 = vld [vmem:[%s1661 + $0x8] sm:$0xff]
        %v2796 = vld [vmem:[%s1661 + $0x10] sm:$0xff]
        %v2797 = vld [vmem:[%s1661 + $0x18] sm:$0x3]
        %v2798 = vld [vmem:[%s1661 + $0x20] sm:$0xff]
        %v2799 = vld [vmem:[%s1661 + $0x28] sm:$0xff]
        %v2800 = vld [vmem:[%s1661 + $0x30] sm:$0xff]
        %v2801 = vld [vmem:[%s1661 + $0x38] sm:$0x3]
        %v2802 = vld [vmem:[%s1661 + $0x40] sm:$0xff]
        %v2803 = vld [vmem:[%s1661 + $0x48] sm:$0xff]
        %v2804 = vld [vmem:[%s1661 + $0x50] sm:$0xff]
        %v2805 = vld [vmem:[%s1661 + $0x58] sm:$0x3]
        %v2806 = vld [vmem:[%s1661 + $0x60] sm:$0xff]
        %v2807 = vld [vmem:[%s1661 + $0x68] sm:$0xff]
        %v2808 = vld [vmem:[%s1661 + $0x70] sm:$0xff]
        %v2809 = vld [vmem:[%s1661 + $0x78] sm:$0x3]
        %v2810 = vld [vmem:[%s1661 + $0x80] sm:$0xff]
        %v2811 = vld [vmem:[%s1661 + $0x88] sm:$0xff]
        %v2812 = vld [vmem:[%s1661 + $0x90] sm:$0xff]
        %v2813 = vld [vmem:[%s1661 + $0x98] sm:$0x3]
        %v2814 = vld [vmem:[%s1661 + $0xa0] sm:$0xff]
        %v2815 = vld [vmem:[%s1661 + $0xa8] sm:$0xff]
        %v2816 = vld [vmem:[%s1661 + $0xb0] sm:$0xff]
        %v2817 = vld [vmem:[%s1661 + $0xb8] sm:$0x3]
        %v2818 = vld [vmem:[%s1661 + $0xc0] sm:$0xff]
        %v2819 = vld [vmem:[%s1661 + $0xc8] sm:$0xff]
        %v2820 = vld [vmem:[%s1661 + $0xd0] sm:$0xff]
        %v2821 = vld [vmem:[%s1661 + $0xd8] sm:$0x3]
        %v2822 = vld [vmem:[%s1661 + $0xe0] sm:$0xff]
        %v2823 = vld [vmem:[%s1661 + $0xe8] sm:$0xff]
        %v2824 = vld [vmem:[%s1661 + $0xf0] sm:$0xff]
        %v2825 = vld [vmem:[%s1661 + $0xf8] sm:$0x3]
        %v2826 = vld [vmem:[%s1661 + $0x100] sm:$0xff]
        %v2827 = vld [vmem:[%s1661 + $0x108] sm:$0xff]
        %v2828 = vld [vmem:[%s1661 + $0x110] sm:$0xff]
        %v2829 = vld [vmem:[%s1661 + $0x118] sm:$0x3]
        %v2830 = vld [vmem:[%s1661 + $0x120] sm:$0xff]
        %v2831 = vld [vmem:[%s1661 + $0x128] sm:$0xff]
        %v2832 = vld [vmem:[%s1661 + $0x130] sm:$0xff]
        %v2833 = vld [vmem:[%s1661 + $0x138] sm:$0x3]
        %v2834 = vld [vmem:[%s1661 + $0x140] sm:$0xff]
        %v2835 = vld [vmem:[%s1661 + $0x148] sm:$0xff]
        %v2836 = vld [vmem:[%s1661 + $0x150] sm:$0xff]
        %v2837 = vld [vmem:[%s1661 + $0x158] sm:$0x3]
        %v2838 = vld [vmem:[%s1661 + $0x160] sm:$0xff]
        %v2839 = vld [vmem:[%s1661 + $0x168] sm:$0xff]
        %v2840 = vld [vmem:[%s1661 + $0x170] sm:$0xff]
        %v2841 = vld [vmem:[%s1661 + $0x178] sm:$0x3]
        %v2842 = vld [vmem:[%s1661 + $0x180] sm:$0xff]
        %v2843 = vld [vmem:[%s1661 + $0x188] sm:$0xff]
        %v2844 = vld [vmem:[%s1661 + $0x190] sm:$0xff]
        %v2845 = vld [vmem:[%s1661 + $0x198] sm:$0x3]
        %v2846 = vld [vmem:[%s1661 + $0x1a0] sm:$0xff]
        %v2847 = vld [vmem:[%s1661 + $0x1a8] sm:$0xff]
        %v2848 = vld [vmem:[%s1661 + $0x1b0] sm:$0xff]
        %v2849 = vld [vmem:[%s1661 + $0x1b8] sm:$0x3]
        %v2850 = vld [vmem:[%s1661 + $0x1c0] sm:$0xff]
        %v2851 = vld [vmem:[%s1661 + $0x1c8] sm:$0xff]
        %v2852 = vld [vmem:[%s1661 + $0x1d0] sm:$0xff]
        %v2853 = vld [vmem:[%s1661 + $0x1d8] sm:$0x3]
        %v2854 = vld [vmem:[%s1661 + $0x1e0] sm:$0xff]
        %v2855 = vld [vmem:[%s1661 + $0x1e8] sm:$0xff]
        %v2856 = vld [vmem:[%s1661 + $0x1f0] sm:$0xff]
        %v2857 = vld [vmem:[%s1661 + $0x1f8] sm:$0x3]
        %v2858 = vmax.f32 %v2730, %v2794
        %v2859 = vmax.f32 %v2731, %v2795
        %v2860 = vmax.f32 %v2732, %v2796
        %v2861 = vmax.f32 %v2733, %v2797
        %v2862 = vmax.f32 %v2734, %v2798
        %v2863 = vmax.f32 %v2735, %v2799
        %v2864 = vmax.f32 %v2736, %v2800
        %v2865 = vmax.f32 %v2737, %v2801
        %v2866 = vmax.f32 %v2738, %v2802
        %v2867 = vmax.f32 %v2739, %v2803
        %v2868 = vmax.f32 %v2740, %v2804
        %v2869 = vmax.f32 %v2741, %v2805
        %v2870 = vmax.f32 %v2742, %v2806
        %v2871 = vmax.f32 %v2743, %v2807
        %v2872 = vmax.f32 %v2744, %v2808
        %v2873 = vmax.f32 %v2745, %v2809
        %v2874 = vmax.f32 %v2746, %v2810
        %v2875 = vmax.f32 %v2747, %v2811
        %v2876 = vmax.f32 %v2748, %v2812
        %v2877 = vmax.f32 %v2749, %v2813
        %v2878 = vmax.f32 %v2750, %v2814
        %v2879 = vmax.f32 %v2751, %v2815
        %v2880 = vmax.f32 %v2752, %v2816
        %v2881 = vmax.f32 %v2753, %v2817
        %v2882 = vmax.f32 %v2754, %v2818
        %v2883 = vmax.f32 %v2755, %v2819
        %v2884 = vmax.f32 %v2756, %v2820
        %v2885 = vmax.f32 %v2757, %v2821
        %v2886 = vmax.f32 %v2758, %v2822
        %v2887 = vmax.f32 %v2759, %v2823
        %v2888 = vmax.f32 %v2760, %v2824
        %v2889 = vmax.f32 %v2761, %v2825
        %v2890 = vmax.f32 %v2762, %v2826
        %v2891 = vmax.f32 %v2763, %v2827
        %v2892 = vmax.f32 %v2764, %v2828
        %v2893 = vmax.f32 %v2765, %v2829
        %v2894 = vmax.f32 %v2766, %v2830
        %v2895 = vmax.f32 %v2767, %v2831
        %v2896 = vmax.f32 %v2768, %v2832
        %v2897 = vmax.f32 %v2769, %v2833
        %v2898 = vmax.f32 %v2770, %v2834
        %v2899 = vmax.f32 %v2771, %v2835
        %v2900 = vmax.f32 %v2772, %v2836
        %v2901 = vmax.f32 %v2773, %v2837
        %v2902 = vmax.f32 %v2774, %v2838
        %v2903 = vmax.f32 %v2775, %v2839
        %v2904 = vmax.f32 %v2776, %v2840
        %v2905 = vmax.f32 %v2777, %v2841
        %v2906 = vmax.f32 %v2778, %v2842
        %v2907 = vmax.f32 %v2779, %v2843
        %v2908 = vmax.f32 %v2780, %v2844
        %v2909 = vmax.f32 %v2781, %v2845
        %v2910 = vmax.f32 %v2782, %v2846
        %v2911 = vmax.f32 %v2783, %v2847
        %v2912 = vmax.f32 %v2784, %v2848
        %v2913 = vmax.f32 %v2785, %v2849
        %v2914 = vmax.f32 %v2786, %v2850
        %v2915 = vmax.f32 %v2787, %v2851
        %v2916 = vmax.f32 %v2788, %v2852
        %v2917 = vmax.f32 %v2789, %v2853
        %v2918 = vmax.f32 %v2790, %v2854
        %v2919 = vmax.f32 %v2791, %v2855
        %v2920 = vmax.f32 %v2792, %v2856
        %v2921 = vmax.f32 %v2793, %v2857
        %v2922 = vld [vmem:[%s1790] sm:$0xff]
        %v2923 = vld [vmem:[%s1790 + $0x8] sm:$0xff]
        %v2924 = vld [vmem:[%s1790 + $0x10] sm:$0xff]
        %v2925 = vld [vmem:[%s1790 + $0x18] sm:$0x3]
        %v2926 = vld [vmem:[%s1790 + $0x20] sm:$0xff]
        %v2927 = vld [vmem:[%s1790 + $0x28] sm:$0xff]
        %v2928 = vld [vmem:[%s1790 + $0x30] sm:$0xff]
        %v2929 = vld [vmem:[%s1790 + $0x38] sm:$0x3]
        %v2930 = vld [vmem:[%s1790 + $0x40] sm:$0xff]
        %v2931 = vld [vmem:[%s1790 + $0x48] sm:$0xff]
        %v2932 = vld [vmem:[%s1790 + $0x50] sm:$0xff]
        %v2933 = vld [vmem:[%s1790 + $0x58] sm:$0x3]
        %v2934 = vld [vmem:[%s1790 + $0x60] sm:$0xff]
        %v2935 = vld [vmem:[%s1790 + $0x68] sm:$0xff]
        %v2936 = vld [vmem:[%s1790 + $0x70] sm:$0xff]
        %v2937 = vld [vmem:[%s1790 + $0x78] sm:$0x3]
        %v2938 = vld [vmem:[%s1790 + $0x80] sm:$0xff]
        %v2939 = vld [vmem:[%s1790 + $0x88] sm:$0xff]
        %v2940 = vld [vmem:[%s1790 + $0x90] sm:$0xff]
        %v2941 = vld [vmem:[%s1790 + $0x98] sm:$0x3]
        %v2942 = vld [vmem:[%s1790 + $0xa0] sm:$0xff]
        %v2943 = vld [vmem:[%s1790 + $0xa8] sm:$0xff]
        %v2944 = vld [vmem:[%s1790 + $0xb0] sm:$0xff]
        %v2945 = vld [vmem:[%s1790 + $0xb8] sm:$0x3]
        %v2946 = vld [vmem:[%s1790 + $0xc0] sm:$0xff]
        %v2947 = vld [vmem:[%s1790 + $0xc8] sm:$0xff]
        %v2948 = vld [vmem:[%s1790 + $0xd0] sm:$0xff]
        %v2949 = vld [vmem:[%s1790 + $0xd8] sm:$0x3]
        %v2950 = vld [vmem:[%s1790 + $0xe0] sm:$0xff]
        %v2951 = vld [vmem:[%s1790 + $0xe8] sm:$0xff]
        %v2952 = vld [vmem:[%s1790 + $0xf0] sm:$0xff]
        %v2953 = vld [vmem:[%s1790 + $0xf8] sm:$0x3]
        %v2954 = vld [vmem:[%s1790 + $0x100] sm:$0xff]
        %v2955 = vld [vmem:[%s1790 + $0x108] sm:$0xff]
        %v2956 = vld [vmem:[%s1790 + $0x110] sm:$0xff]
        %v2957 = vld [vmem:[%s1790 + $0x118] sm:$0x3]
        %v2958 = vld [vmem:[%s1790 + $0x120] sm:$0xff]
        %v2959 = vld [vmem:[%s1790 + $0x128] sm:$0xff]
        %v2960 = vld [vmem:[%s1790 + $0x130] sm:$0xff]
        %v2961 = vld [vmem:[%s1790 + $0x138] sm:$0x3]
        %v2962 = vld [vmem:[%s1790 + $0x140] sm:$0xff]
        %v2963 = vld [vmem:[%s1790 + $0x148] sm:$0xff]
        %v2964 = vld [vmem:[%s1790 + $0x150] sm:$0xff]
        %v2965 = vld [vmem:[%s1790 + $0x158] sm:$0x3]
        %v2966 = vld [vmem:[%s1790 + $0x160] sm:$0xff]
        %v2967 = vld [vmem:[%s1790 + $0x168] sm:$0xff]
        %v2968 = vld [vmem:[%s1790 + $0x170] sm:$0xff]
        %v2969 = vld [vmem:[%s1790 + $0x178] sm:$0x3]
        %v2970 = vld [vmem:[%s1790 + $0x180] sm:$0xff]
        %v2971 = vld [vmem:[%s1790 + $0x188] sm:$0xff]
        %v2972 = vld [vmem:[%s1790 + $0x190] sm:$0xff]
        %v2973 = vld [vmem:[%s1790 + $0x198] sm:$0x3]
        %v2974 = vld [vmem:[%s1790 + $0x1a0] sm:$0xff]
        %v2975 = vld [vmem:[%s1790 + $0x1a8] sm:$0xff]
        %v2976 = vld [vmem:[%s1790 + $0x1b0] sm:$0xff]
        %v2977 = vld [vmem:[%s1790 + $0x1b8] sm:$0x3]
        %v2978 = vld [vmem:[%s1790 + $0x1c0] sm:$0xff]
        %v2979 = vld [vmem:[%s1790 + $0x1c8] sm:$0xff]
        %v2980 = vld [vmem:[%s1790 + $0x1d0] sm:$0xff]
        %v2981 = vld [vmem:[%s1790 + $0x1d8] sm:$0x3]
        %v2982 = vld [vmem:[%s1790 + $0x1e0] sm:$0xff]
        %v2983 = vld [vmem:[%s1790 + $0x1e8] sm:$0xff]
        %v2984 = vld [vmem:[%s1790 + $0x1f0] sm:$0xff]
        %v2985 = vld [vmem:[%s1790 + $0x1f8] sm:$0x3]
        %v2986 = vmax.f32 %v2858, %v2922
        %v2987 = vmax.f32 %v2859, %v2923
        %v2988 = vmax.f32 %v2860, %v2924
        %v2989 = vmax.f32 %v2861, %v2925
        %v2990 = vmax.f32 %v2862, %v2926
        %v2991 = vmax.f32 %v2863, %v2927
        %v2992 = vmax.f32 %v2864, %v2928
        %v2993 = vmax.f32 %v2865, %v2929
        %v2994 = vmax.f32 %v2866, %v2930
        %v2995 = vmax.f32 %v2867, %v2931
        %v2996 = vmax.f32 %v2868, %v2932
        %v2997 = vmax.f32 %v2869, %v2933
        %v2998 = vmax.f32 %v2870, %v2934
        %v2999 = vmax.f32 %v2871, %v2935
        %v3000 = vmax.f32 %v2872, %v2936
        %v3001 = vmax.f32 %v2873, %v2937
        %v3002 = vmax.f32 %v2874, %v2938
        %v3003 = vmax.f32 %v2875, %v2939
        %v3004 = vmax.f32 %v2876, %v2940
        %v3005 = vmax.f32 %v2877, %v2941
        %v3006 = vmax.f32 %v2878, %v2942
        %v3007 = vmax.f32 %v2879, %v2943
        %v3008 = vmax.f32 %v2880, %v2944
        %v3009 = vmax.f32 %v2881, %v2945
        %v3010 = vmax.f32 %v2882, %v2946
        %v3011 = vmax.f32 %v2883, %v2947
        %v3012 = vmax.f32 %v2884, %v2948
        %v3013 = vmax.f32 %v2885, %v2949
        %v3014 = vmax.f32 %v2886, %v2950
        %v3015 = vmax.f32 %v2887, %v2951
        %v3016 = vmax.f32 %v2888, %v2952
        %v3017 = vmax.f32 %v2889, %v2953
        %v3018 = vmax.f32 %v2890, %v2954
        %v3019 = vmax.f32 %v2891, %v2955
        %v3020 = vmax.f32 %v2892, %v2956
        %v3021 = vmax.f32 %v2893, %v2957
        %v3022 = vmax.f32 %v2894, %v2958
        %v3023 = vmax.f32 %v2895, %v2959
        %v3024 = vmax.f32 %v2896, %v2960
        %v3025 = vmax.f32 %v2897, %v2961
        %v3026 = vmax.f32 %v2898, %v2962
        %v3027 = vmax.f32 %v2899, %v2963
        %v3028 = vmax.f32 %v2900, %v2964
        %v3029 = vmax.f32 %v2901, %v2965
        %v3030 = vmax.f32 %v2902, %v2966
        %v3031 = vmax.f32 %v2903, %v2967
        %v3032 = vmax.f32 %v2904, %v2968
        %v3033 = vmax.f32 %v2905, %v2969
        %v3034 = vmax.f32 %v2906, %v2970
        %v3035 = vmax.f32 %v2907, %v2971
        %v3036 = vmax.f32 %v2908, %v2972
        %v3037 = vmax.f32 %v2909, %v2973
        %v3038 = vmax.f32 %v2910, %v2974
        %v3039 = vmax.f32 %v2911, %v2975
        %v3040 = vmax.f32 %v2912, %v2976
        %v3041 = vmax.f32 %v2913, %v2977
        %v3042 = vmax.f32 %v2914, %v2978
        %v3043 = vmax.f32 %v2915, %v2979
        %v3044 = vmax.f32 %v2916, %v2980
        %v3045 = vmax.f32 %v2917, %v2981
        %v3046 = vmax.f32 %v2918, %v2982
        %v3047 = vmax.f32 %v2919, %v2983
        %v3048 = vmax.f32 %v2920, %v2984
        %v3049 = vmax.f32 %v2921, %v2985
        %3050 = vst.msk [vmem:[#allocation3] sm:$0xff] %vm1239, %v2986
        %3051 = vst.msk [vmem:[#allocation3 + $0x8] sm:$0xff] %vm1239, %v2987
        %3052 = vst.msk [vmem:[#allocation3 + $0x10] sm:$0xff] %vm1239, %v2988
        %3053 = vst.msk [vmem:[#allocation3 + $0x18] sm:$0x3] %vm1243, %v2989
        %3054 = vst.msk [vmem:[#allocation3 + $0x20] sm:$0xff] %vm1239, %v2990
        %3055 = vst.msk [vmem:[#allocation3 + $0x28] sm:$0xff] %vm1239, %v2991
        %3056 = vst.msk [vmem:[#allocation3 + $0x30] sm:$0xff] %vm1239, %v2992
        %3057 = vst.msk [vmem:[#allocation3 + $0x38] sm:$0x3] %vm1243, %v2993
        %3058 = vst.msk [vmem:[#allocation3 + $0x40] sm:$0xff] %vm1239, %v2994
        %3059 = vst.msk [vmem:[#allocation3 + $0x48] sm:$0xff] %vm1239, %v2995
        %3060 = vst.msk [vmem:[#allocation3 + $0x50] sm:$0xff] %vm1239, %v2996
        %3061 = vst.msk [vmem:[#allocation3 + $0x58] sm:$0x3] %vm1243, %v2997
        %3062 = vst.msk [vmem:[#allocation3 + $0x60] sm:$0xff] %vm1239, %v2998
        %3063 = vst.msk [vmem:[#allocation3 + $0x68] sm:$0xff] %vm1239, %v2999
        %3064 = vst.msk [vmem:[#allocation3 + $0x70] sm:$0xff] %vm1239, %v3000
        %3065 = vst.msk [vmem:[#allocation3 + $0x78] sm:$0x3] %vm1243, %v3001
        %3066 = vst.msk [vmem:[#allocation3 + $0x80] sm:$0xff] %vm1239, %v3002
        %3067 = vst.msk [vmem:[#allocation3 + $0x88] sm:$0xff] %vm1239, %v3003
        %3068 = vst.msk [vmem:[#allocation3 + $0x90] sm:$0xff] %vm1239, %v3004
        %3069 = vst.msk [vmem:[#allocation3 + $0x98] sm:$0x3] %vm1243, %v3005
        %3070 = vst.msk [vmem:[#allocation3 + $0xa0] sm:$0xff] %vm1239, %v3006
        %3071 = vst.msk [vmem:[#allocation3 + $0xa8] sm:$0xff] %vm1239, %v3007
        %3072 = vst.msk [vmem:[#allocation3 + $0xb0] sm:$0xff] %vm1239, %v3008
        %3073 = vst.msk [vmem:[#allocation3 + $0xb8] sm:$0x3] %vm1243, %v3009
        %3074 = vst.msk [vmem:[#allocation3 + $0xc0] sm:$0xff] %vm1239, %v3010
        %3075 = vst.msk [vmem:[#allocation3 + $0xc8] sm:$0xff] %vm1239, %v3011
        %3076 = vst.msk [vmem:[#allocation3 + $0xd0] sm:$0xff] %vm1239, %v3012
        %3077 = vst.msk [vmem:[#allocation3 + $0xd8] sm:$0x3] %vm1243, %v3013
        %3078 = vst.msk [vmem:[#allocation3 + $0xe0] sm:$0xff] %vm1239, %v3014
        %3079 = vst.msk [vmem:[#allocation3 + $0xe8] sm:$0xff] %vm1239, %v3015
        %3080 = vst.msk [vmem:[#allocation3 + $0xf0] sm:$0xff] %vm1239, %v3016
        %3081 = vst.msk [vmem:[#allocation3 + $0xf8] sm:$0x3] %vm1243, %v3017
        %3082 = vst.msk [vmem:[#allocation3 + $0x100] sm:$0xff] %vm1239, %v3018
        %3083 = vst.msk [vmem:[#allocation3 + $0x108] sm:$0xff] %vm1239, %v3019
        %3084 = vst.msk [vmem:[#allocation3 + $0x110] sm:$0xff] %vm1239, %v3020
        %3085 = vst.msk [vmem:[#allocation3 + $0x118] sm:$0x3] %vm1243, %v3021
        %3086 = vst.msk [vmem:[#allocation3 + $0x120] sm:$0xff] %vm1239, %v3022
        %3087 = vst.msk [vmem:[#allocation3 + $0x128] sm:$0xff] %vm1239, %v3023
        %3088 = vst.msk [vmem:[#allocation3 + $0x130] sm:$0xff] %vm1239, %v3024
        %3089 = vst.msk [vmem:[#allocation3 + $0x138] sm:$0x3] %vm1243, %v3025
        %3090 = vst.msk [vmem:[#allocation3 + $0x140] sm:$0xff] %vm1239, %v3026
        %3091 = vst.msk [vmem:[#allocation3 + $0x148] sm:$0xff] %vm1239, %v3027
        %3092 = vst.msk [vmem:[#allocation3 + $0x150] sm:$0xff] %vm1239, %v3028
        %3093 = vst.msk [vmem:[#allocation3 + $0x158] sm:$0x3] %vm1243, %v3029
        %3094 = vst.msk [vmem:[#allocation3 + $0x160] sm:$0xff] %vm1239, %v3030
        %3095 = vst.msk [vmem:[#allocation3 + $0x168] sm:$0xff] %vm1239, %v3031
        %3096 = vst.msk [vmem:[#allocation3 + $0x170] sm:$0xff] %vm1239, %v3032
        %3097 = vst.msk [vmem:[#allocation3 + $0x178] sm:$0x3] %vm1243, %v3033
        %3098 = vst.msk [vmem:[#allocation3 + $0x180] sm:$0xff] %vm1239, %v3034
        %3099 = vst.msk [vmem:[#allocation3 + $0x188] sm:$0xff] %vm1239, %v3035
        %3100 = vst.msk [vmem:[#allocation3 + $0x190] sm:$0xff] %vm1239, %v3036
        %3101 = vst.msk [vmem:[#allocation3 + $0x198] sm:$0x3] %vm1243, %v3037
        %3102 = vst.msk [vmem:[#allocation3 + $0x1a0] sm:$0xff] %vm1239, %v3038
        %3103 = vst.msk [vmem:[#allocation3 + $0x1a8] sm:$0xff] %vm1239, %v3039
        %3104 = vst.msk [vmem:[#allocation3 + $0x1b0] sm:$0xff] %vm1239, %v3040
        %3105 = vst.msk [vmem:[#allocation3 + $0x1b8] sm:$0x3] %vm1243, %v3041
        %3106 = vst.msk [vmem:[#allocation3 + $0x1c0] sm:$0xff] %vm1239, %v3042
        %3107 = vst.msk [vmem:[#allocation3 + $0x1c8] sm:$0xff] %vm1239, %v3043
        %3108 = vst.msk [vmem:[#allocation3 + $0x1d0] sm:$0xff] %vm1239, %v3044
        %3109 = vst.msk [vmem:[#allocation3 + $0x1d8] sm:$0x3] %vm1243, %v3045
        %3110 = vst.msk [vmem:[#allocation3 + $0x1e0] sm:$0xff] %vm1239, %v3046
        %3111 = vst.msk [vmem:[#allocation3 + $0x1e8] sm:$0xff] %vm1239, %v3047
        %3112 = vst.msk [vmem:[#allocation3 + $0x1f0] sm:$0xff] %vm1239, %v3048
        %3113 = vst.msk [vmem:[#allocation3 + $0x1f8] sm:$0x3] %vm1243, %v3049
        %v3114 = vld [vmem:[#allocation3 + $0x6] sm:$0xff]
        %v3115 = vld [vmem:[#allocation3 + $0xe] sm:$0xff]
        %v3116 = vld [vmem:[#allocation3 + $0x26] sm:$0xff]
        %v3117 = vld [vmem:[#allocation3 + $0x2e] sm:$0xff]
        %v3118 = vld [vmem:[#allocation3 + $0x46] sm:$0xff]
        %v3119 = vld [vmem:[#allocation3 + $0x4e] sm:$0xff]
        %v3120 = vld [vmem:[#allocation3 + $0x66] sm:$0xff]
        %v3121 = vld [vmem:[#allocation3 + $0x6e] sm:$0xff]
        %v3122 = vld [vmem:[#allocation3 + $0x86] sm:$0xff]
        %v3123 = vld [vmem:[#allocation3 + $0x8e] sm:$0xff]
        %v3124 = vld [vmem:[#allocation3 + $0xa6] sm:$0xff]
        %v3125 = vld [vmem:[#allocation3 + $0xae] sm:$0xff]
        %v3126 = vld [vmem:[#allocation3 + $0xc6] sm:$0xff]
        %v3127 = vld [vmem:[#allocation3 + $0xce] sm:$0xff]
        %v3128 = vld [vmem:[#allocation3 + $0xe6] sm:$0xff]
        %v3129 = vld [vmem:[#allocation3 + $0xee] sm:$0xff]
        %v3130 = vld [vmem:[#allocation3 + $0x106] sm:$0xff]
        %v3131 = vld [vmem:[#allocation3 + $0x10e] sm:$0xff]
        %v3132 = vld [vmem:[#allocation3 + $0x126] sm:$0xff]
        %v3133 = vld [vmem:[#allocation3 + $0x12e] sm:$0xff]
        %v3134 = vld [vmem:[#allocation3 + $0x146] sm:$0xff]
        %v3135 = vld [vmem:[#allocation3 + $0x14e] sm:$0xff]
        %v3136 = vld [vmem:[#allocation3 + $0x166] sm:$0xff]
        %v3137 = vld [vmem:[#allocation3 + $0x16e] sm:$0xff]
        %v3138 = vld [vmem:[#allocation3 + $0x186] sm:$0xff]
        %v3139 = vld [vmem:[#allocation3 + $0x18e] sm:$0xff]
        %v3140 = vld [vmem:[#allocation3 + $0x1a6] sm:$0xff]
        %v3141 = vld [vmem:[#allocation3 + $0x1ae] sm:$0xff]
        %v3142 = vld [vmem:[#allocation3 + $0x1c6] sm:$0xff]
        %v3143 = vld [vmem:[#allocation3 + $0x1ce] sm:$0xff]
        %v3144 = vld [vmem:[#allocation3 + $0x1e6] sm:$0xff]
        %v3145 = vld [vmem:[#allocation3 + $0x1ee] sm:$0xff]
        %v3146 = vld [vmem:[#allocation3 + $0x7] sm:$0xff]
        %v3147 = vld [vmem:[#allocation3 + $0xf] sm:$0xff]
        %v3148 = vld [vmem:[#allocation3 + $0x27] sm:$0xff]
        %v3149 = vld [vmem:[#allocation3 + $0x2f] sm:$0xff]
        %v3150 = vld [vmem:[#allocation3 + $0x47] sm:$0xff]
        %v3151 = vld [vmem:[#allocation3 + $0x4f] sm:$0xff]
        %v3152 = vld [vmem:[#allocation3 + $0x67] sm:$0xff]
        %v3153 = vld [vmem:[#allocation3 + $0x6f] sm:$0xff]
        %v3154 = vld [vmem:[#allocation3 + $0x87] sm:$0xff]
        %v3155 = vld [vmem:[#allocation3 + $0x8f] sm:$0xff]
        %v3156 = vld [vmem:[#allocation3 + $0xa7] sm:$0xff]
        %v3157 = vld [vmem:[#allocation3 + $0xaf] sm:$0xff]
        %v3158 = vld [vmem:[#allocation3 + $0xc7] sm:$0xff]
        %v3159 = vld [vmem:[#allocation3 + $0xcf] sm:$0xff]
        %v3160 = vld [vmem:[#allocation3 + $0xe7] sm:$0xff]
        %v3161 = vld [vmem:[#allocation3 + $0xef] sm:$0xff]
        %v3162 = vld [vmem:[#allocation3 + $0x107] sm:$0xff]
        %v3163 = vld [vmem:[#allocation3 + $0x10f] sm:$0xff]
        %v3164 = vld [vmem:[#allocation3 + $0x127] sm:$0xff]
        %v3165 = vld [vmem:[#allocation3 + $0x12f] sm:$0xff]
        %v3166 = vld [vmem:[#allocation3 + $0x147] sm:$0xff]
        %v3167 = vld [vmem:[#allocation3 + $0x14f] sm:$0xff]
        %v3168 = vld [vmem:[#allocation3 + $0x167] sm:$0xff]
        %v3169 = vld [vmem:[#allocation3 + $0x16f] sm:$0xff]
        %v3170 = vld [vmem:[#allocation3 + $0x187] sm:$0xff]
        %v3171 = vld [vmem:[#allocation3 + $0x18f] sm:$0xff]
        %v3172 = vld [vmem:[#allocation3 + $0x1a7] sm:$0xff]
        %v3173 = vld [vmem:[#allocation3 + $0x1af] sm:$0xff]
        %v3174 = vld [vmem:[#allocation3 + $0x1c7] sm:$0xff]
        %v3175 = vld [vmem:[#allocation3 + $0x1cf] sm:$0xff]
        %v3176 = vld [vmem:[#allocation3 + $0x1e7] sm:$0xff]
        %v3177 = vld [vmem:[#allocation3 + $0x1ef] sm:$0xff]
        %v3178 = vmax.f32 %v3114, %v3146
        %v3179 = vmax.f32 %v3115, %v3147
        %v3180 = vmax.f32 %v3116, %v3148
        %v3181 = vmax.f32 %v3117, %v3149
        %v3182 = vmax.f32 %v3118, %v3150
        %v3183 = vmax.f32 %v3119, %v3151
        %v3184 = vmax.f32 %v3120, %v3152
        %v3185 = vmax.f32 %v3121, %v3153
        %v3186 = vmax.f32 %v3122, %v3154
        %v3187 = vmax.f32 %v3123, %v3155
        %v3188 = vmax.f32 %v3124, %v3156
        %v3189 = vmax.f32 %v3125, %v3157
        %v3190 = vmax.f32 %v3126, %v3158
        %v3191 = vmax.f32 %v3127, %v3159
        %v3192 = vmax.f32 %v3128, %v3160
        %v3193 = vmax.f32 %v3129, %v3161
        %v3194 = vmax.f32 %v3130, %v3162
        %v3195 = vmax.f32 %v3131, %v3163
        %v3196 = vmax.f32 %v3132, %v3164
        %v3197 = vmax.f32 %v3133, %v3165
        %v3198 = vmax.f32 %v3134, %v3166
        %v3199 = vmax.f32 %v3135, %v3167
        %v3200 = vmax.f32 %v3136, %v3168
        %v3201 = vmax.f32 %v3137, %v3169
        %v3202 = vmax.f32 %v3138, %v3170
        %v3203 = vmax.f32 %v3139, %v3171
        %v3204 = vmax.f32 %v3140, %v3172
        %v3205 = vmax.f32 %v3141, %v3173
        %v3206 = vmax.f32 %v3142, %v3174
        %v3207 = vmax.f32 %v3143, %v3175
        %v3208 = vmax.f32 %v3144, %v3176
        %v3209 = vmax.f32 %v3145, %v3177
        %v3210 = vld [vmem:[#allocation3 + $0x8] sm:$0xff]
        %v3211 = vld [vmem:[#allocation3 + $0x10] sm:$0xff]
        %v3212 = vld [vmem:[#allocation3 + $0x28] sm:$0xff]
        %v3213 = vld [vmem:[#allocation3 + $0x30] sm:$0xff]
        %v3214 = vld [vmem:[#allocation3 + $0x48] sm:$0xff]
        %v3215 = vld [vmem:[#allocation3 + $0x50] sm:$0xff]
        %v3216 = vld [vmem:[#allocation3 + $0x68] sm:$0xff]
        %v3217 = vld [vmem:[#allocation3 + $0x70] sm:$0xff]
        %v3218 = vld [vmem:[#allocation3 + $0x88] sm:$0xff]
        %v3219 = vld [vmem:[#allocation3 + $0x90] sm:$0xff]
        %v3220 = vld [vmem:[#allocation3 + $0xa8] sm:$0xff]
        %v3221 = vld [vmem:[#allocation3 + $0xb0] sm:$0xff]
        %v3222 = vld [vmem:[#allocation3 + $0xc8] sm:$0xff]
        %v3223 = vld [vmem:[#allocation3 + $0xd0] sm:$0xff]
        %v3224 = vld [vmem:[#allocation3 + $0xe8] sm:$0xff]
        %v3225 = vld [vmem:[#allocation3 + $0xf0] sm:$0xff]
        %v3226 = vld [vmem:[#allocation3 + $0x108] sm:$0xff]
        %v3227 = vld [vmem:[#allocation3 + $0x110] sm:$0xff]
        %v3228 = vld [vmem:[#allocation3 + $0x128] sm:$0xff]
        %v3229 = vld [vmem:[#allocation3 + $0x130] sm:$0xff]
        %v3230 = vld [vmem:[#allocation3 + $0x148] sm:$0xff]
        %v3231 = vld [vmem:[#allocation3 + $0x150] sm:$0xff]
        %v3232 = vld [vmem:[#allocation3 + $0x168] sm:$0xff]
        %v3233 = vld [vmem:[#allocation3 + $0x170] sm:$0xff]
        %v3234 = vld [vmem:[#allocation3 + $0x188] sm:$0xff]
        %v3235 = vld [vmem:[#allocation3 + $0x190] sm:$0xff]
        %v3236 = vld [vmem:[#allocation3 + $0x1a8] sm:$0xff]
        %v3237 = vld [vmem:[#allocation3 + $0x1b0] sm:$0xff]
        %v3238 = vld [vmem:[#allocation3 + $0x1c8] sm:$0xff]
        %v3239 = vld [vmem:[#allocation3 + $0x1d0] sm:$0xff]
        %v3240 = vld [vmem:[#allocation3 + $0x1e8] sm:$0xff]
        %v3241 = vld [vmem:[#allocation3 + $0x1f0] sm:$0xff]
        %v3242 = vmax.f32 %v3178, %v3210
        %v3243 = vmax.f32 %v3179, %v3211
        %v3244 = vmax.f32 %v3180, %v3212
        %v3245 = vmax.f32 %v3181, %v3213
        %v3246 = vmax.f32 %v3182, %v3214
        %v3247 = vmax.f32 %v3183, %v3215
        %v3248 = vmax.f32 %v3184, %v3216
        %v3249 = vmax.f32 %v3185, %v3217
        %v3250 = vmax.f32 %v3186, %v3218
        %v3251 = vmax.f32 %v3187, %v3219
        %v3252 = vmax.f32 %v3188, %v3220
        %v3253 = vmax.f32 %v3189, %v3221
        %v3254 = vmax.f32 %v3190, %v3222
        %v3255 = vmax.f32 %v3191, %v3223
        %v3256 = vmax.f32 %v3192, %v3224
        %v3257 = vmax.f32 %v3193, %v3225
        %v3258 = vmax.f32 %v3194, %v3226
        %v3259 = vmax.f32 %v3195, %v3227
        %v3260 = vmax.f32 %v3196, %v3228
        %v3261 = vmax.f32 %v3197, %v3229
        %v3262 = vmax.f32 %v3198, %v3230
        %v3263 = vmax.f32 %v3199, %v3231
        %v3264 = vmax.f32 %v3200, %v3232
        %v3265 = vmax.f32 %v3201, %v3233
        %v3266 = vmax.f32 %v3202, %v3234
        %v3267 = vmax.f32 %v3203, %v3235
        %v3268 = vmax.f32 %v3204, %v3236
        %v3269 = vmax.f32 %v3205, %v3237
        %v3270 = vmax.f32 %v3206, %v3238
        %v3271 = vmax.f32 %v3207, %v3239
        %v3272 = vmax.f32 %v3208, %v3240
        %v3273 = vmax.f32 %v3209, %v3241
        %v3274 = vld [vmem:[#allocation3 + $0x9] sm:$0xff]
        %v3275 = vld [vmem:[#allocation3 + $0x11] sm:$0xff]
        %v3276 = vld [vmem:[#allocation3 + $0x29] sm:$0xff]
        %v3277 = vld [vmem:[#allocation3 + $0x31] sm:$0xff]
        %v3278 = vld [vmem:[#allocation3 + $0x49] sm:$0xff]
        %v3279 = vld [vmem:[#allocation3 + $0x51] sm:$0xff]
        %v3280 = vld [vmem:[#allocation3 + $0x69] sm:$0xff]
        %v3281 = vld [vmem:[#allocation3 + $0x71] sm:$0xff]
        %v3282 = vld [vmem:[#allocation3 + $0x89] sm:$0xff]
        %v3283 = vld [vmem:[#allocation3 + $0x91] sm:$0xff]
        %v3284 = vld [vmem:[#allocation3 + $0xa9] sm:$0xff]
        %v3285 = vld [vmem:[#allocation3 + $0xb1] sm:$0xff]
        %v3286 = vld [vmem:[#allocation3 + $0xc9] sm:$0xff]
        %v3287 = vld [vmem:[#allocation3 + $0xd1] sm:$0xff]
        %v3288 = vld [vmem:[#allocation3 + $0xe9] sm:$0xff]
        %v3289 = vld [vmem:[#allocation3 + $0xf1] sm:$0xff]
        %v3290 = vld [vmem:[#allocation3 + $0x109] sm:$0xff]
        %v3291 = vld [vmem:[#allocation3 + $0x111] sm:$0xff]
        %v3292 = vld [vmem:[#allocation3 + $0x129] sm:$0xff]
        %v3293 = vld [vmem:[#allocation3 + $0x131] sm:$0xff]
        %v3294 = vld [vmem:[#allocation3 + $0x149] sm:$0xff]
        %v3295 = vld [vmem:[#allocation3 + $0x151] sm:$0xff]
        %v3296 = vld [vmem:[#allocation3 + $0x169] sm:$0xff]
        %v3297 = vld [vmem:[#allocation3 + $0x171] sm:$0xff]
        %v3298 = vld [vmem:[#allocation3 + $0x189] sm:$0xff]
        %v3299 = vld [vmem:[#allocation3 + $0x191] sm:$0xff]
        %v3300 = vld [vmem:[#allocation3 + $0x1a9] sm:$0xff]
        %v3301 = vld [vmem:[#allocation3 + $0x1b1] sm:$0xff]
        %v3302 = vld [vmem:[#allocation3 + $0x1c9] sm:$0xff]
        %v3303 = vld [vmem:[#allocation3 + $0x1d1] sm:$0xff]
        %v3304 = vld [vmem:[#allocation3 + $0x1e9] sm:$0xff]
        %v3305 = vld [vmem:[#allocation3 + $0x1f1] sm:$0xff]
        %v3306 = vmax.f32 %v3242, %v3274
        %v3307 = vmax.f32 %v3243, %v3275
        %v3308 = vmax.f32 %v3244, %v3276
        %v3309 = vmax.f32 %v3245, %v3277
        %v3310 = vmax.f32 %v3246, %v3278
        %v3311 = vmax.f32 %v3247, %v3279
        %v3312 = vmax.f32 %v3248, %v3280
        %v3313 = vmax.f32 %v3249, %v3281
        %v3314 = vmax.f32 %v3250, %v3282
        %v3315 = vmax.f32 %v3251, %v3283
        %v3316 = vmax.f32 %v3252, %v3284
        %v3317 = vmax.f32 %v3253, %v3285
        %v3318 = vmax.f32 %v3254, %v3286
        %v3319 = vmax.f32 %v3255, %v3287
        %v3320 = vmax.f32 %v3256, %v3288
        %v3321 = vmax.f32 %v3257, %v3289
        %v3322 = vmax.f32 %v3258, %v3290
        %v3323 = vmax.f32 %v3259, %v3291
        %v3324 = vmax.f32 %v3260, %v3292
        %v3325 = vmax.f32 %v3261, %v3293
        %v3326 = vmax.f32 %v3262, %v3294
        %v3327 = vmax.f32 %v3263, %v3295
        %v3328 = vmax.f32 %v3264, %v3296
        %v3329 = vmax.f32 %v3265, %v3297
        %v3330 = vmax.f32 %v3266, %v3298
        %v3331 = vmax.f32 %v3267, %v3299
        %v3332 = vmax.f32 %v3268, %v3300
        %v3333 = vmax.f32 %v3269, %v3301
        %v3334 = vmax.f32 %v3270, %v3302
        %v3335 = vmax.f32 %v3271, %v3303
        %v3336 = vmax.f32 %v3272, %v3304
        %v3337 = vmax.f32 %v3273, %v3305
        %v3338 = vld [vmem:[#allocation3 + $0xa] sm:$0xff]
        %v3339 = vld [vmem:[#allocation3 + $0x12] sm:$0xff]
        %v3340 = vld [vmem:[#allocation3 + $0x2a] sm:$0xff]
        %v3341 = vld [vmem:[#allocation3 + $0x32] sm:$0xff]
        %v3342 = vld [vmem:[#allocation3 + $0x4a] sm:$0xff]
        %v3343 = vld [vmem:[#allocation3 + $0x52] sm:$0xff]
        %v3344 = vld [vmem:[#allocation3 + $0x6a] sm:$0xff]
        %v3345 = vld [vmem:[#allocation3 + $0x72] sm:$0xff]
        %v3346 = vld [vmem:[#allocation3 + $0x8a] sm:$0xff]
        %v3347 = vld [vmem:[#allocation3 + $0x92] sm:$0xff]
        %v3348 = vld [vmem:[#allocation3 + $0xaa] sm:$0xff]
        %v3349 = vld [vmem:[#allocation3 + $0xb2] sm:$0xff]
        %v3350 = vld [vmem:[#allocation3 + $0xca] sm:$0xff]
        %v3351 = vld [vmem:[#allocation3 + $0xd2] sm:$0xff]
        %v3352 = vld [vmem:[#allocation3 + $0xea] sm:$0xff]
        %v3353 = vld [vmem:[#allocation3 + $0xf2] sm:$0xff]
        %v3354 = vld [vmem:[#allocation3 + $0x10a] sm:$0xff]
        %v3355 = vld [vmem:[#allocation3 + $0x112] sm:$0xff]
        %v3356 = vld [vmem:[#allocation3 + $0x12a] sm:$0xff]
        %v3357 = vld [vmem:[#allocation3 + $0x132] sm:$0xff]
        %v3358 = vld [vmem:[#allocation3 + $0x14a] sm:$0xff]
        %v3359 = vld [vmem:[#allocation3 + $0x152] sm:$0xff]
        %v3360 = vld [vmem:[#allocation3 + $0x16a] sm:$0xff]
        %v3361 = vld [vmem:[#allocation3 + $0x172] sm:$0xff]
        %v3362 = vld [vmem:[#allocation3 + $0x18a] sm:$0xff]
        %v3363 = vld [vmem:[#allocation3 + $0x192] sm:$0xff]
        %v3364 = vld [vmem:[#allocation3 + $0x1aa] sm:$0xff]
        %v3365 = vld [vmem:[#allocation3 + $0x1b2] sm:$0xff]
        %v3366 = vld [vmem:[#allocation3 + $0x1ca] sm:$0xff]
        %v3367 = vld [vmem:[#allocation3 + $0x1d2] sm:$0xff]
        %v3368 = vld [vmem:[#allocation3 + $0x1ea] sm:$0xff]
        %v3369 = vld [vmem:[#allocation3 + $0x1f2] sm:$0xff]
        %v3370 = vmax.f32 %v3306, %v3338
        %v3371 = vmax.f32 %v3307, %v3339
        %v3372 = vmax.f32 %v3308, %v3340
        %v3373 = vmax.f32 %v3309, %v3341
        %v3374 = vmax.f32 %v3310, %v3342
        %v3375 = vmax.f32 %v3311, %v3343
        %v3376 = vmax.f32 %v3312, %v3344
        %v3377 = vmax.f32 %v3313, %v3345
        %v3378 = vmax.f32 %v3314, %v3346
        %v3379 = vmax.f32 %v3315, %v3347
        %v3380 = vmax.f32 %v3316, %v3348
        %v3381 = vmax.f32 %v3317, %v3349
        %v3382 = vmax.f32 %v3318, %v3350
        %v3383 = vmax.f32 %v3319, %v3351
        %v3384 = vmax.f32 %v3320, %v3352
        %v3385 = vmax.f32 %v3321, %v3353
        %v3386 = vmax.f32 %v3322, %v3354
        %v3387 = vmax.f32 %v3323, %v3355
        %v3388 = vmax.f32 %v3324, %v3356
        %v3389 = vmax.f32 %v3325, %v3357
        %v3390 = vmax.f32 %v3326, %v3358
        %v3391 = vmax.f32 %v3327, %v3359
        %v3392 = vmax.f32 %v3328, %v3360
        %v3393 = vmax.f32 %v3329, %v3361
        %v3394 = vmax.f32 %v3330, %v3362
        %v3395 = vmax.f32 %v3331, %v3363
        %v3396 = vmax.f32 %v3332, %v3364
        %v3397 = vmax.f32 %v3333, %v3365
        %v3398 = vmax.f32 %v3334, %v3366
        %v3399 = vmax.f32 %v3335, %v3367
        %v3400 = vmax.f32 %v3336, %v3368
        %v3401 = vmax.f32 %v3337, %v3369
        %v3402 = vld [vmem:[%s410] sm:$0xf]
        %v3403 = vpack.c.bf16 %v3371, %v3370
        %v3404 = vpack.c.bf16 %v3373, %v3372
        %v3405 = vpack.c.bf16 %v3375, %v3374
        %v3406 = vpack.c.bf16 %v3377, %v3376
        %v3407 = vpack.c.bf16 %v3379, %v3378
        %v3408 = vpack.c.bf16 %v3381, %v3380
        %v3409 = vpack.c.bf16 %v3383, %v3382
        %v3410 = vpack.c.bf16 %v3385, %v3384
        %v3411 = vpack.c.bf16 %v3387, %v3386
        %v3412 = vpack.c.bf16 %v3389, %v3388
        %v3413 = vpack.c.bf16 %v3391, %v3390
        %v3414 = vpack.c.bf16 %v3393, %v3392
        %v3415 = vpack.c.bf16 %v3395, %v3394
        %v3416 = vpack.c.bf16 %v3397, %v3396
        %v3417 = vpack.c.bf16 %v3399, %v3398
        %v3418 = vpack.c.bf16 %v3401, %v3400
        %v3420 = vsel %vm1239, %v3402, 0
        %v3423 = vsel %vm1239, %v3403, 0
        %v3426 = vsel %vm1239, %v3404, 0
        %v3429 = vsel %vm1239, %v3405, 0
        %v3432 = vsel %vm1239, %v3406, 0
        %v3435 = vsel %vm1239, %v3407, 0
        %v3438 = vsel %vm1239, %v3408, 0
        %v3441 = vsel %vm1239, %v3409, 0
        %v3444 = vsel %vm1239, %v3410, 0
        %v3447 = vsel %vm1239, %v3411, 0
        %v3450 = vsel %vm1239, %v3412, 0
        %v3453 = vsel %vm1239, %v3413, 0
        %v3456 = vsel %vm1239, %v3414, 0
        %v3459 = vsel %vm1239, %v3415, 0
        %v3462 = vsel %vm1239, %v3416, 0
        %v3465 = vsel %vm1239, %v3417, 0
        %v3468 = vsel %vm1239, %v3418, 0
        %3470 = vmatpush.bf16.xpose.msra.mxu0 %v3444
        %3471 = vmatpush.bf16.xpose.msra.mxu0 %v3441
        %3472 = vmatpush.bf16.xpose.msra.mxu0 %v3438
        %3473 = vmatpush.bf16.xpose.msra.mxu0 %v3435
        %3474 = vmatpush.bf16.xpose.msra.mxu0 %v3432
        %3475 = vmatpush.bf16.xpose.msra.mxu0 %v3429
        %3476 = vmatpush.bf16.xpose.msra.mxu0 %v3426
        %3477 = vmatpush.bf16.xpose.msra.mxu0 %v3423
        %3478 = vmatmul.bf16.gmra.mxu0 %v3420
        %v3479 = vpop.f32.mrf.mxu0
        %v3480 = vadd.f32 0.0, %v3479
        %v3481 = vpop.f32.mrf.mxu0
        %3482 = vdwg.mxu0
        %3483 = vmatpush.bf16.xpose.msra.mxu0 %v3468
        %3484 = vmatpush.bf16.xpose.msra.mxu0 %v3465
        %3485 = vmatpush.bf16.xpose.msra.mxu0 %v3462
        %3486 = vmatpush.bf16.xpose.msra.mxu0 %v3459
        %3487 = vmatpush.bf16.xpose.msra.mxu0 %v3456
        %3488 = vmatpush.bf16.xpose.msra.mxu0 %v3453
        %3489 = vmatpush.bf16.xpose.msra.mxu0 %v3450
        %3490 = vmatpush.bf16.xpose.msra.mxu0 %v3447
        %3491 = vmatmul.bf16.gmra.mxu0 %v3420
        %v3492 = vpop.f32.mrf.mxu0
        %v3493 = vadd.f32 0.0, %v3492
        %v3494 = vpop.f32.mrf.mxu0
        %3495 = vdwg.mxu0
        %v3496 = vadd.f32 %v2426, %v3480
        %v3497 = vadd.f32 %v2439, %v3493
        %3498 = vst.msk [vmem:[%s1258 + $0x8] sm:$0xff] %vm1239, %v3370
        %3499 = vst.msk [vmem:[%s1258 + $0x10] sm:$0xff] %vm1239, %v3371
        %3500 = vst.msk [vmem:[%s1258 + $0x28] sm:$0xff] %vm1239, %v3372
        %3501 = vst.msk [vmem:[%s1258 + $0x30] sm:$0xff] %vm1239, %v3373
        %3502 = vst.msk [vmem:[%s1258 + $0x48] sm:$0xff] %vm1239, %v3374
        %3503 = vst.msk [vmem:[%s1258 + $0x50] sm:$0xff] %vm1239, %v3375
        %3504 = vst.msk [vmem:[%s1258 + $0x68] sm:$0xff] %vm1239, %v3376
        %3505 = vst.msk [vmem:[%s1258 + $0x70] sm:$0xff] %vm1239, %v3377
        %3506 = vst.msk [vmem:[%s1258 + $0x88] sm:$0xff] %vm1239, %v3378
        %3507 = vst.msk [vmem:[%s1258 + $0x90] sm:$0xff] %vm1239, %v3379
        %3508 = vst.msk [vmem:[%s1258 + $0xa8] sm:$0xff] %vm1239, %v3380
        %3509 = vst.msk [vmem:[%s1258 + $0xb0] sm:$0xff] %vm1239, %v3381
        %3510 = vst.msk [vmem:[%s1258 + $0xc8] sm:$0xff] %vm1239, %v3382
        %3511 = vst.msk [vmem:[%s1258 + $0xd0] sm:$0xff] %vm1239, %v3383
        %3512 = vst.msk [vmem:[%s1258 + $0xe8] sm:$0xff] %vm1239, %v3384
        %3513 = vst.msk [vmem:[%s1258 + $0xf0] sm:$0xff] %vm1239, %v3385
        %3514 = vst.msk [vmem:[%s1258 + $0x108] sm:$0xff] %vm1239, %v3386
        %3515 = vst.msk [vmem:[%s1258 + $0x110] sm:$0xff] %vm1239, %v3387
        %3516 = vst.msk [vmem:[%s1258 + $0x128] sm:$0xff] %vm1239, %v3388
        %3517 = vst.msk [vmem:[%s1258 + $0x130] sm:$0xff] %vm1239, %v3389
        %3518 = vst.msk [vmem:[%s1258 + $0x148] sm:$0xff] %vm1239, %v3390
        %3519 = vst.msk [vmem:[%s1258 + $0x150] sm:$0xff] %vm1239, %v3391
        %3520 = vst.msk [vmem:[%s1258 + $0x168] sm:$0xff] %vm1239, %v3392
        %3521 = vst.msk [vmem:[%s1258 + $0x170] sm:$0xff] %vm1239, %v3393
        %3522 = vst.msk [vmem:[%s1258 + $0x188] sm:$0xff] %vm1239, %v3394
        %3523 = vst.msk [vmem:[%s1258 + $0x190] sm:$0xff] %vm1239, %v3395
        %3524 = vst.msk [vmem:[%s1258 + $0x1a8] sm:$0xff] %vm1239, %v3396
        %3525 = vst.msk [vmem:[%s1258 + $0x1b0] sm:$0xff] %vm1239, %v3397
        %3526 = vst.msk [vmem:[%s1258 + $0x1c8] sm:$0xff] %vm1239, %v3398
        %3527 = vst.msk [vmem:[%s1258 + $0x1d0] sm:$0xff] %vm1239, %v3399
        %3528 = vst.msk [vmem:[%s1258 + $0x1e8] sm:$0xff] %vm1239, %v3400
        %3529 = vst.msk [vmem:[%s1258 + $0x1f0] sm:$0xff] %vm1239, %v3401
        %v3530 = vld [vmem:[#allocation2] sm:$0xff]
        %v3531 = vld [vmem:[#allocation2 + $0x8] sm:$0xff]
        %v3532 = vld [vmem:[#allocation2 + $0x10] sm:$0xff]
        %v3533 = vld [vmem:[#allocation2 + $0x18] sm:$0x3]
        %v3534 = vld [vmem:[#allocation2 + $0x20] sm:$0xff]
        %v3535 = vld [vmem:[#allocation2 + $0x28] sm:$0xff]
        %v3536 = vld [vmem:[#allocation2 + $0x30] sm:$0xff]
        %v3537 = vld [vmem:[#allocation2 + $0x38] sm:$0x3]
        %v3538 = vld [vmem:[#allocation2 + $0x40] sm:$0xff]
        %v3539 = vld [vmem:[#allocation2 + $0x48] sm:$0xff]
        %v3540 = vld [vmem:[#allocation2 + $0x50] sm:$0xff]
        %v3541 = vld [vmem:[#allocation2 + $0x58] sm:$0x3]
        %v3542 = vld [vmem:[#allocation2 + $0x60] sm:$0xff]
        %v3543 = vld [vmem:[#allocation2 + $0x68] sm:$0xff]
        %v3544 = vld [vmem:[#allocation2 + $0x70] sm:$0xff]
        %v3545 = vld [vmem:[#allocation2 + $0x78] sm:$0x3]
        %v3546 = vld [vmem:[#allocation2 + $0x80] sm:$0xff]
        %v3547 = vld [vmem:[#allocation2 + $0x88] sm:$0xff]
        %v3548 = vld [vmem:[#allocation2 + $0x90] sm:$0xff]
        %v3549 = vld [vmem:[#allocation2 + $0x98] sm:$0x3]
        %v3550 = vld [vmem:[#allocation2 + $0xa0] sm:$0xff]
        %v3551 = vld [vmem:[#allocation2 + $0xa8] sm:$0xff]
        %v3552 = vld [vmem:[#allocation2 + $0xb0] sm:$0xff]
        %v3553 = vld [vmem:[#allocation2 + $0xb8] sm:$0x3]
        %v3554 = vld [vmem:[#allocation2 + $0xc0] sm:$0xff]
        %v3555 = vld [vmem:[#allocation2 + $0xc8] sm:$0xff]
        %v3556 = vld [vmem:[#allocation2 + $0xd0] sm:$0xff]
        %v3557 = vld [vmem:[#allocation2 + $0xd8] sm:$0x3]
        %v3558 = vld [vmem:[#allocation2 + $0xe0] sm:$0xff]
        %v3559 = vld [vmem:[#allocation2 + $0xe8] sm:$0xff]
        %v3560 = vld [vmem:[#allocation2 + $0xf0] sm:$0xff]
        %v3561 = vld [vmem:[#allocation2 + $0xf8] sm:$0x3]
        %v3562 = vld [vmem:[#allocation2 + $0x100] sm:$0xff]
        %v3563 = vld [vmem:[#allocation2 + $0x108] sm:$0xff]
        %v3564 = vld [vmem:[#allocation2 + $0x110] sm:$0xff]
        %v3565 = vld [vmem:[#allocation2 + $0x118] sm:$0x3]
        %v3566 = vld [vmem:[#allocation2 + $0x120] sm:$0xff]
        %v3567 = vld [vmem:[#allocation2 + $0x128] sm:$0xff]
        %v3568 = vld [vmem:[#allocation2 + $0x130] sm:$0xff]
        %v3569 = vld [vmem:[#allocation2 + $0x138] sm:$0x3]
        %v3570 = vld [vmem:[#allocation2 + $0x140] sm:$0xff]
        %v3571 = vld [vmem:[#allocation2 + $0x148] sm:$0xff]
        %v3572 = vld [vmem:[#allocation2 + $0x150] sm:$0xff]
        %v3573 = vld [vmem:[#allocation2 + $0x158] sm:$0x3]
        %v3574 = vld [vmem:[#allocation2 + $0x160] sm:$0xff]
        %v3575 = vld [vmem:[#allocation2 + $0x168] sm:$0xff]
        %v3576 = vld [vmem:[#allocation2 + $0x170] sm:$0xff]
        %v3577 = vld [vmem:[#allocation2 + $0x178] sm:$0x3]
        %v3578 = vld [vmem:[#allocation2 + $0x180] sm:$0xff]
        %v3579 = vld [vmem:[#allocation2 + $0x188] sm:$0xff]
        %v3580 = vld [vmem:[#allocation2 + $0x190] sm:$0xff]
        %v3581 = vld [vmem:[#allocation2 + $0x198] sm:$0x3]
        %v3582 = vld [vmem:[#allocation2 + $0x1a0] sm:$0xff]
        %v3583 = vld [vmem:[#allocation2 + $0x1a8] sm:$0xff]
        %v3584 = vld [vmem:[#allocation2 + $0x1b0] sm:$0xff]
        %v3585 = vld [vmem:[#allocation2 + $0x1b8] sm:$0x3]
        %v3586 = vld [vmem:[#allocation2 + $0x1c0] sm:$0xff]
        %v3587 = vld [vmem:[#allocation2 + $0x1c8] sm:$0xff]
        %v3588 = vld [vmem:[#allocation2 + $0x1d0] sm:$0xff]
        %v3589 = vld [vmem:[#allocation2 + $0x1d8] sm:$0x3]
        %v3590 = vld [vmem:[#allocation2 + $0x1e0] sm:$0xff]
        %v3591 = vld [vmem:[#allocation2 + $0x1e8] sm:$0xff]
        %v3592 = vld [vmem:[#allocation2 + $0x1f0] sm:$0xff]
        %v3593 = vld [vmem:[#allocation2 + $0x1f8] sm:$0x3]
        %v3594 = vld [vmem:[%s1404] sm:$0xff]
        %v3595 = vld [vmem:[%s1404 + $0x8] sm:$0xff]
        %v3596 = vld [vmem:[%s1404 + $0x10] sm:$0xff]
        %v3597 = vld [vmem:[%s1404 + $0x18] sm:$0x3]
        %v3598 = vld [vmem:[%s1404 + $0x20] sm:$0xff]
        %v3599 = vld [vmem:[%s1404 + $0x28] sm:$0xff]
        %v3600 = vld [vmem:[%s1404 + $0x30] sm:$0xff]
        %v3601 = vld [vmem:[%s1404 + $0x38] sm:$0x3]
        %v3602 = vld [vmem:[%s1404 + $0x40] sm:$0xff]
        %v3603 = vld [vmem:[%s1404 + $0x48] sm:$0xff]
        %v3604 = vld [vmem:[%s1404 + $0x50] sm:$0xff]
        %v3605 = vld [vmem:[%s1404 + $0x58] sm:$0x3]
        %v3606 = vld [vmem:[%s1404 + $0x60] sm:$0xff]
        %v3607 = vld [vmem:[%s1404 + $0x68] sm:$0xff]
        %v3608 = vld [vmem:[%s1404 + $0x70] sm:$0xff]
        %v3609 = vld [vmem:[%s1404 + $0x78] sm:$0x3]
        %v3610 = vld [vmem:[%s1404 + $0x80] sm:$0xff]
        %v3611 = vld [vmem:[%s1404 + $0x88] sm:$0xff]
        %v3612 = vld [vmem:[%s1404 + $0x90] sm:$0xff]
        %v3613 = vld [vmem:[%s1404 + $0x98] sm:$0x3]
        %v3614 = vld [vmem:[%s1404 + $0xa0] sm:$0xff]
        %v3615 = vld [vmem:[%s1404 + $0xa8] sm:$0xff]
        %v3616 = vld [vmem:[%s1404 + $0xb0] sm:$0xff]
        %v3617 = vld [vmem:[%s1404 + $0xb8] sm:$0x3]
        %v3618 = vld [vmem:[%s1404 + $0xc0] sm:$0xff]
        %v3619 = vld [vmem:[%s1404 + $0xc8] sm:$0xff]
        %v3620 = vld [vmem:[%s1404 + $0xd0] sm:$0xff]
        %v3621 = vld [vmem:[%s1404 + $0xd8] sm:$0x3]
        %v3622 = vld [vmem:[%s1404 + $0xe0] sm:$0xff]
        %v3623 = vld [vmem:[%s1404 + $0xe8] sm:$0xff]
        %v3624 = vld [vmem:[%s1404 + $0xf0] sm:$0xff]
        %v3625 = vld [vmem:[%s1404 + $0xf8] sm:$0x3]
        %v3626 = vld [vmem:[%s1404 + $0x100] sm:$0xff]
        %v3627 = vld [vmem:[%s1404 + $0x108] sm:$0xff]
        %v3628 = vld [vmem:[%s1404 + $0x110] sm:$0xff]
        %v3629 = vld [vmem:[%s1404 + $0x118] sm:$0x3]
        %v3630 = vld [vmem:[%s1404 + $0x120] sm:$0xff]
        %v3631 = vld [vmem:[%s1404 + $0x128] sm:$0xff]
        %v3632 = vld [vmem:[%s1404 + $0x130] sm:$0xff]
        %v3633 = vld [vmem:[%s1404 + $0x138] sm:$0x3]
        %v3634 = vld [vmem:[%s1404 + $0x140] sm:$0xff]
        %v3635 = vld [vmem:[%s1404 + $0x148] sm:$0xff]
        %v3636 = vld [vmem:[%s1404 + $0x150] sm:$0xff]
        %v3637 = vld [vmem:[%s1404 + $0x158] sm:$0x3]
        %v3638 = vld [vmem:[%s1404 + $0x160] sm:$0xff]
        %v3639 = vld [vmem:[%s1404 + $0x168] sm:$0xff]
        %v3640 = vld [vmem:[%s1404 + $0x170] sm:$0xff]
        %v3641 = vld [vmem:[%s1404 + $0x178] sm:$0x3]
        %v3642 = vld [vmem:[%s1404 + $0x180] sm:$0xff]
        %v3643 = vld [vmem:[%s1404 + $0x188] sm:$0xff]
        %v3644 = vld [vmem:[%s1404 + $0x190] sm:$0xff]
        %v3645 = vld [vmem:[%s1404 + $0x198] sm:$0x3]
        %v3646 = vld [vmem:[%s1404 + $0x1a0] sm:$0xff]
        %v3647 = vld [vmem:[%s1404 + $0x1a8] sm:$0xff]
        %v3648 = vld [vmem:[%s1404 + $0x1b0] sm:$0xff]
        %v3649 = vld [vmem:[%s1404 + $0x1b8] sm:$0x3]
        %v3650 = vld [vmem:[%s1404 + $0x1c0] sm:$0xff]
        %v3651 = vld [vmem:[%s1404 + $0x1c8] sm:$0xff]
        %v3652 = vld [vmem:[%s1404 + $0x1d0] sm:$0xff]
        %v3653 = vld [vmem:[%s1404 + $0x1d8] sm:$0x3]
        %v3654 = vld [vmem:[%s1404 + $0x1e0] sm:$0xff]
        %v3655 = vld [vmem:[%s1404 + $0x1e8] sm:$0xff]
        %v3656 = vld [vmem:[%s1404 + $0x1f0] sm:$0xff]
        %v3657 = vld [vmem:[%s1404 + $0x1f8] sm:$0x3]
        %v3658 = vmax.f32 %v3530, %v3594
        %v3659 = vmax.f32 %v3531, %v3595
        %v3660 = vmax.f32 %v3532, %v3596
        %v3661 = vmax.f32 %v3533, %v3597
        %v3662 = vmax.f32 %v3534, %v3598
        %v3663 = vmax.f32 %v3535, %v3599
        %v3664 = vmax.f32 %v3536, %v3600
        %v3665 = vmax.f32 %v3537, %v3601
        %v3666 = vmax.f32 %v3538, %v3602
        %v3667 = vmax.f32 %v3539, %v3603
        %v3668 = vmax.f32 %v3540, %v3604
        %v3669 = vmax.f32 %v3541, %v3605
        %v3670 = vmax.f32 %v3542, %v3606
        %v3671 = vmax.f32 %v3543, %v3607
        %v3672 = vmax.f32 %v3544, %v3608
        %v3673 = vmax.f32 %v3545, %v3609
        %v3674 = vmax.f32 %v3546, %v3610
        %v3675 = vmax.f32 %v3547, %v3611
        %v3676 = vmax.f32 %v3548, %v3612
        %v3677 = vmax.f32 %v3549, %v3613
        %v3678 = vmax.f32 %v3550, %v3614
        %v3679 = vmax.f32 %v3551, %v3615
        %v3680 = vmax.f32 %v3552, %v3616
        %v3681 = vmax.f32 %v3553, %v3617
        %v3682 = vmax.f32 %v3554, %v3618
        %v3683 = vmax.f32 %v3555, %v3619
        %v3684 = vmax.f32 %v3556, %v3620
        %v3685 = vmax.f32 %v3557, %v3621
        %v3686 = vmax.f32 %v3558, %v3622
        %v3687 = vmax.f32 %v3559, %v3623
        %v3688 = vmax.f32 %v3560, %v3624
        %v3689 = vmax.f32 %v3561, %v3625
        %v3690 = vmax.f32 %v3562, %v3626
        %v3691 = vmax.f32 %v3563, %v3627
        %v3692 = vmax.f32 %v3564, %v3628
        %v3693 = vmax.f32 %v3565, %v3629
        %v3694 = vmax.f32 %v3566, %v3630
        %v3695 = vmax.f32 %v3567, %v3631
        %v3696 = vmax.f32 %v3568, %v3632
        %v3697 = vmax.f32 %v3569, %v3633
        %v3698 = vmax.f32 %v3570, %v3634
        %v3699 = vmax.f32 %v3571, %v3635
        %v3700 = vmax.f32 %v3572, %v3636
        %v3701 = vmax.f32 %v3573, %v3637
        %v3702 = vmax.f32 %v3574, %v3638
        %v3703 = vmax.f32 %v3575, %v3639
        %v3704 = vmax.f32 %v3576, %v3640
        %v3705 = vmax.f32 %v3577, %v3641
        %v3706 = vmax.f32 %v3578, %v3642
        %v3707 = vmax.f32 %v3579, %v3643
        %v3708 = vmax.f32 %v3580, %v3644
        %v3709 = vmax.f32 %v3581, %v3645
        %v3710 = vmax.f32 %v3582, %v3646
        %v3711 = vmax.f32 %v3583, %v3647
        %v3712 = vmax.f32 %v3584, %v3648
        %v3713 = vmax.f32 %v3585, %v3649
        %v3714 = vmax.f32 %v3586, %v3650
        %v3715 = vmax.f32 %v3587, %v3651
        %v3716 = vmax.f32 %v3588, %v3652
        %v3717 = vmax.f32 %v3589, %v3653
        %v3718 = vmax.f32 %v3590, %v3654
        %v3719 = vmax.f32 %v3591, %v3655
        %v3720 = vmax.f32 %v3592, %v3656
        %v3721 = vmax.f32 %v3593, %v3657
        %v3722 = vld [vmem:[%s1258] sm:$0xff]
        %v3723 = vld [vmem:[%s1258 + $0x8] sm:$0xff]
        %v3724 = vld [vmem:[%s1258 + $0x10] sm:$0xff]
        %v3725 = vld [vmem:[%s1258 + $0x18] sm:$0x3]
        %v3726 = vld [vmem:[%s1258 + $0x20] sm:$0xff]
        %v3727 = vld [vmem:[%s1258 + $0x28] sm:$0xff]
        %v3728 = vld [vmem:[%s1258 + $0x30] sm:$0xff]
        %v3729 = vld [vmem:[%s1258 + $0x38] sm:$0x3]
        %v3730 = vld [vmem:[%s1258 + $0x40] sm:$0xff]
        %v3731 = vld [vmem:[%s1258 + $0x48] sm:$0xff]
        %v3732 = vld [vmem:[%s1258 + $0x50] sm:$0xff]
        %v3733 = vld [vmem:[%s1258 + $0x58] sm:$0x3]
        %v3734 = vld [vmem:[%s1258 + $0x60] sm:$0xff]
        %v3735 = vld [vmem:[%s1258 + $0x68] sm:$0xff]
        %v3736 = vld [vmem:[%s1258 + $0x70] sm:$0xff]
        %v3737 = vld [vmem:[%s1258 + $0x78] sm:$0x3]
        %v3738 = vld [vmem:[%s1258 + $0x80] sm:$0xff]
        %v3739 = vld [vmem:[%s1258 + $0x88] sm:$0xff]
        %v3740 = vld [vmem:[%s1258 + $0x90] sm:$0xff]
        %v3741 = vld [vmem:[%s1258 + $0x98] sm:$0x3]
        %v3742 = vld [vmem:[%s1258 + $0xa0] sm:$0xff]
        %v3743 = vld [vmem:[%s1258 + $0xa8] sm:$0xff]
        %v3744 = vld [vmem:[%s1258 + $0xb0] sm:$0xff]
        %v3745 = vld [vmem:[%s1258 + $0xb8] sm:$0x3]
        %v3746 = vld [vmem:[%s1258 + $0xc0] sm:$0xff]
        %v3747 = vld [vmem:[%s1258 + $0xc8] sm:$0xff]
        %v3748 = vld [vmem:[%s1258 + $0xd0] sm:$0xff]
        %v3749 = vld [vmem:[%s1258 + $0xd8] sm:$0x3]
        %v3750 = vld [vmem:[%s1258 + $0xe0] sm:$0xff]
        %v3751 = vld [vmem:[%s1258 + $0xe8] sm:$0xff]
        %v3752 = vld [vmem:[%s1258 + $0xf0] sm:$0xff]
        %v3753 = vld [vmem:[%s1258 + $0xf8] sm:$0x3]
        %v3754 = vld [vmem:[%s1258 + $0x100] sm:$0xff]
        %v3755 = vld [vmem:[%s1258 + $0x108] sm:$0xff]
        %v3756 = vld [vmem:[%s1258 + $0x110] sm:$0xff]
        %v3757 = vld [vmem:[%s1258 + $0x118] sm:$0x3]
        %v3758 = vld [vmem:[%s1258 + $0x120] sm:$0xff]
        %v3759 = vld [vmem:[%s1258 + $0x128] sm:$0xff]
        %v3760 = vld [vmem:[%s1258 + $0x130] sm:$0xff]
        %v3761 = vld [vmem:[%s1258 + $0x138] sm:$0x3]
        %v3762 = vld [vmem:[%s1258 + $0x140] sm:$0xff]
        %v3763 = vld [vmem:[%s1258 + $0x148] sm:$0xff]
        %v3764 = vld [vmem:[%s1258 + $0x150] sm:$0xff]
        %v3765 = vld [vmem:[%s1258 + $0x158] sm:$0x3]
        %v3766 = vld [vmem:[%s1258 + $0x160] sm:$0xff]
        %v3767 = vld [vmem:[%s1258 + $0x168] sm:$0xff]
        %v3768 = vld [vmem:[%s1258 + $0x170] sm:$0xff]
        %v3769 = vld [vmem:[%s1258 + $0x178] sm:$0x3]
        %v3770 = vld [vmem:[%s1258 + $0x180] sm:$0xff]
        %v3771 = vld [vmem:[%s1258 + $0x188] sm:$0xff]
        %v3772 = vld [vmem:[%s1258 + $0x190] sm:$0xff]
        %v3773 = vld [vmem:[%s1258 + $0x198] sm:$0x3]
        %v3774 = vld [vmem:[%s1258 + $0x1a0] sm:$0xff]
        %v3775 = vld [vmem:[%s1258 + $0x1a8] sm:$0xff]
        %v3776 = vld [vmem:[%s1258 + $0x1b0] sm:$0xff]
        %v3777 = vld [vmem:[%s1258 + $0x1b8] sm:$0x3]
        %v3778 = vld [vmem:[%s1258 + $0x1c0] sm:$0xff]
        %v3779 = vld [vmem:[%s1258 + $0x1c8] sm:$0xff]
        %v3780 = vld [vmem:[%s1258 + $0x1d0] sm:$0xff]
        %v3781 = vld [vmem:[%s1258 + $0x1d8] sm:$0x3]
        %v3782 = vld [vmem:[%s1258 + $0x1e0] sm:$0xff]
        %v3783 = vld [vmem:[%s1258 + $0x1e8] sm:$0xff]
        %v3784 = vld [vmem:[%s1258 + $0x1f0] sm:$0xff]
        %v3785 = vld [vmem:[%s1258 + $0x1f8] sm:$0x3]
        %v3786 = vmax.f32 %v3658, %v3722
        %v3787 = vmax.f32 %v3659, %v3723
        %v3788 = vmax.f32 %v3660, %v3724
        %v3789 = vmax.f32 %v3661, %v3725
        %v3790 = vmax.f32 %v3662, %v3726
        %v3791 = vmax.f32 %v3663, %v3727
        %v3792 = vmax.f32 %v3664, %v3728
        %v3793 = vmax.f32 %v3665, %v3729
        %v3794 = vmax.f32 %v3666, %v3730
        %v3795 = vmax.f32 %v3667, %v3731
        %v3796 = vmax.f32 %v3668, %v3732
        %v3797 = vmax.f32 %v3669, %v3733
        %v3798 = vmax.f32 %v3670, %v3734
        %v3799 = vmax.f32 %v3671, %v3735
        %v3800 = vmax.f32 %v3672, %v3736
        %v3801 = vmax.f32 %v3673, %v3737
        %v3802 = vmax.f32 %v3674, %v3738
        %v3803 = vmax.f32 %v3675, %v3739
        %v3804 = vmax.f32 %v3676, %v3740
        %v3805 = vmax.f32 %v3677, %v3741
        %v3806 = vmax.f32 %v3678, %v3742
        %v3807 = vmax.f32 %v3679, %v3743
        %v3808 = vmax.f32 %v3680, %v3744
        %v3809 = vmax.f32 %v3681, %v3745
        %v3810 = vmax.f32 %v3682, %v3746
        %v3811 = vmax.f32 %v3683, %v3747
        %v3812 = vmax.f32 %v3684, %v3748
        %v3813 = vmax.f32 %v3685, %v3749
        %v3814 = vmax.f32 %v3686, %v3750
        %v3815 = vmax.f32 %v3687, %v3751
        %v3816 = vmax.f32 %v3688, %v3752
        %v3817 = vmax.f32 %v3689, %v3753
        %v3818 = vmax.f32 %v3690, %v3754
        %v3819 = vmax.f32 %v3691, %v3755
        %v3820 = vmax.f32 %v3692, %v3756
        %v3821 = vmax.f32 %v3693, %v3757
        %v3822 = vmax.f32 %v3694, %v3758
        %v3823 = vmax.f32 %v3695, %v3759
        %v3824 = vmax.f32 %v3696, %v3760
        %v3825 = vmax.f32 %v3697, %v3761
        %v3826 = vmax.f32 %v3698, %v3762
        %v3827 = vmax.f32 %v3699, %v3763
        %v3828 = vmax.f32 %v3700, %v3764
        %v3829 = vmax.f32 %v3701, %v3765
        %v3830 = vmax.f32 %v3702, %v3766
        %v3831 = vmax.f32 %v3703, %v3767
        %v3832 = vmax.f32 %v3704, %v3768
        %v3833 = vmax.f32 %v3705, %v3769
        %v3834 = vmax.f32 %v3706, %v3770
        %v3835 = vmax.f32 %v3707, %v3771
        %v3836 = vmax.f32 %v3708, %v3772
        %v3837 = vmax.f32 %v3709, %v3773
        %v3838 = vmax.f32 %v3710, %v3774
        %v3839 = vmax.f32 %v3711, %v3775
        %v3840 = vmax.f32 %v3712, %v3776
        %v3841 = vmax.f32 %v3713, %v3777
        %v3842 = vmax.f32 %v3714, %v3778
        %v3843 = vmax.f32 %v3715, %v3779
        %v3844 = vmax.f32 %v3716, %v3780
        %v3845 = vmax.f32 %v3717, %v3781
        %v3846 = vmax.f32 %v3718, %v3782
        %v3847 = vmax.f32 %v3719, %v3783
        %v3848 = vmax.f32 %v3720, %v3784
        %v3849 = vmax.f32 %v3721, %v3785
        %v3850 = vld [vmem:[%s1661] sm:$0xff]
        %v3851 = vld [vmem:[%s1661 + $0x8] sm:$0xff]
        %v3852 = vld [vmem:[%s1661 + $0x10] sm:$0xff]
        %v3853 = vld [vmem:[%s1661 + $0x18] sm:$0x3]
        %v3854 = vld [vmem:[%s1661 + $0x20] sm:$0xff]
        %v3855 = vld [vmem:[%s1661 + $0x28] sm:$0xff]
        %v3856 = vld [vmem:[%s1661 + $0x30] sm:$0xff]
        %v3857 = vld [vmem:[%s1661 + $0x38] sm:$0x3]
        %v3858 = vld [vmem:[%s1661 + $0x40] sm:$0xff]
        %v3859 = vld [vmem:[%s1661 + $0x48] sm:$0xff]
        %v3860 = vld [vmem:[%s1661 + $0x50] sm:$0xff]
        %v3861 = vld [vmem:[%s1661 + $0x58] sm:$0x3]
        %v3862 = vld [vmem:[%s1661 + $0x60] sm:$0xff]
        %v3863 = vld [vmem:[%s1661 + $0x68] sm:$0xff]
        %v3864 = vld [vmem:[%s1661 + $0x70] sm:$0xff]
        %v3865 = vld [vmem:[%s1661 + $0x78] sm:$0x3]
        %v3866 = vld [vmem:[%s1661 + $0x80] sm:$0xff]
        %v3867 = vld [vmem:[%s1661 + $0x88] sm:$0xff]
        %v3868 = vld [vmem:[%s1661 + $0x90] sm:$0xff]
        %v3869 = vld [vmem:[%s1661 + $0x98] sm:$0x3]
        %v3870 = vld [vmem:[%s1661 + $0xa0] sm:$0xff]
        %v3871 = vld [vmem:[%s1661 + $0xa8] sm:$0xff]
        %v3872 = vld [vmem:[%s1661 + $0xb0] sm:$0xff]
        %v3873 = vld [vmem:[%s1661 + $0xb8] sm:$0x3]
        %v3874 = vld [vmem:[%s1661 + $0xc0] sm:$0xff]
        %v3875 = vld [vmem:[%s1661 + $0xc8] sm:$0xff]
        %v3876 = vld [vmem:[%s1661 + $0xd0] sm:$0xff]
        %v3877 = vld [vmem:[%s1661 + $0xd8] sm:$0x3]
        %v3878 = vld [vmem:[%s1661 + $0xe0] sm:$0xff]
        %v3879 = vld [vmem:[%s1661 + $0xe8] sm:$0xff]
        %v3880 = vld [vmem:[%s1661 + $0xf0] sm:$0xff]
        %v3881 = vld [vmem:[%s1661 + $0xf8] sm:$0x3]
        %v3882 = vld [vmem:[%s1661 + $0x100] sm:$0xff]
        %v3883 = vld [vmem:[%s1661 + $0x108] sm:$0xff]
        %v3884 = vld [vmem:[%s1661 + $0x110] sm:$0xff]
        %v3885 = vld [vmem:[%s1661 + $0x118] sm:$0x3]
        %v3886 = vld [vmem:[%s1661 + $0x120] sm:$0xff]
        %v3887 = vld [vmem:[%s1661 + $0x128] sm:$0xff]
        %v3888 = vld [vmem:[%s1661 + $0x130] sm:$0xff]
        %v3889 = vld [vmem:[%s1661 + $0x138] sm:$0x3]
        %v3890 = vld [vmem:[%s1661 + $0x140] sm:$0xff]
        %v3891 = vld [vmem:[%s1661 + $0x148] sm:$0xff]
        %v3892 = vld [vmem:[%s1661 + $0x150] sm:$0xff]
        %v3893 = vld [vmem:[%s1661 + $0x158] sm:$0x3]
        %v3894 = vld [vmem:[%s1661 + $0x160] sm:$0xff]
        %v3895 = vld [vmem:[%s1661 + $0x168] sm:$0xff]
        %v3896 = vld [vmem:[%s1661 + $0x170] sm:$0xff]
        %v3897 = vld [vmem:[%s1661 + $0x178] sm:$0x3]
        %v3898 = vld [vmem:[%s1661 + $0x180] sm:$0xff]
        %v3899 = vld [vmem:[%s1661 + $0x188] sm:$0xff]
        %v3900 = vld [vmem:[%s1661 + $0x190] sm:$0xff]
        %v3901 = vld [vmem:[%s1661 + $0x198] sm:$0x3]
        %v3902 = vld [vmem:[%s1661 + $0x1a0] sm:$0xff]
        %v3903 = vld [vmem:[%s1661 + $0x1a8] sm:$0xff]
        %v3904 = vld [vmem:[%s1661 + $0x1b0] sm:$0xff]
        %v3905 = vld [vmem:[%s1661 + $0x1b8] sm:$0x3]
        %v3906 = vld [vmem:[%s1661 + $0x1c0] sm:$0xff]
        %v3907 = vld [vmem:[%s1661 + $0x1c8] sm:$0xff]
        %v3908 = vld [vmem:[%s1661 + $0x1d0] sm:$0xff]
        %v3909 = vld [vmem:[%s1661 + $0x1d8] sm:$0x3]
        %v3910 = vld [vmem:[%s1661 + $0x1e0] sm:$0xff]
        %v3911 = vld [vmem:[%s1661 + $0x1e8] sm:$0xff]
        %v3912 = vld [vmem:[%s1661 + $0x1f0] sm:$0xff]
        %v3913 = vld [vmem:[%s1661 + $0x1f8] sm:$0x3]
        %v3914 = vmax.f32 %v3786, %v3850
        %v3915 = vmax.f32 %v3787, %v3851
        %v3916 = vmax.f32 %v3788, %v3852
        %v3917 = vmax.f32 %v3789, %v3853
        %v3918 = vmax.f32 %v3790, %v3854
        %v3919 = vmax.f32 %v3791, %v3855
        %v3920 = vmax.f32 %v3792, %v3856
        %v3921 = vmax.f32 %v3793, %v3857
        %v3922 = vmax.f32 %v3794, %v3858
        %v3923 = vmax.f32 %v3795, %v3859
        %v3924 = vmax.f32 %v3796, %v3860
        %v3925 = vmax.f32 %v3797, %v3861
        %v3926 = vmax.f32 %v3798, %v3862
        %v3927 = vmax.f32 %v3799, %v3863
        %v3928 = vmax.f32 %v3800, %v3864
        %v3929 = vmax.f32 %v3801, %v3865
        %v3930 = vmax.f32 %v3802, %v3866
        %v3931 = vmax.f32 %v3803, %v3867
        %v3932 = vmax.f32 %v3804, %v3868
        %v3933 = vmax.f32 %v3805, %v3869
        %v3934 = vmax.f32 %v3806, %v3870
        %v3935 = vmax.f32 %v3807, %v3871
        %v3936 = vmax.f32 %v3808, %v3872
        %v3937 = vmax.f32 %v3809, %v3873
        %v3938 = vmax.f32 %v3810, %v3874
        %v3939 = vmax.f32 %v3811, %v3875
        %v3940 = vmax.f32 %v3812, %v3876
        %v3941 = vmax.f32 %v3813, %v3877
        %v3942 = vmax.f32 %v3814, %v3878
        %v3943 = vmax.f32 %v3815, %v3879
        %v3944 = vmax.f32 %v3816, %v3880
        %v3945 = vmax.f32 %v3817, %v3881
        %v3946 = vmax.f32 %v3818, %v3882
        %v3947 = vmax.f32 %v3819, %v3883
        %v3948 = vmax.f32 %v3820, %v3884
        %v3949 = vmax.f32 %v3821, %v3885
        %v3950 = vmax.f32 %v3822, %v3886
        %v3951 = vmax.f32 %v3823, %v3887
        %v3952 = vmax.f32 %v3824, %v3888
        %v3953 = vmax.f32 %v3825, %v3889
        %v3954 = vmax.f32 %v3826, %v3890
        %v3955 = vmax.f32 %v3827, %v3891
        %v3956 = vmax.f32 %v3828, %v3892
        %v3957 = vmax.f32 %v3829, %v3893
        %v3958 = vmax.f32 %v3830, %v3894
        %v3959 = vmax.f32 %v3831, %v3895
        %v3960 = vmax.f32 %v3832, %v3896
        %v3961 = vmax.f32 %v3833, %v3897
        %v3962 = vmax.f32 %v3834, %v3898
        %v3963 = vmax.f32 %v3835, %v3899
        %v3964 = vmax.f32 %v3836, %v3900
        %v3965 = vmax.f32 %v3837, %v3901
        %v3966 = vmax.f32 %v3838, %v3902
        %v3967 = vmax.f32 %v3839, %v3903
        %v3968 = vmax.f32 %v3840, %v3904
        %v3969 = vmax.f32 %v3841, %v3905
        %v3970 = vmax.f32 %v3842, %v3906
        %v3971 = vmax.f32 %v3843, %v3907
        %v3972 = vmax.f32 %v3844, %v3908
        %v3973 = vmax.f32 %v3845, %v3909
        %v3974 = vmax.f32 %v3846, %v3910
        %v3975 = vmax.f32 %v3847, %v3911
        %v3976 = vmax.f32 %v3848, %v3912
        %v3977 = vmax.f32 %v3849, %v3913
        %v3978 = vld [vmem:[%s1790] sm:$0xff]
        %v3979 = vld [vmem:[%s1790 + $0x8] sm:$0xff]
        %v3980 = vld [vmem:[%s1790 + $0x10] sm:$0xff]
        %v3981 = vld [vmem:[%s1790 + $0x18] sm:$0x3]
        %v3982 = vld [vmem:[%s1790 + $0x20] sm:$0xff]
        %v3983 = vld [vmem:[%s1790 + $0x28] sm:$0xff]
        %v3984 = vld [vmem:[%s1790 + $0x30] sm:$0xff]
        %v3985 = vld [vmem:[%s1790 + $0x38] sm:$0x3]
        %v3986 = vld [vmem:[%s1790 + $0x40] sm:$0xff]
        %v3987 = vld [vmem:[%s1790 + $0x48] sm:$0xff]
        %v3988 = vld [vmem:[%s1790 + $0x50] sm:$0xff]
        %v3989 = vld [vmem:[%s1790 + $0x58] sm:$0x3]
        %v3990 = vld [vmem:[%s1790 + $0x60] sm:$0xff]
        %v3991 = vld [vmem:[%s1790 + $0x68] sm:$0xff]
        %v3992 = vld [vmem:[%s1790 + $0x70] sm:$0xff]
        %v3993 = vld [vmem:[%s1790 + $0x78] sm:$0x3]
        %v3994 = vld [vmem:[%s1790 + $0x80] sm:$0xff]
        %v3995 = vld [vmem:[%s1790 + $0x88] sm:$0xff]
        %v3996 = vld [vmem:[%s1790 + $0x90] sm:$0xff]
        %v3997 = vld [vmem:[%s1790 + $0x98] sm:$0x3]
        %v3998 = vld [vmem:[%s1790 + $0xa0] sm:$0xff]
        %v3999 = vld [vmem:[%s1790 + $0xa8] sm:$0xff]
        %v4000 = vld [vmem:[%s1790 + $0xb0] sm:$0xff]
        %v4001 = vld [vmem:[%s1790 + $0xb8] sm:$0x3]
        %v4002 = vld [vmem:[%s1790 + $0xc0] sm:$0xff]
        %v4003 = vld [vmem:[%s1790 + $0xc8] sm:$0xff]
        %v4004 = vld [vmem:[%s1790 + $0xd0] sm:$0xff]
        %v4005 = vld [vmem:[%s1790 + $0xd8] sm:$0x3]
        %v4006 = vld [vmem:[%s1790 + $0xe0] sm:$0xff]
        %v4007 = vld [vmem:[%s1790 + $0xe8] sm:$0xff]
        %v4008 = vld [vmem:[%s1790 + $0xf0] sm:$0xff]
        %v4009 = vld [vmem:[%s1790 + $0xf8] sm:$0x3]
        %v4010 = vld [vmem:[%s1790 + $0x100] sm:$0xff]
        %v4011 = vld [vmem:[%s1790 + $0x108] sm:$0xff]
        %v4012 = vld [vmem:[%s1790 + $0x110] sm:$0xff]
        %v4013 = vld [vmem:[%s1790 + $0x118] sm:$0x3]
        %v4014 = vld [vmem:[%s1790 + $0x120] sm:$0xff]
        %v4015 = vld [vmem:[%s1790 + $0x128] sm:$0xff]
        %v4016 = vld [vmem:[%s1790 + $0x130] sm:$0xff]
        %v4017 = vld [vmem:[%s1790 + $0x138] sm:$0x3]
        %v4018 = vld [vmem:[%s1790 + $0x140] sm:$0xff]
        %v4019 = vld [vmem:[%s1790 + $0x148] sm:$0xff]
        %v4020 = vld [vmem:[%s1790 + $0x150] sm:$0xff]
        %v4021 = vld [vmem:[%s1790 + $0x158] sm:$0x3]
        %v4022 = vld [vmem:[%s1790 + $0x160] sm:$0xff]
        %v4023 = vld [vmem:[%s1790 + $0x168] sm:$0xff]
        %v4024 = vld [vmem:[%s1790 + $0x170] sm:$0xff]
        %v4025 = vld [vmem:[%s1790 + $0x178] sm:$0x3]
        %v4026 = vld [vmem:[%s1790 + $0x180] sm:$0xff]
        %v4027 = vld [vmem:[%s1790 + $0x188] sm:$0xff]
        %v4028 = vld [vmem:[%s1790 + $0x190] sm:$0xff]
        %v4029 = vld [vmem:[%s1790 + $0x198] sm:$0x3]
        %v4030 = vld [vmem:[%s1790 + $0x1a0] sm:$0xff]
        %v4031 = vld [vmem:[%s1790 + $0x1a8] sm:$0xff]
        %v4032 = vld [vmem:[%s1790 + $0x1b0] sm:$0xff]
        %v4033 = vld [vmem:[%s1790 + $0x1b8] sm:$0x3]
        %v4034 = vld [vmem:[%s1790 + $0x1c0] sm:$0xff]
        %v4035 = vld [vmem:[%s1790 + $0x1c8] sm:$0xff]
        %v4036 = vld [vmem:[%s1790 + $0x1d0] sm:$0xff]
        %v4037 = vld [vmem:[%s1790 + $0x1d8] sm:$0x3]
        %v4038 = vld [vmem:[%s1790 + $0x1e0] sm:$0xff]
        %v4039 = vld [vmem:[%s1790 + $0x1e8] sm:$0xff]
        %v4040 = vld [vmem:[%s1790 + $0x1f0] sm:$0xff]
        %v4041 = vld [vmem:[%s1790 + $0x1f8] sm:$0x3]
        %v4042 = vmax.f32 %v3914, %v3978
        %v4043 = vmax.f32 %v3915, %v3979
        %v4044 = vmax.f32 %v3916, %v3980
        %v4045 = vmax.f32 %v3917, %v3981
        %v4046 = vmax.f32 %v3918, %v3982
        %v4047 = vmax.f32 %v3919, %v3983
        %v4048 = vmax.f32 %v3920, %v3984
        %v4049 = vmax.f32 %v3921, %v3985
        %v4050 = vmax.f32 %v3922, %v3986
        %v4051 = vmax.f32 %v3923, %v3987
        %v4052 = vmax.f32 %v3924, %v3988
        %v4053 = vmax.f32 %v3925, %v3989
        %v4054 = vmax.f32 %v3926, %v3990
        %v4055 = vmax.f32 %v3927, %v3991
        %v4056 = vmax.f32 %v3928, %v3992
        %v4057 = vmax.f32 %v3929, %v3993
        %v4058 = vmax.f32 %v3930, %v3994
        %v4059 = vmax.f32 %v3931, %v3995
        %v4060 = vmax.f32 %v3932, %v3996
        %v4061 = vmax.f32 %v3933, %v3997
        %v4062 = vmax.f32 %v3934, %v3998
        %v4063 = vmax.f32 %v3935, %v3999
        %v4064 = vmax.f32 %v3936, %v4000
        %v4065 = vmax.f32 %v3937, %v4001
        %v4066 = vmax.f32 %v3938, %v4002
        %v4067 = vmax.f32 %v3939, %v4003
        %v4068 = vmax.f32 %v3940, %v4004
        %v4069 = vmax.f32 %v3941, %v4005
        %v4070 = vmax.f32 %v3942, %v4006
        %v4071 = vmax.f32 %v3943, %v4007
        %v4072 = vmax.f32 %v3944, %v4008
        %v4073 = vmax.f32 %v3945, %v4009
        %v4074 = vmax.f32 %v3946, %v4010
        %v4075 = vmax.f32 %v3947, %v4011
        %v4076 = vmax.f32 %v3948, %v4012
        %v4077 = vmax.f32 %v3949, %v4013
        %v4078 = vmax.f32 %v3950, %v4014
        %v4079 = vmax.f32 %v3951, %v4015
        %v4080 = vmax.f32 %v3952, %v4016
        %v4081 = vmax.f32 %v3953, %v4017
        %v4082 = vmax.f32 %v3954, %v4018
        %v4083 = vmax.f32 %v3955, %v4019
        %v4084 = vmax.f32 %v3956, %v4020
        %v4085 = vmax.f32 %v3957, %v4021
        %v4086 = vmax.f32 %v3958, %v4022
        %v4087 = vmax.f32 %v3959, %v4023
        %v4088 = vmax.f32 %v3960, %v4024
        %v4089 = vmax.f32 %v3961, %v4025
        %v4090 = vmax.f32 %v3962, %v4026
        %v4091 = vmax.f32 %v3963, %v4027
        %v4092 = vmax.f32 %v3964, %v4028
        %v4093 = vmax.f32 %v3965, %v4029
        %v4094 = vmax.f32 %v3966, %v4030
        %v4095 = vmax.f32 %v3967, %v4031
        %v4096 = vmax.f32 %v3968, %v4032
        %v4097 = vmax.f32 %v3969, %v4033
        %v4098 = vmax.f32 %v3970, %v4034
        %v4099 = vmax.f32 %v3971, %v4035
        %v4100 = vmax.f32 %v3972, %v4036
        %v4101 = vmax.f32 %v3973, %v4037
        %v4102 = vmax.f32 %v3974, %v4038
        %v4103 = vmax.f32 %v3975, %v4039
        %v4104 = vmax.f32 %v3976, %v4040
        %v4105 = vmax.f32 %v3977, %v4041
        %4106 = vst.msk [vmem:[#allocation3] sm:$0xff] %vm1239, %v4042
        %4107 = vst.msk [vmem:[#allocation3 + $0x8] sm:$0xff] %vm1239, %v4043
        %4108 = vst.msk [vmem:[#allocation3 + $0x10] sm:$0xff] %vm1239, %v4044
        %4109 = vst.msk [vmem:[#allocation3 + $0x18] sm:$0x3] %vm1243, %v4045
        %4110 = vst.msk [vmem:[#allocation3 + $0x20] sm:$0xff] %vm1239, %v4046
        %4111 = vst.msk [vmem:[#allocation3 + $0x28] sm:$0xff] %vm1239, %v4047
        %4112 = vst.msk [vmem:[#allocation3 + $0x30] sm:$0xff] %vm1239, %v4048
        %4113 = vst.msk [vmem:[#allocation3 + $0x38] sm:$0x3] %vm1243, %v4049
        %4114 = vst.msk [vmem:[#allocation3 + $0x40] sm:$0xff] %vm1239, %v4050
        %4115 = vst.msk [vmem:[#allocation3 + $0x48] sm:$0xff] %vm1239, %v4051
        %4116 = vst.msk [vmem:[#allocation3 + $0x50] sm:$0xff] %vm1239, %v4052
        %4117 = vst.msk [vmem:[#allocation3 + $0x58] sm:$0x3] %vm1243, %v4053
        %4118 = vst.msk [vmem:[#allocation3 + $0x60] sm:$0xff] %vm1239, %v4054
        %4119 = vst.msk [vmem:[#allocation3 + $0x68] sm:$0xff] %vm1239, %v4055
        %4120 = vst.msk [vmem:[#allocation3 + $0x70] sm:$0xff] %vm1239, %v4056
        %4121 = vst.msk [vmem:[#allocation3 + $0x78] sm:$0x3] %vm1243, %v4057
        %4122 = vst.msk [vmem:[#allocation3 + $0x80] sm:$0xff] %vm1239, %v4058
        %4123 = vst.msk [vmem:[#allocation3 + $0x88] sm:$0xff] %vm1239, %v4059
        %4124 = vst.msk [vmem:[#allocation3 + $0x90] sm:$0xff] %vm1239, %v4060
        %4125 = vst.msk [vmem:[#allocation3 + $0x98] sm:$0x3] %vm1243, %v4061
        %4126 = vst.msk [vmem:[#allocation3 + $0xa0] sm:$0xff] %vm1239, %v4062
        %4127 = vst.msk [vmem:[#allocation3 + $0xa8] sm:$0xff] %vm1239, %v4063
        %4128 = vst.msk [vmem:[#allocation3 + $0xb0] sm:$0xff] %vm1239, %v4064
        %4129 = vst.msk [vmem:[#allocation3 + $0xb8] sm:$0x3] %vm1243, %v4065
        %4130 = vst.msk [vmem:[#allocation3 + $0xc0] sm:$0xff] %vm1239, %v4066
        %4131 = vst.msk [vmem:[#allocation3 + $0xc8] sm:$0xff] %vm1239, %v4067
        %4132 = vst.msk [vmem:[#allocation3 + $0xd0] sm:$0xff] %vm1239, %v4068
        %4133 = vst.msk [vmem:[#allocation3 + $0xd8] sm:$0x3] %vm1243, %v4069
        %4134 = vst.msk [vmem:[#allocation3 + $0xe0] sm:$0xff] %vm1239, %v4070
        %4135 = vst.msk [vmem:[#allocation3 + $0xe8] sm:$0xff] %vm1239, %v4071
        %4136 = vst.msk [vmem:[#allocation3 + $0xf0] sm:$0xff] %vm1239, %v4072
        %4137 = vst.msk [vmem:[#allocation3 + $0xf8] sm:$0x3] %vm1243, %v4073
        %4138 = vst.msk [vmem:[#allocation3 + $0x100] sm:$0xff] %vm1239, %v4074
        %4139 = vst.msk [vmem:[#allocation3 + $0x108] sm:$0xff] %vm1239, %v4075
        %4140 = vst.msk [vmem:[#allocation3 + $0x110] sm:$0xff] %vm1239, %v4076
        %4141 = vst.msk [vmem:[#allocation3 + $0x118] sm:$0x3] %vm1243, %v4077
        %4142 = vst.msk [vmem:[#allocation3 + $0x120] sm:$0xff] %vm1239, %v4078
        %4143 = vst.msk [vmem:[#allocation3 + $0x128] sm:$0xff] %vm1239, %v4079
        %4144 = vst.msk [vmem:[#allocation3 + $0x130] sm:$0xff] %vm1239, %v4080
        %4145 = vst.msk [vmem:[#allocation3 + $0x138] sm:$0x3] %vm1243, %v4081
        %4146 = vst.msk [vmem:[#allocation3 + $0x140] sm:$0xff] %vm1239, %v4082
        %4147 = vst.msk [vmem:[#allocation3 + $0x148] sm:$0xff] %vm1239, %v4083
        %4148 = vst.msk [vmem:[#allocation3 + $0x150] sm:$0xff] %vm1239, %v4084
        %4149 = vst.msk [vmem:[#allocation3 + $0x158] sm:$0x3] %vm1243, %v4085
        %4150 = vst.msk [vmem:[#allocation3 + $0x160] sm:$0xff] %vm1239, %v4086
        %4151 = vst.msk [vmem:[#allocation3 + $0x168] sm:$0xff] %vm1239, %v4087
        %4152 = vst.msk [vmem:[#allocation3 + $0x170] sm:$0xff] %vm1239, %v4088
        %4153 = vst.msk [vmem:[#allocation3 + $0x178] sm:$0x3] %vm1243, %v4089
        %4154 = vst.msk [vmem:[#allocation3 + $0x180] sm:$0xff] %vm1239, %v4090
        %4155 = vst.msk [vmem:[#allocation3 + $0x188] sm:$0xff] %vm1239, %v4091
        %4156 = vst.msk [vmem:[#allocation3 + $0x190] sm:$0xff] %vm1239, %v4092
        %4157 = vst.msk [vmem:[#allocation3 + $0x198] sm:$0x3] %vm1243, %v4093
        %4158 = vst.msk [vmem:[#allocation3 + $0x1a0] sm:$0xff] %vm1239, %v4094
        %4159 = vst.msk [vmem:[#allocation3 + $0x1a8] sm:$0xff] %vm1239, %v4095
        %4160 = vst.msk [vmem:[#allocation3 + $0x1b0] sm:$0xff] %vm1239, %v4096
        %4161 = vst.msk [vmem:[#allocation3 + $0x1b8] sm:$0x3] %vm1243, %v4097
        %4162 = vst.msk [vmem:[#allocation3 + $0x1c0] sm:$0xff] %vm1239, %v4098
        %4163 = vst.msk [vmem:[#allocation3 + $0x1c8] sm:$0xff] %vm1239, %v4099
        %4164 = vst.msk [vmem:[#allocation3 + $0x1d0] sm:$0xff] %vm1239, %v4100
        %4165 = vst.msk [vmem:[#allocation3 + $0x1d8] sm:$0x3] %vm1243, %v4101
        %4166 = vst.msk [vmem:[#allocation3 + $0x1e0] sm:$0xff] %vm1239, %v4102
        %4167 = vst.msk [vmem:[#allocation3 + $0x1e8] sm:$0xff] %vm1239, %v4103
        %4168 = vst.msk [vmem:[#allocation3 + $0x1f0] sm:$0xff] %vm1239, %v4104
        %4169 = vst.msk [vmem:[#allocation3 + $0x1f8] sm:$0x3] %vm1243, %v4105
        %v4170 = vld [vmem:[#allocation3 + $0x6] sm:$0xff]
        %v4171 = vld [vmem:[#allocation3 + $0xe] sm:$0xff]
        %v4172 = vld [vmem:[#allocation3 + $0x26] sm:$0xff]
        %v4173 = vld [vmem:[#allocation3 + $0x2e] sm:$0xff]
        %v4174 = vld [vmem:[#allocation3 + $0x46] sm:$0xff]
        %v4175 = vld [vmem:[#allocation3 + $0x4e] sm:$0xff]
        %v4176 = vld [vmem:[#allocation3 + $0x66] sm:$0xff]
        %v4177 = vld [vmem:[#allocation3 + $0x6e] sm:$0xff]
        %v4178 = vld [vmem:[#allocation3 + $0x86] sm:$0xff]
        %v4179 = vld [vmem:[#allocation3 + $0x8e] sm:$0xff]
        %v4180 = vld [vmem:[#allocation3 + $0xa6] sm:$0xff]
        %v4181 = vld [vmem:[#allocation3 + $0xae] sm:$0xff]
        %v4182 = vld [vmem:[#allocation3 + $0xc6] sm:$0xff]
        %v4183 = vld [vmem:[#allocation3 + $0xce] sm:$0xff]
        %v4184 = vld [vmem:[#allocation3 + $0xe6] sm:$0xff]
        %v4185 = vld [vmem:[#allocation3 + $0xee] sm:$0xff]
        %v4186 = vld [vmem:[#allocation3 + $0x106] sm:$0xff]
        %v4187 = vld [vmem:[#allocation3 + $0x10e] sm:$0xff]
        %v4188 = vld [vmem:[#allocation3 + $0x126] sm:$0xff]
        %v4189 = vld [vmem:[#allocation3 + $0x12e] sm:$0xff]
        %v4190 = vld [vmem:[#allocation3 + $0x146] sm:$0xff]
        %v4191 = vld [vmem:[#allocation3 + $0x14e] sm:$0xff]
        %v4192 = vld [vmem:[#allocation3 + $0x166] sm:$0xff]
        %v4193 = vld [vmem:[#allocation3 + $0x16e] sm:$0xff]
        %v4194 = vld [vmem:[#allocation3 + $0x186] sm:$0xff]
        %v4195 = vld [vmem:[#allocation3 + $0x18e] sm:$0xff]
        %v4196 = vld [vmem:[#allocation3 + $0x1a6] sm:$0xff]
        %v4197 = vld [vmem:[#allocation3 + $0x1ae] sm:$0xff]
        %v4198 = vld [vmem:[#allocation3 + $0x1c6] sm:$0xff]
        %v4199 = vld [vmem:[#allocation3 + $0x1ce] sm:$0xff]
        %v4200 = vld [vmem:[#allocation3 + $0x1e6] sm:$0xff]
        %v4201 = vld [vmem:[#allocation3 + $0x1ee] sm:$0xff]
        %v4202 = vld [vmem:[#allocation3 + $0x7] sm:$0xff]
        %v4203 = vld [vmem:[#allocation3 + $0xf] sm:$0xff]
        %v4204 = vld [vmem:[#allocation3 + $0x27] sm:$0xff]
        %v4205 = vld [vmem:[#allocation3 + $0x2f] sm:$0xff]
        %v4206 = vld [vmem:[#allocation3 + $0x47] sm:$0xff]
        %v4207 = vld [vmem:[#allocation3 + $0x4f] sm:$0xff]
        %v4208 = vld [vmem:[#allocation3 + $0x67] sm:$0xff]
        %v4209 = vld [vmem:[#allocation3 + $0x6f] sm:$0xff]
        %v4210 = vld [vmem:[#allocation3 + $0x87] sm:$0xff]
        %v4211 = vld [vmem:[#allocation3 + $0x8f] sm:$0xff]
        %v4212 = vld [vmem:[#allocation3 + $0xa7] sm:$0xff]
        %v4213 = vld [vmem:[#allocation3 + $0xaf] sm:$0xff]
        %v4214 = vld [vmem:[#allocation3 + $0xc7] sm:$0xff]
        %v4215 = vld [vmem:[#allocation3 + $0xcf] sm:$0xff]
        %v4216 = vld [vmem:[#allocation3 + $0xe7] sm:$0xff]
        %v4217 = vld [vmem:[#allocation3 + $0xef] sm:$0xff]
        %v4218 = vld [vmem:[#allocation3 + $0x107] sm:$0xff]
        %v4219 = vld [vmem:[#allocation3 + $0x10f] sm:$0xff]
        %v4220 = vld [vmem:[#allocation3 + $0x127] sm:$0xff]
        %v4221 = vld [vmem:[#allocation3 + $0x12f] sm:$0xff]
        %v4222 = vld [vmem:[#allocation3 + $0x147] sm:$0xff]
        %v4223 = vld [vmem:[#allocation3 + $0x14f] sm:$0xff]
        %v4224 = vld [vmem:[#allocation3 + $0x167] sm:$0xff]
        %v4225 = vld [vmem:[#allocation3 + $0x16f] sm:$0xff]
        %v4226 = vld [vmem:[#allocation3 + $0x187] sm:$0xff]
        %v4227 = vld [vmem:[#allocation3 + $0x18f] sm:$0xff]
        %v4228 = vld [vmem:[#allocation3 + $0x1a7] sm:$0xff]
        %v4229 = vld [vmem:[#allocation3 + $0x1af] sm:$0xff]
        %v4230 = vld [vmem:[#allocation3 + $0x1c7] sm:$0xff]
        %v4231 = vld [vmem:[#allocation3 + $0x1cf] sm:$0xff]
        %v4232 = vld [vmem:[#allocation3 + $0x1e7] sm:$0xff]
        %v4233 = vld [vmem:[#allocation3 + $0x1ef] sm:$0xff]
        %v4234 = vmax.f32 %v4170, %v4202
        %v4235 = vmax.f32 %v4171, %v4203
        %v4236 = vmax.f32 %v4172, %v4204
        %v4237 = vmax.f32 %v4173, %v4205
        %v4238 = vmax.f32 %v4174, %v4206
        %v4239 = vmax.f32 %v4175, %v4207
        %v4240 = vmax.f32 %v4176, %v4208
        %v4241 = vmax.f32 %v4177, %v4209
        %v4242 = vmax.f32 %v4178, %v4210
        %v4243 = vmax.f32 %v4179, %v4211
        %v4244 = vmax.f32 %v4180, %v4212
        %v4245 = vmax.f32 %v4181, %v4213
        %v4246 = vmax.f32 %v4182, %v4214
        %v4247 = vmax.f32 %v4183, %v4215
        %v4248 = vmax.f32 %v4184, %v4216
        %v4249 = vmax.f32 %v4185, %v4217
        %v4250 = vmax.f32 %v4186, %v4218
        %v4251 = vmax.f32 %v4187, %v4219
        %v4252 = vmax.f32 %v4188, %v4220
        %v4253 = vmax.f32 %v4189, %v4221
        %v4254 = vmax.f32 %v4190, %v4222
        %v4255 = vmax.f32 %v4191, %v4223
        %v4256 = vmax.f32 %v4192, %v4224
        %v4257 = vmax.f32 %v4193, %v4225
        %v4258 = vmax.f32 %v4194, %v4226
        %v4259 = vmax.f32 %v4195, %v4227
        %v4260 = vmax.f32 %v4196, %v4228
        %v4261 = vmax.f32 %v4197, %v4229
        %v4262 = vmax.f32 %v4198, %v4230
        %v4263 = vmax.f32 %v4199, %v4231
        %v4264 = vmax.f32 %v4200, %v4232
        %v4265 = vmax.f32 %v4201, %v4233
        %v4266 = vld [vmem:[#allocation3 + $0x8] sm:$0xff]
        %v4267 = vld [vmem:[#allocation3 + $0x10] sm:$0xff]
        %v4268 = vld [vmem:[#allocation3 + $0x28] sm:$0xff]
        %v4269 = vld [vmem:[#allocation3 + $0x30] sm:$0xff]
        %v4270 = vld [vmem:[#allocation3 + $0x48] sm:$0xff]
        %v4271 = vld [vmem:[#allocation3 + $0x50] sm:$0xff]
        %v4272 = vld [vmem:[#allocation3 + $0x68] sm:$0xff]
        %v4273 = vld [vmem:[#allocation3 + $0x70] sm:$0xff]
        %v4274 = vld [vmem:[#allocation3 + $0x88] sm:$0xff]
        %v4275 = vld [vmem:[#allocation3 + $0x90] sm:$0xff]
        %v4276 = vld [vmem:[#allocation3 + $0xa8] sm:$0xff]
        %v4277 = vld [vmem:[#allocation3 + $0xb0] sm:$0xff]
        %v4278 = vld [vmem:[#allocation3 + $0xc8] sm:$0xff]
        %v4279 = vld [vmem:[#allocation3 + $0xd0] sm:$0xff]
        %v4280 = vld [vmem:[#allocation3 + $0xe8] sm:$0xff]
        %v4281 = vld [vmem:[#allocation3 + $0xf0] sm:$0xff]
        %v4282 = vld [vmem:[#allocation3 + $0x108] sm:$0xff]
        %v4283 = vld [vmem:[#allocation3 + $0x110] sm:$0xff]
        %v4284 = vld [vmem:[#allocation3 + $0x128] sm:$0xff]
        %v4285 = vld [vmem:[#allocation3 + $0x130] sm:$0xff]
        %v4286 = vld [vmem:[#allocation3 + $0x148] sm:$0xff]
        %v4287 = vld [vmem:[#allocation3 + $0x150] sm:$0xff]
        %v4288 = vld [vmem:[#allocation3 + $0x168] sm:$0xff]
        %v4289 = vld [vmem:[#allocation3 + $0x170] sm:$0xff]
        %v4290 = vld [vmem:[#allocation3 + $0x188] sm:$0xff]
        %v4291 = vld [vmem:[#allocation3 + $0x190] sm:$0xff]
        %v4292 = vld [vmem:[#allocation3 + $0x1a8] sm:$0xff]
        %v4293 = vld [vmem:[#allocation3 + $0x1b0] sm:$0xff]
        %v4294 = vld [vmem:[#allocation3 + $0x1c8] sm:$0xff]
        %v4295 = vld [vmem:[#allocation3 + $0x1d0] sm:$0xff]
        %v4296 = vld [vmem:[#allocation3 + $0x1e8] sm:$0xff]
        %v4297 = vld [vmem:[#allocation3 + $0x1f0] sm:$0xff]
        %v4298 = vmax.f32 %v4234, %v4266
        %v4299 = vmax.f32 %v4235, %v4267
        %v4300 = vmax.f32 %v4236, %v4268
        %v4301 = vmax.f32 %v4237, %v4269
        %v4302 = vmax.f32 %v4238, %v4270
        %v4303 = vmax.f32 %v4239, %v4271
        %v4304 = vmax.f32 %v4240, %v4272
        %v4305 = vmax.f32 %v4241, %v4273
        %v4306 = vmax.f32 %v4242, %v4274
        %v4307 = vmax.f32 %v4243, %v4275
        %v4308 = vmax.f32 %v4244, %v4276
        %v4309 = vmax.f32 %v4245, %v4277
        %v4310 = vmax.f32 %v4246, %v4278
        %v4311 = vmax.f32 %v4247, %v4279
        %v4312 = vmax.f32 %v4248, %v4280
        %v4313 = vmax.f32 %v4249, %v4281
        %v4314 = vmax.f32 %v4250, %v4282
        %v4315 = vmax.f32 %v4251, %v4283
        %v4316 = vmax.f32 %v4252, %v4284
        %v4317 = vmax.f32 %v4253, %v4285
        %v4318 = vmax.f32 %v4254, %v4286
        %v4319 = vmax.f32 %v4255, %v4287
        %v4320 = vmax.f32 %v4256, %v4288
        %v4321 = vmax.f32 %v4257, %v4289
        %v4322 = vmax.f32 %v4258, %v4290
        %v4323 = vmax.f32 %v4259, %v4291
        %v4324 = vmax.f32 %v4260, %v4292
        %v4325 = vmax.f32 %v4261, %v4293
        %v4326 = vmax.f32 %v4262, %v4294
        %v4327 = vmax.f32 %v4263, %v4295
        %v4328 = vmax.f32 %v4264, %v4296
        %v4329 = vmax.f32 %v4265, %v4297
        %v4330 = vld [vmem:[#allocation3 + $0x9] sm:$0xff]
        %v4331 = vld [vmem:[#allocation3 + $0x11] sm:$0xff]
        %v4332 = vld [vmem:[#allocation3 + $0x29] sm:$0xff]
        %v4333 = vld [vmem:[#allocation3 + $0x31] sm:$0xff]
        %v4334 = vld [vmem:[#allocation3 + $0x49] sm:$0xff]
        %v4335 = vld [vmem:[#allocation3 + $0x51] sm:$0xff]
        %v4336 = vld [vmem:[#allocation3 + $0x69] sm:$0xff]
        %v4337 = vld [vmem:[#allocation3 + $0x71] sm:$0xff]
        %v4338 = vld [vmem:[#allocation3 + $0x89] sm:$0xff]
        %v4339 = vld [vmem:[#allocation3 + $0x91] sm:$0xff]
        %v4340 = vld [vmem:[#allocation3 + $0xa9] sm:$0xff]
        %v4341 = vld [vmem:[#allocation3 + $0xb1] sm:$0xff]
        %v4342 = vld [vmem:[#allocation3 + $0xc9] sm:$0xff]
        %v4343 = vld [vmem:[#allocation3 + $0xd1] sm:$0xff]
        %v4344 = vld [vmem:[#allocation3 + $0xe9] sm:$0xff]
        %v4345 = vld [vmem:[#allocation3 + $0xf1] sm:$0xff]
        %v4346 = vld [vmem:[#allocation3 + $0x109] sm:$0xff]
        %v4347 = vld [vmem:[#allocation3 + $0x111] sm:$0xff]
        %v4348 = vld [vmem:[#allocation3 + $0x129] sm:$0xff]
        %v4349 = vld [vmem:[#allocation3 + $0x131] sm:$0xff]
        %v4350 = vld [vmem:[#allocation3 + $0x149] sm:$0xff]
        %v4351 = vld [vmem:[#allocation3 + $0x151] sm:$0xff]
        %v4352 = vld [vmem:[#allocation3 + $0x169] sm:$0xff]
        %v4353 = vld [vmem:[#allocation3 + $0x171] sm:$0xff]
        %v4354 = vld [vmem:[#allocation3 + $0x189] sm:$0xff]
        %v4355 = vld [vmem:[#allocation3 + $0x191] sm:$0xff]
        %v4356 = vld [vmem:[#allocation3 + $0x1a9] sm:$0xff]
        %v4357 = vld [vmem:[#allocation3 + $0x1b1] sm:$0xff]
        %v4358 = vld [vmem:[#allocation3 + $0x1c9] sm:$0xff]
        %v4359 = vld [vmem:[#allocation3 + $0x1d1] sm:$0xff]
        %v4360 = vld [vmem:[#allocation3 + $0x1e9] sm:$0xff]
        %v4361 = vld [vmem:[#allocation3 + $0x1f1] sm:$0xff]
        %v4362 = vmax.f32 %v4298, %v4330
        %v4363 = vmax.f32 %v4299, %v4331
        %v4364 = vmax.f32 %v4300, %v4332
        %v4365 = vmax.f32 %v4301, %v4333
        %v4366 = vmax.f32 %v4302, %v4334
        %v4367 = vmax.f32 %v4303, %v4335
        %v4368 = vmax.f32 %v4304, %v4336
        %v4369 = vmax.f32 %v4305, %v4337
        %v4370 = vmax.f32 %v4306, %v4338
        %v4371 = vmax.f32 %v4307, %v4339
        %v4372 = vmax.f32 %v4308, %v4340
        %v4373 = vmax.f32 %v4309, %v4341
        %v4374 = vmax.f32 %v4310, %v4342
        %v4375 = vmax.f32 %v4311, %v4343
        %v4376 = vmax.f32 %v4312, %v4344
        %v4377 = vmax.f32 %v4313, %v4345
        %v4378 = vmax.f32 %v4314, %v4346
        %v4379 = vmax.f32 %v4315, %v4347
        %v4380 = vmax.f32 %v4316, %v4348
        %v4381 = vmax.f32 %v4317, %v4349
        %v4382 = vmax.f32 %v4318, %v4350
        %v4383 = vmax.f32 %v4319, %v4351
        %v4384 = vmax.f32 %v4320, %v4352
        %v4385 = vmax.f32 %v4321, %v4353
        %v4386 = vmax.f32 %v4322, %v4354
        %v4387 = vmax.f32 %v4323, %v4355
        %v4388 = vmax.f32 %v4324, %v4356
        %v4389 = vmax.f32 %v4325, %v4357
        %v4390 = vmax.f32 %v4326, %v4358
        %v4391 = vmax.f32 %v4327, %v4359
        %v4392 = vmax.f32 %v4328, %v4360
        %v4393 = vmax.f32 %v4329, %v4361
        %v4394 = vld [vmem:[#allocation3 + $0xa] sm:$0xff]
        %v4395 = vld [vmem:[#allocation3 + $0x12] sm:$0xff]
        %v4396 = vld [vmem:[#allocation3 + $0x2a] sm:$0xff]
        %v4397 = vld [vmem:[#allocation3 + $0x32] sm:$0xff]
        %v4398 = vld [vmem:[#allocation3 + $0x4a] sm:$0xff]
        %v4399 = vld [vmem:[#allocation3 + $0x52] sm:$0xff]
        %v4400 = vld [vmem:[#allocation3 + $0x6a] sm:$0xff]
        %v4401 = vld [vmem:[#allocation3 + $0x72] sm:$0xff]
        %v4402 = vld [vmem:[#allocation3 + $0x8a] sm:$0xff]
        %v4403 = vld [vmem:[#allocation3 + $0x92] sm:$0xff]
        %v4404 = vld [vmem:[#allocation3 + $0xaa] sm:$0xff]
        %v4405 = vld [vmem:[#allocation3 + $0xb2] sm:$0xff]
        %v4406 = vld [vmem:[#allocation3 + $0xca] sm:$0xff]
        %v4407 = vld [vmem:[#allocation3 + $0xd2] sm:$0xff]
        %v4408 = vld [vmem:[#allocation3 + $0xea] sm:$0xff]
        %v4409 = vld [vmem:[#allocation3 + $0xf2] sm:$0xff]
        %v4410 = vld [vmem:[#allocation3 + $0x10a] sm:$0xff]
        %v4411 = vld [vmem:[#allocation3 + $0x112] sm:$0xff]
        %v4412 = vld [vmem:[#allocation3 + $0x12a] sm:$0xff]
        %v4413 = vld [vmem:[#allocation3 + $0x132] sm:$0xff]
        %v4414 = vld [vmem:[#allocation3 + $0x14a] sm:$0xff]
        %v4415 = vld [vmem:[#allocation3 + $0x152] sm:$0xff]
        %v4416 = vld [vmem:[#allocation3 + $0x16a] sm:$0xff]
        %v4417 = vld [vmem:[#allocation3 + $0x172] sm:$0xff]
        %v4418 = vld [vmem:[#allocation3 + $0x18a] sm:$0xff]
        %v4419 = vld [vmem:[#allocation3 + $0x192] sm:$0xff]
        %v4420 = vld [vmem:[#allocation3 + $0x1aa] sm:$0xff]
        %v4421 = vld [vmem:[#allocation3 + $0x1b2] sm:$0xff]
        %v4422 = vld [vmem:[#allocation3 + $0x1ca] sm:$0xff]
        %v4423 = vld [vmem:[#allocation3 + $0x1d2] sm:$0xff]
        %v4424 = vld [vmem:[#allocation3 + $0x1ea] sm:$0xff]
        %v4425 = vld [vmem:[#allocation3 + $0x1f2] sm:$0xff]
        %v4426 = vmax.f32 %v4362, %v4394
        %v4427 = vmax.f32 %v4363, %v4395
        %v4428 = vmax.f32 %v4364, %v4396
        %v4429 = vmax.f32 %v4365, %v4397
        %v4430 = vmax.f32 %v4366, %v4398
        %v4431 = vmax.f32 %v4367, %v4399
        %v4432 = vmax.f32 %v4368, %v4400
        %v4433 = vmax.f32 %v4369, %v4401
        %v4434 = vmax.f32 %v4370, %v4402
        %v4435 = vmax.f32 %v4371, %v4403
        %v4436 = vmax.f32 %v4372, %v4404
        %v4437 = vmax.f32 %v4373, %v4405
        %v4438 = vmax.f32 %v4374, %v4406
        %v4439 = vmax.f32 %v4375, %v4407
        %v4440 = vmax.f32 %v4376, %v4408
        %v4441 = vmax.f32 %v4377, %v4409
        %v4442 = vmax.f32 %v4378, %v4410
        %v4443 = vmax.f32 %v4379, %v4411
        %v4444 = vmax.f32 %v4380, %v4412
        %v4445 = vmax.f32 %v4381, %v4413
        %v4446 = vmax.f32 %v4382, %v4414
        %v4447 = vmax.f32 %v4383, %v4415
        %v4448 = vmax.f32 %v4384, %v4416
        %v4449 = vmax.f32 %v4385, %v4417
        %v4450 = vmax.f32 %v4386, %v4418
        %v4451 = vmax.f32 %v4387, %v4419
        %v4452 = vmax.f32 %v4388, %v4420
        %v4453 = vmax.f32 %v4389, %v4421
        %v4454 = vmax.f32 %v4390, %v4422
        %v4455 = vmax.f32 %v4391, %v4423
        %v4456 = vmax.f32 %v4392, %v4424
        %v4457 = vmax.f32 %v4393, %v4425
        %v4458 = vld [vmem:[%s414] sm:$0xf]
        %v4459 = vpack.c.bf16 %v4427, %v4426
        %v4460 = vpack.c.bf16 %v4429, %v4428
        %v4461 = vpack.c.bf16 %v4431, %v4430
        %v4462 = vpack.c.bf16 %v4433, %v4432
        %v4463 = vpack.c.bf16 %v4435, %v4434
        %v4464 = vpack.c.bf16 %v4437, %v4436
        %v4465 = vpack.c.bf16 %v4439, %v4438
        %v4466 = vpack.c.bf16 %v4441, %v4440
        %v4467 = vpack.c.bf16 %v4443, %v4442
        %v4468 = vpack.c.bf16 %v4445, %v4444
        %v4469 = vpack.c.bf16 %v4447, %v4446
        %v4470 = vpack.c.bf16 %v4449, %v4448
        %v4471 = vpack.c.bf16 %v4451, %v4450
        %v4472 = vpack.c.bf16 %v4453, %v4452
        %v4473 = vpack.c.bf16 %v4455, %v4454
        %v4474 = vpack.c.bf16 %v4457, %v4456
        %v4476 = vsel %vm1239, %v4458, 0
        %v4479 = vsel %vm1239, %v4459, 0
        %v4482 = vsel %vm1239, %v4460, 0
        %v4485 = vsel %vm1239, %v4461, 0
        %v4488 = vsel %vm1239, %v4462, 0
        %v4491 = vsel %vm1239, %v4463, 0
        %v4494 = vsel %vm1239, %v4464, 0
        %v4497 = vsel %vm1239, %v4465, 0
        %v4500 = vsel %vm1239, %v4466, 0
        %v4503 = vsel %vm1239, %v4467, 0
        %v4506 = vsel %vm1239, %v4468, 0
        %v4509 = vsel %vm1239, %v4469, 0
        %v4512 = vsel %vm1239, %v4470, 0
        %v4515 = vsel %vm1239, %v4471, 0
        %v4518 = vsel %vm1239, %v4472, 0
        %v4521 = vsel %vm1239, %v4473, 0
        %v4524 = vsel %vm1239, %v4474, 0
        %4526 = vmatpush.bf16.xpose.msra.mxu0 %v4500
        %4527 = vmatpush.bf16.xpose.msra.mxu0 %v4497
        %4528 = vmatpush.bf16.xpose.msra.mxu0 %v4494
        %4529 = vmatpush.bf16.xpose.msra.mxu0 %v4491
        %4530 = vmatpush.bf16.xpose.msra.mxu0 %v4488
        %4531 = vmatpush.bf16.xpose.msra.mxu0 %v4485
        %4532 = vmatpush.bf16.xpose.msra.mxu0 %v4482
        %4533 = vmatpush.bf16.xpose.msra.mxu0 %v4479
        %4534 = vmatmul.bf16.gmra.mxu0 %v4476
        %v4535 = vpop.f32.mrf.mxu0
        %v4536 = vadd.f32 0.0, %v4535
        %v4537 = vpop.f32.mrf.mxu0
        %4538 = vdwg.mxu0
        %4539 = vmatpush.bf16.xpose.msra.mxu0 %v4524
        %4540 = vmatpush.bf16.xpose.msra.mxu0 %v4521
        %4541 = vmatpush.bf16.xpose.msra.mxu0 %v4518
        %4542 = vmatpush.bf16.xpose.msra.mxu0 %v4515
        %4543 = vmatpush.bf16.xpose.msra.mxu0 %v4512
        %4544 = vmatpush.bf16.xpose.msra.mxu0 %v4509
        %4545 = vmatpush.bf16.xpose.msra.mxu0 %v4506
        %4546 = vmatpush.bf16.xpose.msra.mxu0 %v4503
        %4547 = vmatmul.bf16.gmra.mxu0 %v4476
        %v4548 = vpop.f32.mrf.mxu0
        %v4549 = vadd.f32 0.0, %v4548
        %v4550 = vpop.f32.mrf.mxu0
        %4551 = vdwg.mxu0
        %v4552 = vadd.f32 %v3496, %v4536
        %v4553 = vadd.f32 %v3497, %v4549
        %v4554 = vld [vmem:[%s422] sm:$0xff]
        %4556 = vset.pattern.permute.xlu0 0
        %4557 = vperm.xlu0 %4556, %v4554
        %v4558 = vpop.permute.xlu0 %4557
        %v4560 = vadd.f32 %v4552, %v4558
        %v4561 = vadd.f32 %v4553, %v4558
        %v4562 = vxor.u32 %v4560, 2147483648
        %v4563 = vxor.u32 %v4561, 2147483648
        %v4564 = vmul.f32 %v4562, 1.442695
        %v4565 = vpow.pop %v4564
        %v4566 = vmul.f32 %v4563, 1.442695
        %v4567 = vpow.pop %v4566
        %v4568 = vadd.f32 %v4565, 1.0
        %v4569 = vadd.f32 %v4567, 1.0
        %v4570 = vrcp.pop %v4568
        %v4571 = vmul.f32 %v4568, %v4570
        %v4572 = vsub.f32 1.0, %v4571
        %v4573 = vmul.f32 %v4570, %v4572
        %v4574 = vadd.f32 %v4570, %v4573
        %vm4575 = vweird.f32 %v4568
        %vm4576 = vweird.f32 %v4570
        %vm4577 = vmor %vm4575, %vm4576
        %v4578 = vsel %vm4577, %v4570, %v4574
        %v4579 = vand.u32 2147483647, %v4568
        %vm4580 = vcmp.eq.f32.partialorder %v4579, 8.507059e+37
        %v4581 = vand.u32 %v4568, 2147483648
        %v4582 = vor.u32 1.1754944e-38, %v4581
        %v4583 = vsel %vm4580, %v4582, %v4578
        %v4584 = vmul.f32 1.0, %v4583
        %v4585 = vrcp.pop %v4569
        %v4586 = vmul.f32 %v4569, %v4585
        %v4587 = vsub.f32 1.0, %v4586
        %v4588 = vmul.f32 %v4585, %v4587
        %v4589 = vadd.f32 %v4585, %v4588
        %vm4590 = vweird.f32 %v4569
        %vm4591 = vweird.f32 %v4585
        %vm4592 = vmor %vm4590, %vm4591
        %v4593 = vsel %vm4592, %v4585, %v4589
        %v4594 = vand.u32 2147483647, %v4569
        %vm4595 = vcmp.eq.f32.partialorder %v4594, 8.507059e+37
        %v4596 = vand.u32 %v4569, 2147483648
        %v4597 = vor.u32 1.1754944e-38, %v4596
        %v4598 = vsel %vm4595, %v4597, %v4593
        %v4599 = vmul.f32 1.0, %v4598
        %v4600 = vmul.f32 %v4560, %v4584
        %v4601 = vmul.f32 %v4561, %v4599
        %4602 = vst [vmem:[%s402] sm:$0xff] %v4600
        %4603 = vst [vmem:[%s402 + $0x8] sm:$0xff] %v4601
        %s4604 = sand.u32 %s245, 1
        %s4605 = scalar_lea.sflag [#allocation6], %s4604
        %s4606 = sand.u32 %s245, 1
        %s4607 = smul.addr %s4606, 16
        %s4608 = scalar_lea.vmem [#allocation7], %s4607
        // Predicated region
        $region57: #{tpu_custom_call.1} parent=51 // pred_check
          %p4609 = pneg %p255
        $region58: #{tpu_custom_call.1} parent=51 // pred_check_branch
          %4611 = sbr.rel (%p4609) target = $region60
        $region59: #{tpu_custom_call.1} parent=51 // pred_region
          %4613 = vsyncadd %s4605, 0
          %s4614 = smul.addr %s30, 2
          %s4615 = smul.addr %s29, 2
          %s4616 = sadd.s32 %s4614, %s4615
          %s4617 = smul.addr %s4616, 8
          %s4618 = scalar_lea.hbm %s8, %s4617
          %s4620 = sshll.u32 %s4608, 4
          %s4621 = int_to_ptr.vmem [resolvable:$true] %s4620
          %s4622 = sshll.u32 %s4618, 4
          %s4623 = int_to_ptr.hbm [resolvable:$true] %s4622
          %4625 = dma.vmem_to_hbm [thread:$0]  %s4621, 256, %s4623, %s4605
        $region60: #{tpu_custom_call.1} parent=51 // pred_fallthru
          _
      $region52: #{tpu_custom_call.1} parent=5 // pred_fallthru
        _
      %p4626 = scmp.le.s32.totalorder 2, %s20
      // Predicated region
      $region61: #{tpu_custom_call.1} parent=5 // pred_check
        %p4627 = pneg %p4626
      $region62: #{tpu_custom_call.1} parent=5 // pred_check_branch
        %4629 = sbr.rel (%p4627) target = $region64
      $region63: #{tpu_custom_call.1} parent=5 // pred_region
        %s4630 = ssub.s32 %s20, 2
        // Predicated region
        $region65: #{tpu_custom_call.1} parent=63 // pred_check
          %p4631 = pneg %p261
        $region66: #{tpu_custom_call.1} parent=63 // pred_check_branch
          %4633 = sbr.rel (%p4631) target = $region68
        $region67: #{tpu_custom_call.1} parent=63 // pred_region
          %s4634 = sand.u32 %s246, 1
          %s4635 = scalar_lea.sflag [#allocation6], %s4634
          %s4636 = sand.u32 %s246, 1
          %s4637 = smul.addr %s4636, 16
          %s4638 = scalar_lea.vmem [#allocation7], %s4637
          %4640 = dma.done %s4635, 256
        $region68: #{tpu_custom_call.1} parent=63 // pred_fallthru
          _
      $region64: #{tpu_custom_call.1} parent=5 // pred_fallthru
        _
    $region6: #{tpu_custom_call.1} parent=1 // loop_footer
      %s24 = sadd.s32 1, %s20
    $region7: #{tpu_custom_call.1} parent=1 // loop_footer_branch
      %19 = sbr.rel target = $region3
    $region8: #{tpu_custom_call.1} parent=1 // loop_exit
      _
    %4641 = vsyncpa [#allocation5], 1
    %s4642 = scalar_lea.sflag [#allocation5], 1
    %4643 = vsyncpa %s4642, 1
    %4644 = vsyncpa [#allocation6], 1
    %s4645 = scalar_lea.sflag [#allocation6], 1
    %4646 = vsyncpa %s4645, 1

</llo_original>
